<compile_context>
chip_gen: v5e
topology: v5e:2x2
jax: 0.10.0
libtpu: 0.0.40
codegen_flags: <defaults>
</compile_context>

<pallas_src>
import functools

import jax
import jax.numpy as jnp
from jax import lax
from jax.experimental import pallas as pl
from jax.experimental.pallas import tpu as pltpu

EXPANSION = 4
BN_EPS = 1e-5
LANE = 128


def _round_up(x, m):
    return (x + m - 1) // m * m


def _fold_bn(gamma, beta, mean, var):
    scale = gamma / jnp.sqrt(var + BN_EPS)
    bias = beta - mean * scale
    return scale.astype(jnp.float32), bias.astype(jnp.float32)


# ------------------------------- kernel --------------------------------------
def _bottleneck_kernel(x_ref, w1_ref, b1_ref, w2_ref, b2_ref, w3_ref, b3_ref,
                       *rest, stride, has_proj):
    if has_proj:
        ws_ref, bs_ref, o_ref, pad_ref = rest
    else:
        o_ref, pad_ref = rest

    _, H, W, Cin_p = x_ref.shape
    P_p = w1_ref.shape[1]
    Cout_p = w3_ref.shape[1]
    Ho = (H - 1) // stride + 1
    Wo = (W - 1) // stride + 1

    x = x_ref[0]                           # (H, W, Cin_p)
    x2 = x.reshape(H * W, Cin_p)           # lane-dense (Cin_p % 128 == 0): cheap

    # ---- conv1 (1x1, BN folded into w1) + relu -------------------------------
    h1 = jnp.dot(x2, w1_ref[...], preferred_element_type=jnp.float32)
    h1 = jnp.maximum(h1 + b1_ref[...], 0.0)                  # (H*W, P_p)

    # ---- zero-padded scratch for the 3x3 conv (pad=1) ------------------------
    # Border + interior are fully rewritten every step, so correctness does not
    # depend on grid order or on which TensorCore runs which step.
    zrow = jnp.zeros((1, W + 2, P_p), jnp.float32)
    zcol = jnp.zeros((H, 1, P_p), jnp.float32)
    pad_ref[0:1, :, :] = zrow
    pad_ref[H + 1:H + 2, :, :] = zrow
    pad_ref[1:H + 1, 0:1, :] = zcol
    pad_ref[1:H + 1, W + 1:W + 2, :] = zcol
    pad_ref[1:H + 1, 1:W + 1, :] = h1.reshape(H, W, P_p)

    # ---- conv2 (3x3, stride, pad=1, BN folded) + relu ------------------------
    # 9 static-slice taps read straight from the padded scratch; the stride is
    # applied in the tap read so only Ho*Wo output positions are computed.
    acc = jnp.zeros((Ho * Wo, P_p), jnp.float32) + b2_ref[...]
    for kh in range(3):
        for kw in range(3):
            if stride == 1:
                tap = pad_ref[kh:kh + Ho, kw:kw + Wo, :]
            else:
                tap = pad_ref[pl.ds(kh, Ho, stride=stride),
                              pl.ds(kw, Wo, stride=stride), :]
            acc = acc + jnp.dot(tap.reshape(Ho * Wo, P_p),
                                w2_ref[kh * 3 + kw],
                                preferred_element_type=jnp.float32)
    h2 = jnp.maximum(acc, 0.0)                               # (Ho*Wo, P_p)

    # ---- conv3 (1x1, BN folded) ----------------------------------------------
    h3 = jnp.dot(h2, w3_ref[...], preferred_element_type=jnp.float32) + b3_ref[...]

    # ---- shortcut -------------------------------------------------------------
    if has_proj:
        if stride == 1:
            xs2 = x2
        else:
            xs = x_ref[0, pl.ds(0, Ho, stride=stride),
                       pl.ds(0, Wo, stride=stride), :]
            xs2 = xs.reshape(Ho * Wo, Cin_p)
        sc = jnp.dot(xs2, ws_ref[...], preferred_element_type=jnp.float32) + bs_ref[...]
    else:
        # identity: stride == 1 and Cin_p == Cout_p; padded lanes are zero.
        sc = x2

    # ---- residual add + relu; lane-dense (128-wide) store ---------------------
    o_ref[0] = jnp.maximum(h3 + sc, 0.0).reshape(Ho, Wo, Cout_p)


# ------------------------------- parameters ----------------------------------
def make_params(key, in_planes, planes):
    """Deterministic synthetic parameters mirroring Bottleneck.__init__ shapes."""
    cout = EXPANSION * planes
    keys = jax.random.split(key, 16)

    def bn(k, c):
        k1, k2, k3, k4 = jax.random.split(k, 4)
        gamma = 1.0 + 0.1 * jax.random.normal(k1, (c,), jnp.float32)
        beta = 0.1 * jax.random.normal(k2, (c,), jnp.float32)
        mean = 0.1 * jax.random.normal(k3, (c,), jnp.float32)
        var = jnp.abs(jax.random.normal(k4, (c,), jnp.float32)) + 0.5
        return gamma, beta, mean, var

    p = {}
    # conv weights stored channels-last-friendly:
    #   1x1 conv -> (Cin, Cout); 3x3 conv -> (3, 3, Cin, Cout) (HWIO)
    p["w1"] = 0.3 * jax.random.normal(keys[0], (in_planes, planes), jnp.float32)
    p["bn1"] = bn(keys[1], planes)
    p["w2"] = 0.3 * jax.random.normal(keys[2], (3, 3, planes, planes), jnp.float32)
    p["bn2"] = bn(keys[3], planes)
    p["w3"] = 0.3 * jax.random.normal(keys[4], (planes, cout), jnp.float32)
    p["bn3"] = bn(keys[5], cout)
    p["ws"] = 0.3 * jax.random.normal(keys[6], (in_planes, cout), jnp.float32)
    p["bns"] = bn(keys[7], cout)
    return p


# ------------------------------- wrapper --------------------------------------
def bottleneck_pallas(x_nhwc, params, in_planes, planes, stride):
    N, H, W, Cin = x_nhwc.shape
    assert Cin == in_planes
    cout = EXPANSION * planes
    Ho = (H - 1) // stride + 1
    Wo = (W - 1) // stride + 1

    Cin_p = _round_up(Cin, LANE)
    P_p = _round_up(planes, LANE)
    Cout_p = _round_up(cout, LANE)

    # Fold BN scales into the conv weights (once, in XLA, outside the kernel).
    s1, b1 = _fold_bn(*params["bn1"])
    s2, b2 = _fold_bn(*params["bn2"])
    s3, b3 = _fold_bn(*params["bn3"])
    w1f = params["w1"] * s1[None, :]                                  # (Cin, P)
    w2f = (params["w2"] * s2[None, None, None, :]).reshape(9, planes, planes)
    w3f = params["w3"] * s3[None, :]                                  # (P, Cout)

    # Zero-pad channels to 128 multiples -> lane-dense matmuls & stores.
    w1p = jnp.pad(w1f, ((0, Cin_p - Cin), (0, P_p - planes)))
    w2p = jnp.pad(w2f, ((0, 0), (0, P_p - planes), (0, P_p - planes)))
    w3p = jnp.pad(w3f, ((0, P_p - planes), (0, Cout_p - cout)))
    b1p = jnp.pad(b1, (0, P_p - planes)).reshape(1, P_p)
    b2p = jnp.pad(b2, (0, P_p - planes)).reshape(1, P_p)
    b3p = jnp.pad(b3, (0, Cout_p - cout)).reshape(1, Cout_p)

    has_proj = (stride != 1) or (in_planes != cout)
    if has_proj:
        ss, bs = _fold_bn(*params["bns"])
        wsf = params["ws"] * ss[None, :]
        wsp = jnp.pad(wsf, ((0, Cin_p - Cin), (0, Cout_p - cout)))
        bsp = jnp.pad(bs, (0, Cout_p - cout)).reshape(1, Cout_p)

    x_p = jnp.pad(x_nhwc.astype(jnp.float32),
                  ((0, 0), (0, 0), (0, 0), (0, Cin_p - Cin)))

    def full_spec(a):
        nd = a.ndim
        return pl.BlockSpec(a.shape, lambda n, _nd=nd: (0,) * _nd)

    operands = [x_p, w1p, b1p, w2p, b2p, w3p, b3p]
    in_specs = [pl.BlockSpec((1, H, W, Cin_p), lambda n: (n, 0, 0, 0))]
    in_specs += [full_spec(a) for a in operands[1:]]
    if has_proj:
        operands += [wsp, bsp]
        in_specs += [full_spec(wsp), full_spec(bsp)]

    # Advisory cost estimate (real math flops, padded bytes actually moved).
    flops = 2 * N * (H * W * Cin * planes
                     + Ho * Wo * 9 * planes * planes
                     + Ho * Wo * planes * cout)
    if has_proj:
        flops += 2 * N * Ho * Wo * Cin * cout
    bytes_accessed = 4 * (sum(int(a.size) for a in operands)
                          + N * Ho * Wo * Cout_p)

    kernel = functools.partial(_bottleneck_kernel, stride=stride, has_proj=has_proj)

    out_p = pl.pallas_call(
        kernel,
        out_shape=jax.ShapeDtypeStruct((N, Ho, Wo, Cout_p), jnp.float32),
        grid=(N,),
        in_specs=in_specs,
        out_specs=pl.BlockSpec((1, Ho, Wo, Cout_p), lambda n: (n, 0, 0, 0)),
        scratch_shapes=[pltpu.VMEM((H + 2, W + 2, P_p), jnp.float32)],
        compiler_params=pltpu.CompilerParams(
            dimension_semantics=("parallel",),
            vmem_limit_bytes=32 * 1024 * 1024),
        cost_estimate=pl.CostEstimate(flops=flops, transcendentals=0,
                                      bytes_accessed=bytes_accessed),
    )(*operands)

    return out_p[..., :cout]


# ---------------------------- pure-JAX reference -----------------------------
def bottleneck_ref(x_nhwc, params, in_planes, planes, stride):
    cout = EXPANSION * planes

    def bn_apply(y, bn):
        s, b = _fold_bn(*bn)
        return y * s + b

    h = jnp.einsum("nhwc,cp->nhwp", x_nhwc, params["w1"])
    h = jax.nn.relu(bn_apply(h, params["bn1"]))
    h = lax.conv_general_dilated(
        h, params["w2"], window_strides=(stride, stride),
        padding=((1, 1), (1, 1)),
        dimension_numbers=("NHWC", "HWIO", "NHWC"))
    h = jax.nn.relu(bn_apply(h, params["bn2"]))
    h = jnp.einsum("nhwc,cp->nhwp", h, params["w3"])
    h = bn_apply(h, params["bn3"])

    if stride != 1 or in_planes != cout:
        sc = jnp.einsum("nhwc,cp->nhwp", x_nhwc[:, ::stride, ::stride, :], params["ws"])
        sc = bn_apply(sc, params["bns"])
    else:
        sc = x_nhwc
    return jax.nn.relu(h + sc)


if __name__ == "__main__":
    key = jax.random.PRNGKey(0)

    # (N, in_planes, planes, H, W, stride)
    configs = [
        (2, 4, 4, 16, 16, 1),    # projection shortcut (in_planes != expansion*planes)
        (2, 16, 4, 8, 8, 1),     # identity shortcut fast path
    ]

    for i, (N, in_planes, planes, H, W, stride) in enumerate(configs):
        kx, kp = jax.random.split(jax.random.fold_in(key, i))

        # PyTorch-style NCHW input, transposed to NHWC for the kernel.
        x_nchw = jax.random.normal(kx, (N, in_planes, H, W), jnp.float32)
        x_nhwc = jnp.transpose(x_nchw, (0, 2, 3, 1))

        params = make_params(kp, in_planes, planes)

        out = bottleneck_pallas(x_nhwc, params, in_planes, planes, stride)
        out = jax.block_until_ready(out)

        ref = bottleneck_ref(x_nhwc, params, in_planes, planes, stride)
        Ho = (H - 1) // stride + 1
        Wo = (W - 1) // stride + 1
        assert out.shape == (N, Ho, Wo, EXPANSION * planes)
        err = float(jnp.max(jnp.abs(out - ref)))
        assert jnp.allclose(out, ref, atol=1e-4, rtol=1e-4), err

        # (equivalent NCHW view of the result: jnp.transpose(out, (0, 3, 1, 2)))

    print("KERNEL_OK")
</pallas_src>

<mosaic_0001>
module attributes {stable_mosaic.version = 11 : i64} {
  func.func @_bottleneck_kernel(%arg0: i32, %arg1: memref<1x16x16x128xf32, #tpu.memory_space<vmem>>, %arg2: memref<128x128xf32, #tpu.memory_space<vmem>>, %arg3: memref<1x128xf32, #tpu.memory_space<vmem>>, %arg4: memref<9x128x128xf32, #tpu.memory_space<vmem>>, %arg5: memref<1x128xf32, #tpu.memory_space<vmem>>, %arg6: memref<128x128xf32, #tpu.memory_space<vmem>>, %arg7: memref<1x128xf32, #tpu.memory_space<vmem>>, %arg8: memref<128x128xf32, #tpu.memory_space<vmem>>, %arg9: memref<1x128xf32, #tpu.memory_space<vmem>>, %arg10: memref<1x16x16x128xf32, #tpu.memory_space<vmem>>, %arg11: memref<18x18x128xf32, #tpu.memory_space<vmem>>) attributes {dimension_semantics = [#tpu.dimension_semantics<parallel>], iteration_bounds = array<i64: 2>, scalar_prefetch = 0 : i64, scratch_operands = 1 : i64, tpu.core_type = #tpu.core_type<tc>, window_params = [{transform_indices = @transform_0, window_bounds = array<i64: 1, 16, 16, 128>}, {pipeline_mode = #tpu.pipeline_mode<synchronous>, transform_indices = @transform_1, window_bounds = array<i64: 128, 128>}, {pipeline_mode = #tpu.pipeline_mode<synchronous>, transform_indices = @transform_2, window_bounds = array<i64: 1, 128>}, {pipeline_mode = #tpu.pipeline_mode<synchronous>, transform_indices = @transform_3, window_bounds = array<i64: 9, 128, 128>}, {pipeline_mode = #tpu.pipeline_mode<synchronous>, transform_indices = @transform_4, window_bounds = array<i64: 1, 128>}, {pipeline_mode = #tpu.pipeline_mode<synchronous>, transform_indices = @transform_5, window_bounds = array<i64: 128, 128>}, {pipeline_mode = #tpu.pipeline_mode<synchronous>, transform_indices = @transform_6, window_bounds = array<i64: 1, 128>}, {pipeline_mode = #tpu.pipeline_mode<synchronous>, transform_indices = @transform_7, window_bounds = array<i64: 128, 128>}, {pipeline_mode = #tpu.pipeline_mode<synchronous>, transform_indices = @transform_8, window_bounds = array<i64: 1, 128>}, {transform_indices = @transform_9, window_bounds = array<i64: 1, 16, 16, 128>}]} {
    %c0 = arith.constant 0 : index
    %c0_0 = arith.constant 0 : index
    %c0_1 = arith.constant 0 : index
    %c0_2 = arith.constant 0 : index
    %0 = vector.load %arg1[%c0, %c0_0, %c0_1, %c0_2] : memref<1x16x16x128xf32, #tpu.memory_space<vmem>>, vector<1x16x16x128xf32>
    %1 = vector.shape_cast %0 : vector<1x16x16x128xf32> to vector<16x16x128xf32>
    %2 = vector.shape_cast %1 : vector<16x16x128xf32> to vector<256x128xf32>
    %c0_3 = arith.constant 0 : index
    %c0_4 = arith.constant 0 : index
    %3 = vector.load %arg2[%c0_3, %c0_4] : memref<128x128xf32, #tpu.memory_space<vmem>>, vector<128x128xf32>
    %cst = arith.constant dense<0.000000e+00> : vector<256x128xf32>
    %4 = tpu.matmul %2, %3, %cst {dimension_numbers = #tpu.dot_dimension_numbers<[1], [0], [0], [1], [0, 0, 1, 1], [], []>} : vector<256x128xf32>, vector<128x128xf32>, vector<256x128xf32> -> vector<256x128xf32>
    %c0_5 = arith.constant 0 : index
    %c0_6 = arith.constant 0 : index
    %5 = vector.load %arg3[%c0_5, %c0_6] : memref<1x128xf32, #tpu.memory_space<vmem>>, vector<1x128xf32>
    %6 = vector.broadcast %5 : vector<1x128xf32> to vector<256x128xf32>
    %7 = arith.addf %4, %6 : vector<256x128xf32>
    %cst_7 = arith.constant 0.000000e+00 : f32
    %8 = vector.broadcast %cst_7 : f32 to vector<256x128xf32>
    %9 = arith.maximumf %7, %8 : vector<256x128xf32>
    %cst_8 = arith.constant 0.000000e+00 : f32
    %10 = vector.broadcast %cst_8 : f32 to vector<1x18x128xf32>
    %cst_9 = arith.constant 0.000000e+00 : f32
    %11 = vector.broadcast %cst_9 : f32 to vector<16x1x128xf32>
    %c0_10 = arith.constant 0 : index
    %c0_11 = arith.constant 0 : index
    %c0_12 = arith.constant 0 : index
    %12 = vector.load %arg11[%c0_10, %c0_11, %c0_12] : memref<18x18x128xf32, #tpu.memory_space<vmem>>, vector<1x18x128xf32>
    tpu.vector_store %arg11[%c0_10, %c0_11, %c0_12], %10 {strides = array<i32>} : memref<18x18x128xf32, #tpu.memory_space<vmem>>, vector<1x18x128xf32>,
    %c17 = arith.constant 17 : index
    %c0_13 = arith.constant 0 : index
    %c0_14 = arith.constant 0 : index
    %13 = vector.load %arg11[%c17, %c0_13, %c0_14] : memref<18x18x128xf32, #tpu.memory_space<vmem>>, vector<1x18x128xf32>
    tpu.vector_store %arg11[%c17, %c0_13, %c0_14], %10 {strides = array<i32>} : memref<18x18x128xf32, #tpu.memory_space<vmem>>, vector<1x18x128xf32>,
    %c1 = arith.constant 1 : index
    %c0_15 = arith.constant 0 : index
    %c0_16 = arith.constant 0 : index
    %14 = vector.load %arg11[%c1, %c0_15, %c0_16] : memref<18x18x128xf32, #tpu.memory_space<vmem>>, vector<16x1x128xf32>
    tpu.vector_store %arg11[%c1, %c0_15, %c0_16], %11 {strides = array<i32>} : memref<18x18x128xf32, #tpu.memory_space<vmem>>, vector<16x1x128xf32>,
    %c1_17 = arith.constant 1 : index
    %c17_18 = arith.constant 17 : index
    %c0_19 = arith.constant 0 : index
    %15 = vector.load %arg11[%c1_17, %c17_18, %c0_19] : memref<18x18x128xf32, #tpu.memory_space<vmem>>, vector<16x1x128xf32>
    tpu.vector_store %arg11[%c1_17, %c17_18, %c0_19], %11 {strides = array<i32>} : memref<18x18x128xf32, #tpu.memory_space<vmem>>, vector<16x1x128xf32>,
    %16 = vector.shape_cast %9 : vector<256x128xf32> to vector<16x16x128xf32>
    %c1_20 = arith.constant 1 : index
    %c1_21 = arith.constant 1 : index
    %c0_22 = arith.constant 0 : index
    %17 = vector.load %arg11[%c1_20, %c1_21, %c0_22] : memref<18x18x128xf32, #tpu.memory_space<vmem>>, vector<16x16x128xf32>
    tpu.vector_store %arg11[%c1_20, %c1_21, %c0_22], %16 {strides = array<i32>} : memref<18x18x128xf32, #tpu.memory_space<vmem>>, vector<16x16x128xf32>,
    %cst_23 = arith.constant 0.000000e+00 : f32
    %18 = vector.broadcast %cst_23 : f32 to vector<256x128xf32>
    %c0_24 = arith.constant 0 : index
    %c0_25 = arith.constant 0 : index
    %19 = vector.load %arg5[%c0_24, %c0_25] : memref<1x128xf32, #tpu.memory_space<vmem>>, vector<1x128xf32>
    %20 = vector.broadcast %19 : vector<1x128xf32> to vector<256x128xf32>
    %21 = arith.addf %18, %20 : vector<256x128xf32>
    %c0_26 = arith.constant 0 : index
    %c0_27 = arith.constant 0 : index
    %c0_28 = arith.constant 0 : index
    %22 = vector.load %arg11[%c0_26, %c0_27, %c0_28] : memref<18x18x128xf32, #tpu.memory_space<vmem>>, vector<16x16x128xf32>
    %23 = vector.shape_cast %22 : vector<16x16x128xf32> to vector<256x128xf32>
    %c0_29 = arith.constant 0 : index
    %c0_30 = arith.constant 0 : index
    %c0_31 = arith.constant 0 : index
    %24 = vector.load %arg4[%c0_29, %c0_30, %c0_31] : memref<9x128x128xf32, #tpu.memory_space<vmem>>, vector<1x128x128xf32>
    %25 = vector.shape_cast %24 : vector<1x128x128xf32> to vector<128x128xf32>
    %cst_32 = arith.constant dense<0.000000e+00> : vector<256x128xf32>
    %26 = tpu.matmul %23, %25, %cst_32 {dimension_numbers = #tpu.dot_dimension_numbers<[1], [0], [0], [1], [0, 0, 1, 1], [], []>} : vector<256x128xf32>, vector<128x128xf32>, vector<256x128xf32> -> vector<256x128xf32>
    %27 = arith.addf %21, %26 : vector<256x128xf32>
    %c0_33 = arith.constant 0 : index
    %c1_34 = arith.constant 1 : index
    %c0_35 = arith.constant 0 : index
    %28 = vector.load %arg11[%c0_33, %c1_34, %c0_35] : memref<18x18x128xf32, #tpu.memory_space<vmem>>, vector<16x16x128xf32>
    %29 = vector.shape_cast %28 : vector<16x16x128xf32> to vector<256x128xf32>
    %c1_36 = arith.constant 1 : index
    %c0_37 = arith.constant 0 : index
    %c0_38 = arith.constant 0 : index
    %30 = vector.load %arg4[%c1_36, %c0_37, %c0_38] : memref<9x128x128xf32, #tpu.memory_space<vmem>>, vector<1x128x128xf32>
    %31 = vector.shape_cast %30 : vector<1x128x128xf32> to vector<128x128xf32>
    %cst_39 = arith.constant dense<0.000000e+00> : vector<256x128xf32>
    %32 = tpu.matmul %29, %31, %cst_39 {dimension_numbers = #tpu.dot_dimension_numbers<[1], [0], [0], [1], [0, 0, 1, 1], [], []>} : vector<256x128xf32>, vector<128x128xf32>, vector<256x128xf32> -> vector<256x128xf32>
    %33 = arith.addf %27, %32 : vector<256x128xf32>
    %c0_40 = arith.constant 0 : index
    %c2 = arith.constant 2 : index
    %c0_41 = arith.constant 0 : index
    %34 = vector.load %arg11[%c0_40, %c2, %c0_41] : memref<18x18x128xf32, #tpu.memory_space<vmem>>, vector<16x16x128xf32>
    %35 = vector.shape_cast %34 : vector<16x16x128xf32> to vector<256x128xf32>
    %c2_42 = arith.constant 2 : index
    %c0_43 = arith.constant 0 : index
    %c0_44 = arith.constant 0 : index
    %36 = vector.load %arg4[%c2_42, %c0_43, %c0_44] : memref<9x128x128xf32, #tpu.memory_space<vmem>>, vector<1x128x128xf32>
    %37 = vector.shape_cast %36 : vector<1x128x128xf32> to vector<128x128xf32>
    %cst_45 = arith.constant dense<0.000000e+00> : vector<256x128xf32>
    %38 = tpu.matmul %35, %37, %cst_45 {dimension_numbers = #tpu.dot_dimension_numbers<[1], [0], [0], [1], [0, 0, 1, 1], [], []>} : vector<256x128xf32>, vector<128x128xf32>, vector<256x128xf32> -> vector<256x128xf32>
    %39 = arith.addf %33, %38 : vector<256x128xf32>
    %c1_46 = arith.constant 1 : index
    %c0_47 = arith.constant 0 : index
    %c0_48 = arith.constant 0 : index
    %40 = vector.load %arg11[%c1_46, %c0_47, %c0_48] : memref<18x18x128xf32, #tpu.memory_space<vmem>>, vector<16x16x128xf32>
    %41 = vector.shape_cast %40 : vector<16x16x128xf32> to vector<256x128xf32>
    %c3 = arith.constant 3 : index
    %c0_49 = arith.constant 0 : index
    %c0_50 = arith.constant 0 : index
    %42 = vector.load %arg4[%c3, %c0_49, %c0_50] : memref<9x128x128xf32, #tpu.memory_space<vmem>>, vector<1x128x128xf32>
    %43 = vector.shape_cast %42 : vector<1x128x128xf32> to vector<128x128xf32>
    %cst_51 = arith.constant dense<0.000000e+00> : vector<256x128xf32>
    %44 = tpu.matmul %41, %43, %cst_51 {dimension_numbers = #tpu.dot_dimension_numbers<[1], [0], [0], [1], [0, 0, 1, 1], [], []>} : vector<256x128xf32>, vector<128x128xf32>, vector<256x128xf32> -> vector<256x128xf32>
    %45 = arith.addf %39, %44 : vector<256x128xf32>
    %c1_52 = arith.constant 1 : index
    %c1_53 = arith.constant 1 : index
    %c0_54 = arith.constant 0 : index
    %46 = vector.load %arg11[%c1_52, %c1_53, %c0_54] : memref<18x18x128xf32, #tpu.memory_space<vmem>>, vector<16x16x128xf32>
    %47 = vector.shape_cast %46 : vector<16x16x128xf32> to vector<256x128xf32>
    %c4 = arith.constant 4 : index
    %c0_55 = arith.constant 0 : index
    %c0_56 = arith.constant 0 : index
    %48 = vector.load %arg4[%c4, %c0_55, %c0_56] : memref<9x128x128xf32, #tpu.memory_space<vmem>>, vector<1x128x128xf32>
    %49 = vector.shape_cast %48 : vector<1x128x128xf32> to vector<128x128xf32>
    %cst_57 = arith.constant dense<0.000000e+00> : vector<256x128xf32>
    %50 = tpu.matmul %47, %49, %cst_57 {dimension_numbers = #tpu.dot_dimension_numbers<[1], [0], [0], [1], [0, 0, 1, 1], [], []>} : vector<256x128xf32>, vector<128x128xf32>, vector<256x128xf32> -> vector<256x128xf32>
    %51 = arith.addf %45, %50 : vector<256x128xf32>
    %c1_58 = arith.constant 1 : index
    %c2_59 = arith.constant 2 : index
    %c0_60 = arith.constant 0 : index
    %52 = vector.load %arg11[%c1_58, %c2_59, %c0_60] : memref<18x18x128xf32, #tpu.memory_space<vmem>>, vector<16x16x128xf32>
    %53 = vector.shape_cast %52 : vector<16x16x128xf32> to vector<256x128xf32>
    %c5 = arith.constant 5 : index
    %c0_61 = arith.constant 0 : index
    %c0_62 = arith.constant 0 : index
    %54 = vector.load %arg4[%c5, %c0_61, %c0_62] : memref<9x128x128xf32, #tpu.memory_space<vmem>>, vector<1x128x128xf32>
    %55 = vector.shape_cast %54 : vector<1x128x128xf32> to vector<128x128xf32>
    %cst_63 = arith.constant dense<0.000000e+00> : vector<256x128xf32>
    %56 = tpu.matmul %53, %55, %cst_63 {dimension_numbers = #tpu.dot_dimension_numbers<[1], [0], [0], [1], [0, 0, 1, 1], [], []>} : vector<256x128xf32>, vector<128x128xf32>, vector<256x128xf32> -> vector<256x128xf32>
    %57 = arith.addf %51, %56 : vector<256x128xf32>
    %c2_64 = arith.constant 2 : index
    %c0_65 = arith.constant 0 : index
    %c0_66 = arith.constant 0 : index
    %58 = vector.load %arg11[%c2_64, %c0_65, %c0_66] : memref<18x18x128xf32, #tpu.memory_space<vmem>>, vector<16x16x128xf32>
    %59 = vector.shape_cast %58 : vector<16x16x128xf32> to vector<256x128xf32>
    %c6 = arith.constant 6 : index
    %c0_67 = arith.constant 0 : index
    %c0_68 = arith.constant 0 : index
    %60 = vector.load %arg4[%c6, %c0_67, %c0_68] : memref<9x128x128xf32, #tpu.memory_space<vmem>>, vector<1x128x128xf32>
    %61 = vector.shape_cast %60 : vector<1x128x128xf32> to vector<128x128xf32>
    %cst_69 = arith.constant dense<0.000000e+00> : vector<256x128xf32>
    %62 = tpu.matmul %59, %61, %cst_69 {dimension_numbers = #tpu.dot_dimension_numbers<[1], [0], [0], [1], [0, 0, 1, 1], [], []>} : vector<256x128xf32>, vector<128x128xf32>, vector<256x128xf32> -> vector<256x128xf32>
    %63 = arith.addf %57, %62 : vector<256x128xf32>
    %c2_70 = arith.constant 2 : index
    %c1_71 = arith.constant 1 : index
    %c0_72 = arith.constant 0 : index
    %64 = vector.load %arg11[%c2_70, %c1_71, %c0_72] : memref<18x18x128xf32, #tpu.memory_space<vmem>>, vector<16x16x128xf32>
    %65 = vector.shape_cast %64 : vector<16x16x128xf32> to vector<256x128xf32>
    %c7 = arith.constant 7 : index
    %c0_73 = arith.constant 0 : index
    %c0_74 = arith.constant 0 : index
    %66 = vector.load %arg4[%c7, %c0_73, %c0_74] : memref<9x128x128xf32, #tpu.memory_space<vmem>>, vector<1x128x128xf32>
    %67 = vector.shape_cast %66 : vector<1x128x128xf32> to vector<128x128xf32>
    %cst_75 = arith.constant dense<0.000000e+00> : vector<256x128xf32>
    %68 = tpu.matmul %65, %67, %cst_75 {dimension_numbers = #tpu.dot_dimension_numbers<[1], [0], [0], [1], [0, 0, 1, 1], [], []>} : vector<256x128xf32>, vector<128x128xf32>, vector<256x128xf32> -> vector<256x128xf32>
    %69 = arith.addf %63, %68 : vector<256x128xf32>
    %c2_76 = arith.constant 2 : index
    %c2_77 = arith.constant 2 : index
    %c0_78 = arith.constant 0 : index
    %70 = vector.load %arg11[%c2_76, %c2_77, %c0_78] : memref<18x18x128xf32, #tpu.memory_space<vmem>>, vector<16x16x128xf32>
    %71 = vector.shape_cast %70 : vector<16x16x128xf32> to vector<256x128xf32>
    %c8 = arith.constant 8 : index
    %c0_79 = arith.constant 0 : index
    %c0_80 = arith.constant 0 : index
    %72 = vector.load %arg4[%c8, %c0_79, %c0_80] : memref<9x128x128xf32, #tpu.memory_space<vmem>>, vector<1x128x128xf32>
    %73 = vector.shape_cast %72 : vector<1x128x128xf32> to vector<128x128xf32>
    %cst_81 = arith.constant dense<0.000000e+00> : vector<256x128xf32>
    %74 = tpu.matmul %71, %73, %cst_81 {dimension_numbers = #tpu.dot_dimension_numbers<[1], [0], [0], [1], [0, 0, 1, 1], [], []>} : vector<256x128xf32>, vector<128x128xf32>, vector<256x128xf32> -> vector<256x128xf32>
    %75 = arith.addf %69, %74 : vector<256x128xf32>
    %cst_82 = arith.constant 0.000000e+00 : f32
    %76 = vector.broadcast %cst_82 : f32 to vector<256x128xf32>
    %77 = arith.maximumf %75, %76 : vector<256x128xf32>
    %c0_83 = arith.constant 0 : index
    %c0_84 = arith.constant 0 : index
    %78 = vector.load %arg6[%c0_83, %c0_84] : memref<128x128xf32, #tpu.memory_space<vmem>>, vector<128x128xf32>
    %cst_85 = arith.constant dense<0.000000e+00> : vector<256x128xf32>
    %79 = tpu.matmul %77, %78, %cst_85 {dimension_numbers = #tpu.dot_dimension_numbers<[1], [0], [0], [1], [0, 0, 1, 1], [], []>} : vector<256x128xf32>, vector<128x128xf32>, vector<256x128xf32> -> vector<256x128xf32>
    %c0_86 = arith.constant 0 : index
    %c0_87 = arith.constant 0 : index
    %80 = vector.load %arg7[%c0_86, %c0_87] : memref<1x128xf32, #tpu.memory_space<vmem>>, vector<1x128xf32>
    %81 = vector.broadcast %80 : vector<1x128xf32> to vector<256x128xf32>
    %82 = arith.addf %79, %81 : vector<256x128xf32>
    %c0_88 = arith.constant 0 : index
    %c0_89 = arith.constant 0 : index
    %83 = vector.load %arg8[%c0_88, %c0_89] : memref<128x128xf32, #tpu.memory_space<vmem>>, vector<128x128xf32>
    %cst_90 = arith.constant dense<0.000000e+00> : vector<256x128xf32>
    %84 = tpu.matmul %2, %83, %cst_90 {dimension_numbers = #tpu.dot_dimension_numbers<[1], [0], [0], [1], [0, 0, 1, 1], [], []>} : vector<256x128xf32>, vector<128x128xf32>, vector<256x128xf32> -> vector<256x128xf32>
    %c0_91 = arith.constant 0 : index
    %c0_92 = arith.constant 0 : index
    %85 = vector.load %arg9[%c0_91, %c0_92] : memref<1x128xf32, #tpu.memory_space<vmem>>, vector<1x128xf32>
    %86 = vector.broadcast %85 : vector<1x128xf32> to vector<256x128xf32>
    %87 = arith.addf %84, %86 : vector<256x128xf32>
    %88 = arith.addf %82, %87 : vector<256x128xf32>
    %cst_93 = arith.constant 0.000000e+00 : f32
    %89 = vector.broadcast %cst_93 : f32 to vector<256x128xf32>
    %90 = arith.maximumf %88, %89 : vector<256x128xf32>
    %91 = vector.shape_cast %90 : vector<256x128xf32> to vector<16x16x128xf32>
    %c0_94 = arith.constant 0 : index
    %c0_95 = arith.constant 0 : index
    %c0_96 = arith.constant 0 : index
    %c0_97 = arith.constant 0 : index
    %92 = vector.load %arg10[%c0_94, %c0_95, %c0_96, %c0_97] : memref<1x16x16x128xf32, #tpu.memory_space<vmem>>, vector<1x16x16x128xf32>
    %93 = vector.shape_cast %92 : vector<1x16x16x128xf32> to vector<16x16x128xf32>
    %94 = vector.shape_cast %91 : vector<16x16x128xf32> to vector<1x16x16x128xf32>
    tpu.vector_store %arg10[%c0_94, %c0_95, %c0_96, %c0_97], %94 {strides = array<i32>} : memref<1x16x16x128xf32, #tpu.memory_space<vmem>>, vector<1x16x16x128xf32>,
    return
  }
  func.func @transform_0(%arg0: i32) -> (i32, i32, i32, i32) {
    %c0_i32 = arith.constant 0 : i32
    %c0_i32_0 = arith.constant 0 : i32
    %c0_i32_1 = arith.constant 0 : i32
    %c0_i32_2 = arith.constant 0 : i32
    return %arg0, %c0_i32, %c0_i32_0, %c0_i32_1 : i32, i32, i32, i32
  }
  func.func @transform_1(%arg0: i32) -> (i32, i32) {
    %c0_i32 = arith.constant 0 : i32
    %c0_i32_0 = arith.constant 0 : i32
    %c0_i32_1 = arith.constant 0 : i32
    return %c0_i32, %c0_i32_0 : i32, i32
  }
  func.func @transform_2(%arg0: i32) -> (i32, i32) {
    %c0_i32 = arith.constant 0 : i32
    %c0_i32_0 = arith.constant 0 : i32
    %c0_i32_1 = arith.constant 0 : i32
    return %c0_i32, %c0_i32_0 : i32, i32
  }
  func.func @transform_3(%arg0: i32) -> (i32, i32, i32) {
    %c0_i32 = arith.constant 0 : i32
    %c0_i32_0 = arith.constant 0 : i32
    %c0_i32_1 = arith.constant 0 : i32
    %c0_i32_2 = arith.constant 0 : i32
    return %c0_i32, %c0_i32_0, %c0_i32_1 : i32, i32, i32
  }
  func.func @transform_4(%arg0: i32) -> (i32, i32) {
    %c0_i32 = arith.constant 0 : i32
    %c0_i32_0 = arith.constant 0 : i32
    %c0_i32_1 = arith.constant 0 : i32
    return %c0_i32, %c0_i32_0 : i32, i32
  }
  func.func @transform_5(%arg0: i32) -> (i32, i32) {
    %c0_i32 = arith.constant 0 : i32
    %c0_i32_0 = arith.constant 0 : i32
    %c0_i32_1 = arith.constant 0 : i32
    return %c0_i32, %c0_i32_0 : i32, i32
  }
  func.func @transform_6(%arg0: i32) -> (i32, i32) {
    %c0_i32 = arith.constant 0 : i32
    %c0_i32_0 = arith.constant 0 : i32
    %c0_i32_1 = arith.constant 0 : i32
    return %c0_i32, %c0_i32_0 : i32, i32
  }
  func.func @transform_7(%arg0: i32) -> (i32, i32) {
    %c0_i32 = arith.constant 0 : i32
    %c0_i32_0 = arith.constant 0 : i32
    %c0_i32_1 = arith.constant 0 : i32
    return %c0_i32, %c0_i32_0 : i32, i32
  }
  func.func @transform_8(%arg0: i32) -> (i32, i32) {
    %c0_i32 = arith.constant 0 : i32
    %c0_i32_0 = arith.constant 0 : i32
    %c0_i32_1 = arith.constant 0 : i32
    return %c0_i32, %c0_i32_0 : i32, i32
  }
  func.func @transform_9(%arg0: i32) -> (i32, i32, i32, i32) {
    %c0_i32 = arith.constant 0 : i32
    %c0_i32_0 = arith.constant 0 : i32
    %c0_i32_1 = arith.constant 0 : i32
    %c0_i32_2 = arith.constant 0 : i32
    return %arg0, %c0_i32, %c0_i32_0, %c0_i32_1 : i32, i32, i32, i32
  }
}

</mosaic_0001>

<llo_original>
// kernel: tpu_custom_call.1
$region0: #{tpu_custom_call.1}
  #allocation0 [shape = 'u32[]', space=smem, size = 0x4, offset = 0x4, fixed_abs, tag = 'smem constant byte address 0x4 - core index']
  #allocation1 [shape = 'u32[72,128]{1,0:T(1,128)}', space=vmem, size = 0x9000, scoped, tag = 'internal scratch']
  #allocation2 [shape = 'f32[18,18,128]{2,1,0:T(8,128)}', space=vmem, size = 0x36000, scoped, tag = 'scratch operand']
  %s0 = inlined_call_operand.hbm [shape: f32[2,16,16,128], index: 0, kind: input, shape index: {}]
  %s1 = inlined_call_operand.hbm [shape: f32[128,128], index: 1, kind: input, shape index: {}]
  %s2 = inlined_call_operand.vmem [shape: f32[1,128], index: 2, kind: input, shape index: {}]
  %s3 = inlined_call_operand.hbm [shape: f32[9,128,128], index: 3, kind: input, shape index: {}]
  %s4 = inlined_call_operand.vmem [shape: f32[1,128], index: 4, kind: input, shape index: {}]
  %s5 = inlined_call_operand.hbm [shape: f32[128,128], index: 5, kind: input, shape index: {}]
  %s6 = inlined_call_operand.vmem [shape: f32[1,128], index: 6, kind: input, shape index: {}]
  %s7 = inlined_call_operand.hbm [shape: f32[128,128], index: 7, kind: input, shape index: {}]
  %s8 = inlined_call_operand.vmem [shape: f32[1,128], index: 8, kind: input, shape index: {}]
  %s9 = inlined_call_operand.hbm [shape: f32[2,16,16,128], index: 9, kind: output, shape index: {}]
  %s10 = sld [smem:[#allocation0]]
  $region89: #{tpu_custom_call.1} parent=0
    _
  %s12 = ssub.s32 1, %s10
  %s13 = scalar_select 0, %s12, %s10
  $region1: #{tpu_custom_call.1} parent=0
    #allocation3 [shape = 'u8[262144]{0}', space=vmem, size = 0x40000, scoped, tag = 'input window, operand 0']
    #allocation4 [shape = 's32[2]{0}', space=sflag, size = 0x8, scoped, tag = 'scoped memory for tpu_custom_call.1']
    #allocation5 [shape = 's32[2]{0}', space=sflag, size = 0x8, scoped, tag = 'scoped memory for tpu_custom_call.1']
    #allocation6 [shape = 'u8[65536]{0}', space=vmem, size = 0x10000, scoped, tag = 'input window, operand 1, single buffered']
    #allocation7 [shape = 's32[1]{0}', space=sflag, size = 0x4, scoped, tag = 'scoped memory for tpu_custom_call.1']
    #allocation8 [shape = 'u8[589824]{0}', space=vmem, size = 0x90000, scoped, tag = 'input window, operand 3, single buffered']
    #allocation9 [shape = 'u8[65536]{0}', space=vmem, size = 0x10000, scoped, tag = 'input window, operand 5, single buffered']
    #allocation10 [shape = 's32[1]{0}', space=sflag, size = 0x4, scoped, tag = 'scoped memory for tpu_custom_call.1']
    #allocation11 [shape = 'u8[65536]{0}', space=vmem, size = 0x10000, scoped, tag = 'input window, operand 7, single buffered']
    #allocation12 [shape = 'u8[262144]{0}', space=vmem, size = 0x40000, scoped, tag = 'output window, operand 0']
    %14 = vsyncpa [#allocation4], 0
    %s15 = scalar_lea.sflag [#allocation4], 1
    %16 = vsyncpa %s15, 0
    %17 = vsyncpa [#allocation7], 0
    %18 = vsyncpa [#allocation10], 0
    %19 = vsyncpa [#allocation5], 0
    %s20 = scalar_lea.sflag [#allocation5], 1
    %21 = vsyncpa %s20, 0
    loop: start=0, step=1, limit=4
    $region2: #{tpu_custom_call.1} parent=1 // loop_pre_header
      _
    $region3: #{tpu_custom_call.1} parent=1 // loop_header
      %s23 = sphi 0, %s27
      %p24 = scmp.ge.s32.totalorder %s23, 4
      %s33 = sphi 0, %s35
      %s36 = sphi 0, %s33
      %s37 = sphi 0, %s36
      %s53 = sphi 0, %s37
      %s57 = sphi 0, %s57
      %s59 = sphi 0, %s57
      %s60 = sphi 0, %s59
      %s74 = sphi 0, %s60
      %s78 = sphi 0, %s78
      %s80 = sphi 0, %s78
      %s81 = sphi 0, %s80
      %s95 = sphi 0, %s81
      %s99 = sphi 0, %s99
      %s101 = sphi 0, %s99
      %s102 = sphi 0, %s101
      %s116 = sphi 0, %s102
      %s120 = sphi 0, %s120
      %s122 = sphi 0, %s120
      %s123 = sphi 0, %s122
      %s137 = sphi 0, %s123
      %s141 = sphi 0, %s141
      %s143 = sphi 0, %s141
      %s144 = sphi 0, %s143
      %s158 = sphi 0, %s144
      %s162 = sphi 0, %s162
      %s164 = sphi 0, %s162
      %s165 = sphi 0, %s164
      %s179 = sphi 0, %s165
      %s183 = sphi 0, %s183
      %s185 = sphi 0, %s183
      %s186 = sphi 0, %s185
      %s200 = sphi 0, %s186
      %s204 = sphi 0, %s204
      %s206 = sphi 0, %s204
      %s207 = sphi 0, %s206
      %s221 = sphi 0, %s207
      %s227 = sphi 0, %s229
      %s230 = sphi 0, %s227
      %s231 = sphi 0, %s230
      %s247 = sphi 0, %s231
    $region4: #{tpu_custom_call.1} parent=1 // loop_header_branch
      %26 = sbr.rel (%p24) target = $region8
    $region5: #{tpu_custom_call.1} parent=1 // loop_body
      %s28 = ssub.s32 %s23, 1
      %s29 = ssub.s32 %s23, 2
      %s30 = sadd.s32 %s23, 1
      %s31 = ssub.s32 %s23, %s30
      %p32 = scmp.eq.s32.totalorder %s31, 0
      %s34 = sadd.s32 %s33, 1
      %s35 = scalar_select %p32, %s33, %s34
      %p38 = pneg %p32
      %p39 = scmp.eq.s32.totalorder %s23, 1
      %p40 = por %p38, %p39
      %p41 = scmp.ne.s32.totalorder %s33, %s36
      %p42 = scmp.eq.s32.totalorder %s23, 0
      %p43 = por %p41, %p42
      %p44 = scmp.ne.s32.totalorder %s33, %s36
      %p45 = scmp.eq.s32.totalorder %s28, 1
      %p46 = por %p44, %p45
      %p47 = scmp.ne.s32.totalorder %s36, %s37
      %p48 = scmp.eq.s32.totalorder %s28, 0
      %p49 = por %p47, %p48
      %p50 = scmp.ne.s32.totalorder %s36, %s37
      %p51 = scmp.eq.s32.totalorder %s29, 1
      %p52 = por %p50, %p51
      %p54 = scmp.ne.s32.totalorder %s37, %s53
      %p55 = scmp.eq.s32.totalorder %s29, 0
      %p56 = por %p54, %p55
      %s58 = sadd.s32 %s57, 1
      %p61 = scmp.eq.s32.totalorder %s23, 1
      %p62 = scmp.ne.s32.totalorder %s57, %s59
      %p63 = scmp.eq.s32.totalorder %s23, 0
      %p64 = por %p62, %p63
      %p65 = scmp.ne.s32.totalorder %s57, %s59
      %p66 = scmp.eq.s32.totalorder %s28, 1
      %p67 = por %p65, %p66
      %p68 = scmp.ne.s32.totalorder %s59, %s60
      %p69 = scmp.eq.s32.totalorder %s28, 0
      %p70 = por %p68, %p69
      %p71 = scmp.ne.s32.totalorder %s59, %s60
      %p72 = scmp.eq.s32.totalorder %s29, 1
      %p73 = por %p71, %p72
      %p75 = scmp.ne.s32.totalorder %s60, %s74
      %p76 = scmp.eq.s32.totalorder %s29, 0
      %p77 = por %p75, %p76
      %s79 = sadd.s32 %s78, 1
      %p82 = scmp.eq.s32.totalorder %s23, 1
      %p83 = scmp.ne.s32.totalorder %s78, %s80
      %p84 = scmp.eq.s32.totalorder %s23, 0
      %p85 = por %p83, %p84
      %p86 = scmp.ne.s32.totalorder %s78, %s80
      %p87 = scmp.eq.s32.totalorder %s28, 1
      %p88 = por %p86, %p87
      %p89 = scmp.ne.s32.totalorder %s80, %s81
      %p90 = scmp.eq.s32.totalorder %s28, 0
      %p91 = por %p89, %p90
      %p92 = scmp.ne.s32.totalorder %s80, %s81
      %p93 = scmp.eq.s32.totalorder %s29, 1
      %p94 = por %p92, %p93
      %p96 = scmp.ne.s32.totalorder %s81, %s95
      %p97 = scmp.eq.s32.totalorder %s29, 0
      %p98 = por %p96, %p97
      %s100 = sadd.s32 %s99, 1
      %p103 = scmp.eq.s32.totalorder %s23, 1
      %p104 = scmp.ne.s32.totalorder %s99, %s101
      %p105 = scmp.eq.s32.totalorder %s23, 0
      %p106 = por %p104, %p105
      %p107 = scmp.ne.s32.totalorder %s99, %s101
      %p108 = scmp.eq.s32.totalorder %s28, 1
      %p109 = por %p107, %p108
      %p110 = scmp.ne.s32.totalorder %s101, %s102
      %p111 = scmp.eq.s32.totalorder %s28, 0
      %p112 = por %p110, %p111
      %p113 = scmp.ne.s32.totalorder %s101, %s102
      %p114 = scmp.eq.s32.totalorder %s29, 1
      %p115 = por %p113, %p114
      %p117 = scmp.ne.s32.totalorder %s102, %s116
      %p118 = scmp.eq.s32.totalorder %s29, 0
      %p119 = por %p117, %p118
      %s121 = sadd.s32 %s120, 1
      %p124 = scmp.eq.s32.totalorder %s23, 1
      %p125 = scmp.ne.s32.totalorder %s120, %s122
      %p126 = scmp.eq.s32.totalorder %s23, 0
      %p127 = por %p125, %p126
      %p128 = scmp.ne.s32.totalorder %s120, %s122
      %p129 = scmp.eq.s32.totalorder %s28, 1
      %p130 = por %p128, %p129
      %p131 = scmp.ne.s32.totalorder %s122, %s123
      %p132 = scmp.eq.s32.totalorder %s28, 0
      %p133 = por %p131, %p132
      %p134 = scmp.ne.s32.totalorder %s122, %s123
      %p135 = scmp.eq.s32.totalorder %s29, 1
      %p136 = por %p134, %p135
      %p138 = scmp.ne.s32.totalorder %s123, %s137
      %p139 = scmp.eq.s32.totalorder %s29, 0
      %p140 = por %p138, %p139
      %s142 = sadd.s32 %s141, 1
      %p145 = scmp.eq.s32.totalorder %s23, 1
      %p146 = scmp.ne.s32.totalorder %s141, %s143
      %p147 = scmp.eq.s32.totalorder %s23, 0
      %p148 = por %p146, %p147
      %p149 = scmp.ne.s32.totalorder %s141, %s143
      %p150 = scmp.eq.s32.totalorder %s28, 1
      %p151 = por %p149, %p150
      %p152 = scmp.ne.s32.totalorder %s143, %s144
      %p153 = scmp.eq.s32.totalorder %s28, 0
      %p154 = por %p152, %p153
      %p155 = scmp.ne.s32.totalorder %s143, %s144
      %p156 = scmp.eq.s32.totalorder %s29, 1
      %p157 = por %p155, %p156
      %p159 = scmp.ne.s32.totalorder %s144, %s158
      %p160 = scmp.eq.s32.totalorder %s29, 0
      %p161 = por %p159, %p160
      %s163 = sadd.s32 %s162, 1
      %p166 = scmp.eq.s32.totalorder %s23, 1
      %p167 = scmp.ne.s32.totalorder %s162, %s164
      %p168 = scmp.eq.s32.totalorder %s23, 0
      %p169 = por %p167, %p168
      %p170 = scmp.ne.s32.totalorder %s162, %s164
      %p171 = scmp.eq.s32.totalorder %s28, 1
      %p172 = por %p170, %p171
      %p173 = scmp.ne.s32.totalorder %s164, %s165
      %p174 = scmp.eq.s32.totalorder %s28, 0
      %p175 = por %p173, %p174
      %p176 = scmp.ne.s32.totalorder %s164, %s165
      %p177 = scmp.eq.s32.totalorder %s29, 1
      %p178 = por %p176, %p177
      %p180 = scmp.ne.s32.totalorder %s165, %s179
      %p181 = scmp.eq.s32.totalorder %s29, 0
      %p182 = por %p180, %p181
      %s184 = sadd.s32 %s183, 1
      %p187 = scmp.eq.s32.totalorder %s23, 1
      %p188 = scmp.ne.s32.totalorder %s183, %s185
      %p189 = scmp.eq.s32.totalorder %s23, 0
      %p190 = por %p188, %p189
      %p191 = scmp.ne.s32.totalorder %s183, %s185
      %p192 = scmp.eq.s32.totalorder %s28, 1
      %p193 = por %p191, %p192
      %p194 = scmp.ne.s32.totalorder %s185, %s186
      %p195 = scmp.eq.s32.totalorder %s28, 0
      %p196 = por %p194, %p195
      %p197 = scmp.ne.s32.totalorder %s185, %s186
      %p198 = scmp.eq.s32.totalorder %s29, 1
      %p199 = por %p197, %p198
      %p201 = scmp.ne.s32.totalorder %s186, %s200
      %p202 = scmp.eq.s32.totalorder %s29, 0
      %p203 = por %p201, %p202
      %s205 = sadd.s32 %s204, 1
      %p208 = scmp.eq.s32.totalorder %s23, 1
      %p209 = scmp.ne.s32.totalorder %s204, %s206
      %p210 = scmp.eq.s32.totalorder %s23, 0
      %p211 = por %p209, %p210
      %p212 = scmp.ne.s32.totalorder %s204, %s206
      %p213 = scmp.eq.s32.totalorder %s28, 1
      %p214 = por %p212, %p213
      %p215 = scmp.ne.s32.totalorder %s206, %s207
      %p216 = scmp.eq.s32.totalorder %s28, 0
      %p217 = por %p215, %p216
      %p218 = scmp.ne.s32.totalorder %s206, %s207
      %p219 = scmp.eq.s32.totalorder %s29, 1
      %p220 = por %p218, %p219
      %p222 = scmp.ne.s32.totalorder %s207, %s221
      %p223 = scmp.eq.s32.totalorder %s29, 0
      %p224 = por %p222, %p223
      %s225 = ssub.s32 %s23, %s30
      %p226 = scmp.eq.s32.totalorder %s225, 0
      %s228 = sadd.s32 %s227, 1
      %s229 = scalar_select %p226, %s227, %s228
      %p232 = pneg %p226
      %p233 = scmp.eq.s32.totalorder %s23, 1
      %p234 = por %p232, %p233
      %p235 = scmp.ne.s32.totalorder %s227, %s230
      %p236 = scmp.eq.s32.totalorder %s23, 0
      %p237 = por %p235, %p236
      %p238 = scmp.ne.s32.totalorder %s227, %s230
      %p239 = scmp.eq.s32.totalorder %s28, 1
      %p240 = por %p238, %p239
      %p241 = scmp.ne.s32.totalorder %s230, %s231
      %p242 = scmp.eq.s32.totalorder %s28, 0
      %p243 = por %p241, %p242
      %p244 = scmp.ne.s32.totalorder %s230, %s231
      %p245 = scmp.eq.s32.totalorder %s29, 1
      %p246 = por %p244, %p245
      %p248 = scmp.ne.s32.totalorder %s231, %s247
      %p249 = scmp.eq.s32.totalorder %s29, 0
      %p250 = por %p248, %p249
      %p251 = scmp.le.s32.totalorder 1, %s23
      %p252 = scmp.lt.s32.totalorder %s23, 3
      %p253 = pnand %p251, %p252
      %p254 = pneg %p253
      // Predicated region
      $region9: #{tpu_custom_call.1} parent=5 // pred_check
        _
      $region10: #{tpu_custom_call.1} parent=5 // pred_check_branch
        %256 = sbr.rel (%p253) target = $region12
      $region11: #{tpu_custom_call.1} parent=5 // pred_region
        %s257 = ssub.s32 %s23, 1
        // Predicated region
        $region13: #{tpu_custom_call.1} parent=11 // pred_check
          %p258 = pneg %p70
        $region14: #{tpu_custom_call.1} parent=11 // pred_check_branch
          %260 = sbr.rel (%p258) target = $region16
        $region15: #{tpu_custom_call.1} parent=11 // pred_region
          %262 = vsyncadd [#allocation7], 0
          %s263 = sshll.u32 %s1, 4
          %s264 = int_to_ptr.hbm [resolvable:$true] %s263
          %s265 = sshll.u32 [#allocation6], 4
          %s266 = int_to_ptr.vmem [resolvable:$true] %s265
          %271 = dma.hbm_to_vmem [thread:$0]  %s264, 2048, %s266, [#allocation7], 128, 128, 8
        $region16: #{tpu_custom_call.1} parent=11 // pred_fallthru
          _
        // Predicated region
        $region17: #{tpu_custom_call.1} parent=11 // pred_check
          %p272 = pneg %p91
        $region18: #{tpu_custom_call.1} parent=11 // pred_check_branch
          %274 = sbr.rel (%p272) target = $region20
        $region19: #{tpu_custom_call.1} parent=11 // pred_region
          _
        $region20: #{tpu_custom_call.1} parent=11 // pred_fallthru
          _
        // Predicated region
        $region21: #{tpu_custom_call.1} parent=11 // pred_check
          %p275 = pneg %p112
        $region22: #{tpu_custom_call.1} parent=11 // pred_check_branch
          %277 = sbr.rel (%p275) target = $region24
        $region23: #{tpu_custom_call.1} parent=11 // pred_region
          %279 = vsyncadd [#allocation7], 0
          %s280 = sshll.u32 %s3, 4
          %s281 = int_to_ptr.hbm [resolvable:$true] %s280
          %s282 = sshll.u32 [#allocation8], 4
          %s283 = int_to_ptr.vmem [resolvable:$true] %s282
          %288 = dma.hbm_to_vmem [thread:$0]  %s281, 18432, %s283, [#allocation7], 128, 128, 8
        $region24: #{tpu_custom_call.1} parent=11 // pred_fallthru
          _
        // Predicated region
        $region25: #{tpu_custom_call.1} parent=11 // pred_check
          %p289 = pneg %p133
        $region26: #{tpu_custom_call.1} parent=11 // pred_check_branch
          %291 = sbr.rel (%p289) target = $region28
        $region27: #{tpu_custom_call.1} parent=11 // pred_region
          _
        $region28: #{tpu_custom_call.1} parent=11 // pred_fallthru
          _
        // Predicated region
        $region29: #{tpu_custom_call.1} parent=11 // pred_check
          %p292 = pneg %p154
        $region30: #{tpu_custom_call.1} parent=11 // pred_check_branch
          %294 = sbr.rel (%p292) target = $region32
        $region31: #{tpu_custom_call.1} parent=11 // pred_region
          %296 = vsyncadd [#allocation10], 0
          %s297 = sshll.u32 %s5, 4
          %s298 = int_to_ptr.hbm [resolvable:$true] %s297
          %s299 = sshll.u32 [#allocation9], 4
          %s300 = int_to_ptr.vmem [resolvable:$true] %s299
          %305 = dma.hbm_to_vmem [thread:$0]  %s298, 2048, %s300, [#allocation10], 128, 128, 8
        $region32: #{tpu_custom_call.1} parent=11 // pred_fallthru
          _
        // Predicated region
        $region33: #{tpu_custom_call.1} parent=11 // pred_check
          %p306 = pneg %p175
        $region34: #{tpu_custom_call.1} parent=11 // pred_check_branch
          %308 = sbr.rel (%p306) target = $region36
        $region35: #{tpu_custom_call.1} parent=11 // pred_region
          _
        $region36: #{tpu_custom_call.1} parent=11 // pred_fallthru
          _
        // Predicated region
        $region37: #{tpu_custom_call.1} parent=11 // pred_check
          %p309 = pneg %p196
        $region38: #{tpu_custom_call.1} parent=11 // pred_check_branch
          %311 = sbr.rel (%p309) target = $region40
        $region39: #{tpu_custom_call.1} parent=11 // pred_region
          %313 = vsyncadd [#allocation10], 0
          %s314 = sshll.u32 %s7, 4
          %s315 = int_to_ptr.hbm [resolvable:$true] %s314
          %s316 = sshll.u32 [#allocation11], 4
          %s317 = int_to_ptr.vmem [resolvable:$true] %s316
          %322 = dma.hbm_to_vmem [thread:$0]  %s315, 2048, %s317, [#allocation10], 128, 128, 8
        $region40: #{tpu_custom_call.1} parent=11 // pred_fallthru
          _
        // Predicated region
        $region41: #{tpu_custom_call.1} parent=11 // pred_check
          %p323 = pneg %p217
        $region42: #{tpu_custom_call.1} parent=11 // pred_check_branch
          %325 = sbr.rel (%p323) target = $region44
        $region43: #{tpu_custom_call.1} parent=11 // pred_region
          _
        $region44: #{tpu_custom_call.1} parent=11 // pred_fallthru
          _
      $region12: #{tpu_custom_call.1} parent=5 // pred_fallthru
        _
      %p326 = scmp.lt.s32.totalorder %s23, 2
      // Predicated region
      $region45: #{tpu_custom_call.1} parent=5 // pred_check
        %p327 = pneg %p326
      $region46: #{tpu_custom_call.1} parent=5 // pred_check_branch
        %329 = sbr.rel (%p327) target = $region48
      $region47: #{tpu_custom_call.1} parent=5 // pred_region
        // Predicated region
        $region49: #{tpu_custom_call.1} parent=47 // pred_check
          %p330 = pneg %p43
        $region50: #{tpu_custom_call.1} parent=47 // pred_check_branch
          %332 = sbr.rel (%p330) target = $region52
        $region51: #{tpu_custom_call.1} parent=47 // pred_region
          %s333 = sand.u32 %s33, 1
          %s334 = scalar_lea.sflag [#allocation4], %s333
          %s335 = sand.u32 %s33, 1
          %s336 = smul.addr %s335, 256
          %s337 = scalar_lea.vmem [#allocation3], %s336
          %339 = vsyncadd %s334, 0
          %s340 = smul.addr %s23, 32
          %s341 = smul.addr %s340, 8
          %s342 = scalar_lea.hbm %s0, %s341
          %s343 = sshll.u32 %s342, 4
          %s344 = int_to_ptr.hbm [resolvable:$true] %s343
          %s345 = sshll.u32 %s337, 4
          %s346 = int_to_ptr.vmem [resolvable:$true] %s345
          %351 = dma.hbm_to_vmem [thread:$0]  %s344, 4096, %s346, %s334, 128, 128, 8
        $region52: #{tpu_custom_call.1} parent=47 // pred_fallthru
          _
      $region48: #{tpu_custom_call.1} parent=5 // pred_fallthru
        _
      %p352 = scmp.le.s32.totalorder 1, %s23
      %p353 = scmp.lt.s32.totalorder %s23, 3
      %p354 = pnand %p352, %p353
      %p355 = pneg %p354
      // Predicated region
      $region53: #{tpu_custom_call.1} parent=5 // pred_check
        _
      $region54: #{tpu_custom_call.1} parent=5 // pred_check_branch
        %357 = sbr.rel (%p354) target = $region56
      $region55: #{tpu_custom_call.1} parent=5 // pred_region
        %s358 = ssub.s32 %s23, 1
        %s359 = sand.u32 %s36, 1
        %s360 = scalar_lea.sflag [#allocation4], %s359
        %s361 = sand.u32 %s36, 1
        %s362 = smul.addr %s361, 256
        %s363 = scalar_lea.vmem [#allocation3], %s362
        // Predicated region
        $region57: #{tpu_custom_call.1} parent=55 // pred_check
          %p364 = pneg %p49
        $region58: #{tpu_custom_call.1} parent=55 // pred_check_branch
          %366 = sbr.rel (%p364) target = $region60
        $region59: #{tpu_custom_call.1} parent=55 // pred_region
          %368 = dma.done %s360, 4096
        $region60: #{tpu_custom_call.1} parent=55 // pred_fallthru
          _
        // Predicated region
        $region61: #{tpu_custom_call.1} parent=55 // pred_check
          %p369 = pneg %p70
        $region62: #{tpu_custom_call.1} parent=55 // pred_check_branch
          %371 = sbr.rel (%p369) target = $region64
        $region63: #{tpu_custom_call.1} parent=55 // pred_region
          %373 = dma.done [#allocation7], 2048
        $region64: #{tpu_custom_call.1} parent=55 // pred_fallthru
          _
        // Predicated region
        $region65: #{tpu_custom_call.1} parent=55 // pred_check
          %p374 = pneg %p112
        $region66: #{tpu_custom_call.1} parent=55 // pred_check_branch
          %376 = sbr.rel (%p374) target = $region68
        $region67: #{tpu_custom_call.1} parent=55 // pred_region
          %378 = dma.done [#allocation7], 18432
        $region68: #{tpu_custom_call.1} parent=55 // pred_fallthru
          _
        // Predicated region
        $region69: #{tpu_custom_call.1} parent=55 // pred_check
          %p379 = pneg %p154
        $region70: #{tpu_custom_call.1} parent=55 // pred_check_branch
          %381 = sbr.rel (%p379) target = $region72
        $region71: #{tpu_custom_call.1} parent=55 // pred_region
          %383 = dma.done [#allocation10], 2048
        $region72: #{tpu_custom_call.1} parent=55 // pred_fallthru
          _
        // Predicated region
        $region73: #{tpu_custom_call.1} parent=55 // pred_check
          %p384 = pneg %p196
        $region74: #{tpu_custom_call.1} parent=55 // pred_check_branch
          %386 = sbr.rel (%p384) target = $region76
        $region75: #{tpu_custom_call.1} parent=55 // pred_region
          %388 = dma.done [#allocation10], 2048
        $region76: #{tpu_custom_call.1} parent=55 // pred_fallthru
          _
        %s389 = sand.u32 %s36, 1
        %s390 = scalar_lea.sflag [#allocation4], %s389
        %s391 = sand.u32 %s36, 1
        %s392 = smul.addr %s391, 256
        %s393 = scalar_lea.vmem [#allocation3], %s392
        %p394 = pneg %p49
        %p395 = pneg %p46
        %p396 = pneg %p70
        %p397 = pneg %p67
        %p398 = pneg %p91
        %p399 = pneg %p88
        %p400 = pneg %p112
        %p401 = pneg %p109
        %p402 = pneg %p133
        %p403 = pneg %p130
        %p404 = pneg %p154
        %p405 = pneg %p151
        %p406 = pneg %p175
        %p407 = pneg %p172
        %p408 = pneg %p196
        %p409 = pneg %p193
        %p410 = pneg %p217
        %p411 = pneg %p214
        %p412 = pneg %p243
        %p413 = pneg %p240
        %s414 = sand.u32 %s230, 1
        %s415 = scalar_lea.sflag [#allocation5], %s414
        %s416 = sand.u32 %s230, 1
        %s417 = smul.addr %s416, 256
        %s418 = scalar_lea.vmem [#allocation12], %s417
        %v419 = vld [vmem:[%s363] sm:$0xff]
        %v420 = vld [vmem:[%s363 + $0x8] sm:$0xff]
        %v421 = vld [vmem:[%s363 + $0x10] sm:$0xff]
        %v422 = vld [vmem:[%s363 + $0x18] sm:$0xff]
        %v423 = vld [vmem:[%s363 + $0x20] sm:$0xff]
        %v424 = vld [vmem:[%s363 + $0x28] sm:$0xff]
        %v425 = vld [vmem:[%s363 + $0x30] sm:$0xff]
        %v426 = vld [vmem:[%s363 + $0x38] sm:$0xff]
        %v427 = vld [vmem:[%s363 + $0x40] sm:$0xff]
        %v428 = vld [vmem:[%s363 + $0x48] sm:$0xff]
        %v429 = vld [vmem:[%s363 + $0x50] sm:$0xff]
        %v430 = vld [vmem:[%s363 + $0x58] sm:$0xff]
        %v431 = vld [vmem:[%s363 + $0x60] sm:$0xff]
        %v432 = vld [vmem:[%s363 + $0x68] sm:$0xff]
        %v433 = vld [vmem:[%s363 + $0x70] sm:$0xff]
        %v434 = vld [vmem:[%s363 + $0x78] sm:$0xff]
        %v435 = vld [vmem:[%s363 + $0x80] sm:$0xff]
        %v436 = vld [vmem:[%s363 + $0x88] sm:$0xff]
        %v437 = vld [vmem:[%s363 + $0x90] sm:$0xff]
        %v438 = vld [vmem:[%s363 + $0x98] sm:$0xff]
        %v439 = vld [vmem:[%s363 + $0xa0] sm:$0xff]
        %v440 = vld [vmem:[%s363 + $0xa8] sm:$0xff]
        %v441 = vld [vmem:[%s363 + $0xb0] sm:$0xff]
        %v442 = vld [vmem:[%s363 + $0xb8] sm:$0xff]
        %v443 = vld [vmem:[%s363 + $0xc0] sm:$0xff]
        %v444 = vld [vmem:[%s363 + $0xc8] sm:$0xff]
        %v445 = vld [vmem:[%s363 + $0xd0] sm:$0xff]
        %v446 = vld [vmem:[%s363 + $0xd8] sm:$0xff]
        %v447 = vld [vmem:[%s363 + $0xe0] sm:$0xff]
        %v448 = vld [vmem:[%s363 + $0xe8] sm:$0xff]
        %v449 = vld [vmem:[%s363 + $0xf0] sm:$0xff]
        %v450 = vld [vmem:[%s363 + $0xf8] sm:$0xff]
        %v451 = vld [vmem:[#allocation6] sm:$0xff]
        %v452 = vld [vmem:[#allocation6 + $0x8] sm:$0xff]
        %v453 = vld [vmem:[#allocation6 + $0x10] sm:$0xff]
        %v454 = vld [vmem:[#allocation6 + $0x18] sm:$0xff]
        %v455 = vld [vmem:[#allocation6 + $0x20] sm:$0xff]
        %v456 = vld [vmem:[#allocation6 + $0x28] sm:$0xff]
        %v457 = vld [vmem:[#allocation6 + $0x30] sm:$0xff]
        %v458 = vld [vmem:[#allocation6 + $0x38] sm:$0xff]
        %v459 = vld [vmem:[#allocation6 + $0x40] sm:$0xff]
        %v460 = vld [vmem:[#allocation6 + $0x48] sm:$0xff]
        %v461 = vld [vmem:[#allocation6 + $0x50] sm:$0xff]
        %v462 = vld [vmem:[#allocation6 + $0x58] sm:$0xff]
        %v463 = vld [vmem:[#allocation6 + $0x60] sm:$0xff]
        %v464 = vld [vmem:[#allocation6 + $0x68] sm:$0xff]
        %v465 = vld [vmem:[#allocation6 + $0x70] sm:$0xff]
        %v466 = vld [vmem:[#allocation6 + $0x78] sm:$0xff]
        %v467 = vld [vmem:[%s2] sm:$0x1]
        %v469 = vperm.slane %v467, 0
        %471 = vmatpush.msra.mxu0 %v466
        %472 = vmatpush.msra.mxu0 %v465
        %473 = vmatpush.msra.mxu0 %v464
        %474 = vmatpush.msra.mxu0 %v463
        %475 = vmatpush.msra.mxu0 %v462
        %476 = vmatpush.msra.mxu0 %v461
        %477 = vmatpush.msra.mxu0 %v460
        %478 = vmatpush.msra.mxu0 %v459
        %479 = vmatpush.msra.mxu0 %v458
        %480 = vmatpush.msra.mxu0 %v457
        %481 = vmatpush.msra.mxu0 %v456
        %482 = vmatpush.msra.mxu0 %v455
        %483 = vmatpush.msra.mxu0 %v454
        %484 = vmatpush.msra.mxu0 %v453
        %485 = vmatpush.msra.mxu0 %v452
        %486 = vmatpush.msra.mxu0 %v451
        %487 = vmatmul.f32.gmra.mxu0 %v419
        %v488 = vpop.f32.mrf.mxu0
        %v489 = vadd.f32 %v469, %v488
        %490 = vmatmul.f32.gmra.mxu0 %v420
        %v491 = vpop.f32.mrf.mxu0
        %v492 = vadd.f32 %v469, %v491
        %493 = vmatmul.f32.gmra.mxu0 %v421
        %v494 = vpop.f32.mrf.mxu0
        %v495 = vadd.f32 %v469, %v494
        %496 = vmatmul.f32.gmra.mxu0 %v422
        %v497 = vpop.f32.mrf.mxu0
        %v498 = vadd.f32 %v469, %v497
        %499 = vmatmul.f32.gmra.mxu0 %v423
        %v500 = vpop.f32.mrf.mxu0
        %v501 = vadd.f32 %v469, %v500
        %502 = vmatmul.f32.gmra.mxu0 %v424
        %v503 = vpop.f32.mrf.mxu0
        %v504 = vadd.f32 %v469, %v503
        %505 = vmatmul.f32.gmra.mxu0 %v425
        %v506 = vpop.f32.mrf.mxu0
        %v507 = vadd.f32 %v469, %v506
        %508 = vmatmul.f32.gmra.mxu0 %v426
        %v509 = vpop.f32.mrf.mxu0
        %v510 = vadd.f32 %v469, %v509
        %511 = vmatmul.f32.gmra.mxu0 %v427
        %v512 = vpop.f32.mrf.mxu0
        %v513 = vadd.f32 %v469, %v512
        %514 = vmatmul.f32.gmra.mxu0 %v428
        %v515 = vpop.f32.mrf.mxu0
        %v516 = vadd.f32 %v469, %v515
        %517 = vmatmul.f32.gmra.mxu0 %v429
        %v518 = vpop.f32.mrf.mxu0
        %v519 = vadd.f32 %v469, %v518
        %520 = vmatmul.f32.gmra.mxu0 %v430
        %v521 = vpop.f32.mrf.mxu0
        %v522 = vadd.f32 %v469, %v521
        %523 = vmatmul.f32.gmra.mxu0 %v431
        %v524 = vpop.f32.mrf.mxu0
        %v525 = vadd.f32 %v469, %v524
        %526 = vmatmul.f32.gmra.mxu0 %v432
        %v527 = vpop.f32.mrf.mxu0
        %v528 = vadd.f32 %v469, %v527
        %529 = vmatmul.f32.gmra.mxu0 %v433
        %v530 = vpop.f32.mrf.mxu0
        %v531 = vadd.f32 %v469, %v530
        %532 = vmatmul.f32.gmra.mxu0 %v434
        %v533 = vpop.f32.mrf.mxu0
        %v534 = vadd.f32 %v469, %v533
        %535 = vmatmul.f32.gmra.mxu0 %v435
        %v536 = vpop.f32.mrf.mxu0
        %v537 = vadd.f32 %v469, %v536
        %538 = vmatmul.f32.gmra.mxu0 %v436
        %v539 = vpop.f32.mrf.mxu0
        %v540 = vadd.f32 %v469, %v539
        %541 = vmatmul.f32.gmra.mxu0 %v437
        %v542 = vpop.f32.mrf.mxu0
        %v543 = vadd.f32 %v469, %v542
        %544 = vmatmul.f32.gmra.mxu0 %v438
        %v545 = vpop.f32.mrf.mxu0
        %v546 = vadd.f32 %v469, %v545
        %547 = vmatmul.f32.gmra.mxu0 %v439
        %v548 = vpop.f32.mrf.mxu0
        %v549 = vadd.f32 %v469, %v548
        %550 = vmatmul.f32.gmra.mxu0 %v440
        %v551 = vpop.f32.mrf.mxu0
        %v552 = vadd.f32 %v469, %v551
        %553 = vmatmul.f32.gmra.mxu0 %v441
        %v554 = vpop.f32.mrf.mxu0
        %v555 = vadd.f32 %v469, %v554
        %556 = vmatmul.f32.gmra.mxu0 %v442
        %v557 = vpop.f32.mrf.mxu0
        %v558 = vadd.f32 %v469, %v557
        %559 = vmatmul.f32.gmra.mxu0 %v443
        %v560 = vpop.f32.mrf.mxu0
        %v561 = vadd.f32 %v469, %v560
        %562 = vmatmul.f32.gmra.mxu0 %v444
        %v563 = vpop.f32.mrf.mxu0
        %v564 = vadd.f32 %v469, %v563
        %565 = vmatmul.f32.gmra.mxu0 %v445
        %v566 = vpop.f32.mrf.mxu0
        %v567 = vadd.f32 %v469, %v566
        %568 = vmatmul.f32.gmra.mxu0 %v446
        %v569 = vpop.f32.mrf.mxu0
        %v570 = vadd.f32 %v469, %v569
        %571 = vmatmul.f32.gmra.mxu0 %v447
        %v572 = vpop.f32.mrf.mxu0
        %v573 = vadd.f32 %v469, %v572
        %574 = vmatmul.f32.gmra.mxu0 %v448
        %v575 = vpop.f32.mrf.mxu0
        %v576 = vadd.f32 %v469, %v575
        %577 = vmatmul.f32.gmra.mxu0 %v449
        %v578 = vpop.f32.mrf.mxu0
        %v579 = vadd.f32 %v469, %v578
        %580 = vmatmul.f32.gmra.mxu0 %v450
        %v581 = vpop.f32.mrf.mxu0
        %v582 = vadd.f32 %v469, %v581
        %583 = vdwg.mxu0
        %v584 = vmax.f32 %v489, 0.0
        %v585 = vmax.f32 %v492, 0.0
        %v586 = vmax.f32 %v495, 0.0
        %v587 = vmax.f32 %v498, 0.0
        %v588 = vmax.f32 %v501, 0.0
        %v589 = vmax.f32 %v504, 0.0
        %v590 = vmax.f32 %v507, 0.0
        %v591 = vmax.f32 %v510, 0.0
        %v592 = vmax.f32 %v513, 0.0
        %v593 = vmax.f32 %v516, 0.0
        %v594 = vmax.f32 %v519, 0.0
        %v595 = vmax.f32 %v522, 0.0
        %v596 = vmax.f32 %v525, 0.0
        %v597 = vmax.f32 %v528, 0.0
        %v598 = vmax.f32 %v531, 0.0
        %v599 = vmax.f32 %v534, 0.0
        %v600 = vmax.f32 %v537, 0.0
        %v601 = vmax.f32 %v540, 0.0
        %v602 = vmax.f32 %v543, 0.0
        %v603 = vmax.f32 %v546, 0.0
        %v604 = vmax.f32 %v549, 0.0
        %v605 = vmax.f32 %v552, 0.0
        %v606 = vmax.f32 %v555, 0.0
        %v607 = vmax.f32 %v558, 0.0
        %v608 = vmax.f32 %v561, 0.0
        %v609 = vmax.f32 %v564, 0.0
        %v610 = vmax.f32 %v567, 0.0
        %v611 = vmax.f32 %v570, 0.0
        %v612 = vmax.f32 %v573, 0.0
        %v613 = vmax.f32 %v576, 0.0
        %v614 = vmax.f32 %v579, 0.0
        %v615 = vmax.f32 %v582, 0.0
        %616 = vst [vmem:[#allocation2] sm:$0xff] 0.0
        %617 = vst [vmem:[#allocation2 + $0x8] sm:$0xff] 0.0
        %618 = vst [vmem:[#allocation2 + $0x10] sm:$0x3] 0.0
        %s619 = scalar_lea.vmem [#allocation2], 408
        %620 = vst [vmem:[%s619] sm:$0xff] 0.0
        %621 = vst [vmem:[%s619 + $0x8] sm:$0xff] 0.0
        %622 = vst [vmem:[%s619 + $0x10] sm:$0x3] 0.0
        %s623 = scalar_lea.vmem [#allocation2], 24
        %624 = vst [vmem:[%s623] sm:$0x1] 0.0
        %625 = vst [vmem:[%s623 + $0x18] sm:$0x1] 0.0
        %626 = vst [vmem:[%s623 + $0x30] sm:$0x1] 0.0
        %627 = vst [vmem:[%s623 + $0x48] sm:$0x1] 0.0
        %628 = vst [vmem:[%s623 + $0x60] sm:$0x1] 0.0
        %629 = vst [vmem:[%s623 + $0x78] sm:$0x1] 0.0
        %630 = vst [vmem:[%s623 + $0x90] sm:$0x1] 0.0
        %631 = vst [vmem:[%s623 + $0xa8] sm:$0x1] 0.0
        %632 = vst [vmem:[%s623 + $0xc0] sm:$0x1] 0.0
        %633 = vst [vmem:[%s623 + $0xd8] sm:$0x1] 0.0
        %634 = vst [vmem:[%s623 + $0xf0] sm:$0x1] 0.0
        %635 = vst [vmem:[%s623 + $0x108] sm:$0x1] 0.0
        %636 = vst [vmem:[%s623 + $0x120] sm:$0x1] 0.0
        %637 = vst [vmem:[%s623 + $0x138] sm:$0x1] 0.0
        %638 = vst [vmem:[%s623 + $0x150] sm:$0x1] 0.0
        %639 = vst [vmem:[%s623 + $0x168] sm:$0x1] 0.0
        %640 = vst [vmem:[%s623 + $0x11] sm:$0x1] 0.0
        %641 = vst [vmem:[%s623 + $0x29] sm:$0x1] 0.0
        %642 = vst [vmem:[%s623 + $0x41] sm:$0x1] 0.0
        %643 = vst [vmem:[%s623 + $0x59] sm:$0x1] 0.0
        %644 = vst [vmem:[%s623 + $0x71] sm:$0x1] 0.0
        %645 = vst [vmem:[%s623 + $0x89] sm:$0x1] 0.0
        %646 = vst [vmem:[%s623 + $0xa1] sm:$0x1] 0.0
        %647 = vst [vmem:[%s623 + $0xb9] sm:$0x1] 0.0
        %648 = vst [vmem:[%s623 + $0xd1] sm:$0x1] 0.0
        %649 = vst [vmem:[%s623 + $0xe9] sm:$0x1] 0.0
        %650 = vst [vmem:[%s623 + $0x101] sm:$0x1] 0.0
        %651 = vst [vmem:[%s623 + $0x119] sm:$0x1] 0.0
        %652 = vst [vmem:[%s623 + $0x131] sm:$0x1] 0.0
        %653 = vst [vmem:[%s623 + $0x149] sm:$0x1] 0.0
        %654 = vst [vmem:[%s623 + $0x161] sm:$0x1] 0.0
        %655 = vst [vmem:[%s623 + $0x179] sm:$0x1] 0.0
        %656 = vst [vmem:[%s623 + $0x1] sm:$0xff] %v584
        %657 = vst [vmem:[%s623 + $0x9] sm:$0xff] %v585
        %658 = vst [vmem:[%s623 + $0x19] sm:$0xff] %v586
        %659 = vst [vmem:[%s623 + $0x21] sm:$0xff] %v587
        %660 = vst [vmem:[%s623 + $0x31] sm:$0xff] %v588
        %661 = vst [vmem:[%s623 + $0x39] sm:$0xff] %v589
        %662 = vst [vmem:[%s623 + $0x49] sm:$0xff] %v590
        %663 = vst [vmem:[%s623 + $0x51] sm:$0xff] %v591
        %664 = vst [vmem:[%s623 + $0x61] sm:$0xff] %v592
        %665 = vst [vmem:[%s623 + $0x69] sm:$0xff] %v593
        %666 = vst [vmem:[%s623 + $0x79] sm:$0xff] %v594
        %667 = vst [vmem:[%s623 + $0x81] sm:$0xff] %v595
        %668 = vst [vmem:[%s623 + $0x91] sm:$0xff] %v596
        %669 = vst [vmem:[%s623 + $0x99] sm:$0xff] %v597
        %670 = vst [vmem:[%s623 + $0xa9] sm:$0xff] %v598
        %671 = vst [vmem:[%s623 + $0xb1] sm:$0xff] %v599
        %672 = vst [vmem:[%s623 + $0xc1] sm:$0xff] %v600
        %673 = vst [vmem:[%s623 + $0xc9] sm:$0xff] %v601
        %674 = vst [vmem:[%s623 + $0xd9] sm:$0xff] %v602
        %675 = vst [vmem:[%s623 + $0xe1] sm:$0xff] %v603
        %676 = vst [vmem:[%s623 + $0xf1] sm:$0xff] %v604
        %677 = vst [vmem:[%s623 + $0xf9] sm:$0xff] %v605
        %678 = vst [vmem:[%s623 + $0x109] sm:$0xff] %v606
        %679 = vst [vmem:[%s623 + $0x111] sm:$0xff] %v607
        %680 = vst [vmem:[%s623 + $0x121] sm:$0xff] %v608
        %681 = vst [vmem:[%s623 + $0x129] sm:$0xff] %v609
        %682 = vst [vmem:[%s623 + $0x139] sm:$0xff] %v610
        %683 = vst [vmem:[%s623 + $0x141] sm:$0xff] %v611
        %684 = vst [vmem:[%s623 + $0x151] sm:$0xff] %v612
        %685 = vst [vmem:[%s623 + $0x159] sm:$0xff] %v613
        %686 = vst [vmem:[%s623 + $0x169] sm:$0xff] %v614
        %687 = vst [vmem:[%s623 + $0x171] sm:$0xff] %v615
        %v688 = vld [vmem:[%s4] sm:$0x1]
        %v690 = vperm.slane %v688, 0
        %v692 = vadd.f32 %v690, 0.0
        %v693 = vld [vmem:[#allocation2] sm:$0xff]
        %v694 = vld [vmem:[#allocation2 + $0x8] sm:$0xff]
        %v695 = vld [vmem:[#allocation2 + $0x18] sm:$0xff]
        %v696 = vld [vmem:[#allocation2 + $0x20] sm:$0xff]
        %v697 = vld [vmem:[#allocation2 + $0x30] sm:$0xff]
        %v698 = vld [vmem:[#allocation2 + $0x38] sm:$0xff]
        %v699 = vld [vmem:[#allocation2 + $0x48] sm:$0xff]
        %v700 = vld [vmem:[#allocation2 + $0x50] sm:$0xff]
        %v701 = vld [vmem:[#allocation2 + $0x60] sm:$0xff]
        %v702 = vld [vmem:[#allocation2 + $0x68] sm:$0xff]
        %v703 = vld [vmem:[#allocation2 + $0x78] sm:$0xff]
        %v704 = vld [vmem:[#allocation2 + $0x80] sm:$0xff]
        %v705 = vld [vmem:[#allocation2 + $0x90] sm:$0xff]
        %v706 = vld [vmem:[#allocation2 + $0x98] sm:$0xff]
        %v707 = vld [vmem:[#allocation2 + $0xa8] sm:$0xff]
        %v708 = vld [vmem:[#allocation2 + $0xb0] sm:$0xff]
        %v709 = vld [vmem:[#allocation2 + $0xc0] sm:$0xff]
        %v710 = vld [vmem:[#allocation2 + $0xc8] sm:$0xff]
        %v711 = vld [vmem:[#allocation2 + $0xd8] sm:$0xff]
        %v712 = vld [vmem:[#allocation2 + $0xe0] sm:$0xff]
        %v713 = vld [vmem:[#allocation2 + $0xf0] sm:$0xff]
        %v714 = vld [vmem:[#allocation2 + $0xf8] sm:$0xff]
        %v715 = vld [vmem:[#allocation2 + $0x108] sm:$0xff]
        %v716 = vld [vmem:[#allocation2 + $0x110] sm:$0xff]
        %v717 = vld [vmem:[#allocation2 + $0x120] sm:$0xff]
        %v718 = vld [vmem:[#allocation2 + $0x128] sm:$0xff]
        %v719 = vld [vmem:[#allocation2 + $0x138] sm:$0xff]
        %v720 = vld [vmem:[#allocation2 + $0x140] sm:$0xff]
        %v721 = vld [vmem:[#allocation2 + $0x150] sm:$0xff]
        %v722 = vld [vmem:[#allocation2 + $0x158] sm:$0xff]
        %v723 = vld [vmem:[#allocation2 + $0x168] sm:$0xff]
        %v724 = vld [vmem:[#allocation2 + $0x170] sm:$0xff]
        %v725 = vld [vmem:[#allocation8] sm:$0xff]
        %v726 = vld [vmem:[#allocation8 + $0x8] sm:$0xff]
        %v727 = vld [vmem:[#allocation8 + $0x10] sm:$0xff]
        %v728 = vld [vmem:[#allocation8 + $0x18] sm:$0xff]
        %v729 = vld [vmem:[#allocation8 + $0x20] sm:$0xff]
        %v730 = vld [vmem:[#allocation8 + $0x28] sm:$0xff]
        %v731 = vld [vmem:[#allocation8 + $0x30] sm:$0xff]
        %v732 = vld [vmem:[#allocation8 + $0x38] sm:$0xff]
        %v733 = vld [vmem:[#allocation8 + $0x40] sm:$0xff]
        %v734 = vld [vmem:[#allocation8 + $0x48] sm:$0xff]
        %v735 = vld [vmem:[#allocation8 + $0x50] sm:$0xff]
        %v736 = vld [vmem:[#allocation8 + $0x58] sm:$0xff]
        %v737 = vld [vmem:[#allocation8 + $0x60] sm:$0xff]
        %v738 = vld [vmem:[#allocation8 + $0x68] sm:$0xff]
        %v739 = vld [vmem:[#allocation8 + $0x70] sm:$0xff]
        %v740 = vld [vmem:[#allocation8 + $0x78] sm:$0xff]
        %741 = vmatpush.msra.mxu0 %v740
        %742 = vmatpush.msra.mxu0 %v739
        %743 = vmatpush.msra.mxu0 %v738
        %744 = vmatpush.msra.mxu0 %v737
        %745 = vmatpush.msra.mxu0 %v736
        %746 = vmatpush.msra.mxu0 %v735
        %747 = vmatpush.msra.mxu0 %v734
        %748 = vmatpush.msra.mxu0 %v733
        %749 = vmatpush.msra.mxu0 %v732
        %750 = vmatpush.msra.mxu0 %v731
        %751 = vmatpush.msra.mxu0 %v730
        %752 = vmatpush.msra.mxu0 %v729
        %753 = vmatpush.msra.mxu0 %v728
        %754 = vmatpush.msra.mxu0 %v727
        %755 = vmatpush.msra.mxu0 %v726
        %756 = vmatpush.msra.mxu0 %v725
        %757 = vmatmul.f32.gmra.mxu0 %v693
        %v758 = vpop.f32.mrf.mxu0
        %v759 = vadd.f32 0.0, %v758
        %760 = vmatmul.f32.gmra.mxu0 %v694
        %v761 = vpop.f32.mrf.mxu0
        %v762 = vadd.f32 0.0, %v761
        %763 = vmatmul.f32.gmra.mxu0 %v695
        %v764 = vpop.f32.mrf.mxu0
        %v765 = vadd.f32 0.0, %v764
        %766 = vmatmul.f32.gmra.mxu0 %v696
        %v767 = vpop.f32.mrf.mxu0
        %v768 = vadd.f32 0.0, %v767
        %769 = vmatmul.f32.gmra.mxu0 %v697
        %v770 = vpop.f32.mrf.mxu0
        %v771 = vadd.f32 0.0, %v770
        %772 = vmatmul.f32.gmra.mxu0 %v698
        %v773 = vpop.f32.mrf.mxu0
        %v774 = vadd.f32 0.0, %v773
        %775 = vmatmul.f32.gmra.mxu0 %v699
        %v776 = vpop.f32.mrf.mxu0
        %v777 = vadd.f32 0.0, %v776
        %778 = vmatmul.f32.gmra.mxu0 %v700
        %v779 = vpop.f32.mrf.mxu0
        %v780 = vadd.f32 0.0, %v779
        %781 = vmatmul.f32.gmra.mxu0 %v701
        %v782 = vpop.f32.mrf.mxu0
        %v783 = vadd.f32 0.0, %v782
        %784 = vmatmul.f32.gmra.mxu0 %v702
        %v785 = vpop.f32.mrf.mxu0
        %v786 = vadd.f32 0.0, %v785
        %787 = vmatmul.f32.gmra.mxu0 %v703
        %v788 = vpop.f32.mrf.mxu0
        %v789 = vadd.f32 0.0, %v788
        %790 = vmatmul.f32.gmra.mxu0 %v704
        %v791 = vpop.f32.mrf.mxu0
        %v792 = vadd.f32 0.0, %v791
        %793 = vmatmul.f32.gmra.mxu0 %v705
        %v794 = vpop.f32.mrf.mxu0
        %v795 = vadd.f32 0.0, %v794
        %796 = vmatmul.f32.gmra.mxu0 %v706
        %v797 = vpop.f32.mrf.mxu0
        %v798 = vadd.f32 0.0, %v797
        %799 = vmatmul.f32.gmra.mxu0 %v707
        %v800 = vpop.f32.mrf.mxu0
        %v801 = vadd.f32 0.0, %v800
        %802 = vmatmul.f32.gmra.mxu0 %v708
        %v803 = vpop.f32.mrf.mxu0
        %v804 = vadd.f32 0.0, %v803
        %805 = vmatmul.f32.gmra.mxu0 %v709
        %v806 = vpop.f32.mrf.mxu0
        %v807 = vadd.f32 0.0, %v806
        %808 = vmatmul.f32.gmra.mxu0 %v710
        %v809 = vpop.f32.mrf.mxu0
        %v810 = vadd.f32 0.0, %v809
        %811 = vmatmul.f32.gmra.mxu0 %v711
        %v812 = vpop.f32.mrf.mxu0
        %v813 = vadd.f32 0.0, %v812
        %814 = vmatmul.f32.gmra.mxu0 %v712
        %v815 = vpop.f32.mrf.mxu0
        %v816 = vadd.f32 0.0, %v815
        %817 = vmatmul.f32.gmra.mxu0 %v713
        %v818 = vpop.f32.mrf.mxu0
        %v819 = vadd.f32 0.0, %v818
        %820 = vmatmul.f32.gmra.mxu0 %v714
        %v821 = vpop.f32.mrf.mxu0
        %v822 = vadd.f32 0.0, %v821
        %823 = vmatmul.f32.gmra.mxu0 %v715
        %v824 = vpop.f32.mrf.mxu0
        %v825 = vadd.f32 0.0, %v824
        %826 = vmatmul.f32.gmra.mxu0 %v716
        %v827 = vpop.f32.mrf.mxu0
        %v828 = vadd.f32 0.0, %v827
        %829 = vmatmul.f32.gmra.mxu0 %v717
        %v830 = vpop.f32.mrf.mxu0
        %v831 = vadd.f32 0.0, %v830
        %832 = vmatmul.f32.gmra.mxu0 %v718
        %v833 = vpop.f32.mrf.mxu0
        %v834 = vadd.f32 0.0, %v833
        %835 = vmatmul.f32.gmra.mxu0 %v719
        %v836 = vpop.f32.mrf.mxu0
        %v837 = vadd.f32 0.0, %v836
        %838 = vmatmul.f32.gmra.mxu0 %v720
        %v839 = vpop.f32.mrf.mxu0
        %v840 = vadd.f32 0.0, %v839
        %841 = vmatmul.f32.gmra.mxu0 %v721
        %v842 = vpop.f32.mrf.mxu0
        %v843 = vadd.f32 0.0, %v842
        %844 = vmatmul.f32.gmra.mxu0 %v722
        %v845 = vpop.f32.mrf.mxu0
        %v846 = vadd.f32 0.0, %v845
        %847 = vmatmul.f32.gmra.mxu0 %v723
        %v848 = vpop.f32.mrf.mxu0
        %v849 = vadd.f32 0.0, %v848
        %850 = vmatmul.f32.gmra.mxu0 %v724
        %v851 = vpop.f32.mrf.mxu0
        %v852 = vadd.f32 0.0, %v851
        %853 = vdwg.mxu0
        %v854 = vadd.f32 %v692, %v759
        %v855 = vadd.f32 %v692, %v762
        %v856 = vadd.f32 %v692, %v765
        %v857 = vadd.f32 %v692, %v768
        %v858 = vadd.f32 %v692, %v771
        %v859 = vadd.f32 %v692, %v774
        %v860 = vadd.f32 %v692, %v777
        %v861 = vadd.f32 %v692, %v780
        %v862 = vadd.f32 %v692, %v783
        %v863 = vadd.f32 %v692, %v786
        %v864 = vadd.f32 %v692, %v789
        %v865 = vadd.f32 %v692, %v792
        %v866 = vadd.f32 %v692, %v795
        %v867 = vadd.f32 %v692, %v798
        %v868 = vadd.f32 %v692, %v801
        %v869 = vadd.f32 %v692, %v804
        %v870 = vadd.f32 %v692, %v807
        %v871 = vadd.f32 %v692, %v810
        %v872 = vadd.f32 %v692, %v813
        %v873 = vadd.f32 %v692, %v816
        %v874 = vadd.f32 %v692, %v819
        %v875 = vadd.f32 %v692, %v822
        %v876 = vadd.f32 %v692, %v825
        %v877 = vadd.f32 %v692, %v828
        %v878 = vadd.f32 %v692, %v831
        %v879 = vadd.f32 %v692, %v834
        %v880 = vadd.f32 %v692, %v837
        %v881 = vadd.f32 %v692, %v840
        %v882 = vadd.f32 %v692, %v843
        %v883 = vadd.f32 %v692, %v846
        %v884 = vadd.f32 %v692, %v849
        %v885 = vadd.f32 %v692, %v852
        %v886 = vld [vmem:[#allocation2 + $0x1] sm:$0xff]
        %v887 = vld [vmem:[#allocation2 + $0x9] sm:$0xff]
        %v888 = vld [vmem:[#allocation2 + $0x19] sm:$0xff]
        %v889 = vld [vmem:[#allocation2 + $0x21] sm:$0xff]
        %v890 = vld [vmem:[#allocation2 + $0x31] sm:$0xff]
        %v891 = vld [vmem:[#allocation2 + $0x39] sm:$0xff]
        %v892 = vld [vmem:[#allocation2 + $0x49] sm:$0xff]
        %v893 = vld [vmem:[#allocation2 + $0x51] sm:$0xff]
        %v894 = vld [vmem:[#allocation2 + $0x61] sm:$0xff]
        %v895 = vld [vmem:[#allocation2 + $0x69] sm:$0xff]
        %v896 = vld [vmem:[#allocation2 + $0x79] sm:$0xff]
        %v897 = vld [vmem:[#allocation2 + $0x81] sm:$0xff]
        %v898 = vld [vmem:[#allocation2 + $0x91] sm:$0xff]
        %v899 = vld [vmem:[#allocation2 + $0x99] sm:$0xff]
        %v900 = vld [vmem:[#allocation2 + $0xa9] sm:$0xff]
        %v901 = vld [vmem:[#allocation2 + $0xb1] sm:$0xff]
        %v902 = vld [vmem:[#allocation2 + $0xc1] sm:$0xff]
        %v903 = vld [vmem:[#allocation2 + $0xc9] sm:$0xff]
        %v904 = vld [vmem:[#allocation2 + $0xd9] sm:$0xff]
        %v905 = vld [vmem:[#allocation2 + $0xe1] sm:$0xff]
        %v906 = vld [vmem:[#allocation2 + $0xf1] sm:$0xff]
        %v907 = vld [vmem:[#allocation2 + $0xf9] sm:$0xff]
        %v908 = vld [vmem:[#allocation2 + $0x109] sm:$0xff]
        %v909 = vld [vmem:[#allocation2 + $0x111] sm:$0xff]
        %v910 = vld [vmem:[#allocation2 + $0x121] sm:$0xff]
        %v911 = vld [vmem:[#allocation2 + $0x129] sm:$0xff]
        %v912 = vld [vmem:[#allocation2 + $0x139] sm:$0xff]
        %v913 = vld [vmem:[#allocation2 + $0x141] sm:$0xff]
        %v914 = vld [vmem:[#allocation2 + $0x151] sm:$0xff]
        %v915 = vld [vmem:[#allocation2 + $0x159] sm:$0xff]
        %v916 = vld [vmem:[#allocation2 + $0x169] sm:$0xff]
        %v917 = vld [vmem:[#allocation2 + $0x171] sm:$0xff]
        %s918 = scalar_lea.vmem [#allocation8], 128
        %v919 = vld [vmem:[%s918] sm:$0xff]
        %v920 = vld [vmem:[%s918 + $0x8] sm:$0xff]
        %v921 = vld [vmem:[%s918 + $0x10] sm:$0xff]
        %v922 = vld [vmem:[%s918 + $0x18] sm:$0xff]
        %v923 = vld [vmem:[%s918 + $0x20] sm:$0xff]
        %v924 = vld [vmem:[%s918 + $0x28] sm:$0xff]
        %v925 = vld [vmem:[%s918 + $0x30] sm:$0xff]
        %v926 = vld [vmem:[%s918 + $0x38] sm:$0xff]
        %v927 = vld [vmem:[%s918 + $0x40] sm:$0xff]
        %v928 = vld [vmem:[%s918 + $0x48] sm:$0xff]
        %v929 = vld [vmem:[%s918 + $0x50] sm:$0xff]
        %v930 = vld [vmem:[%s918 + $0x58] sm:$0xff]
        %v931 = vld [vmem:[%s918 + $0x60] sm:$0xff]
        %v932 = vld [vmem:[%s918 + $0x68] sm:$0xff]
        %v933 = vld [vmem:[%s918 + $0x70] sm:$0xff]
        %v934 = vld [vmem:[%s918 + $0x78] sm:$0xff]
        %935 = vmatpush.msra.mxu0 %v934
        %936 = vmatpush.msra.mxu0 %v933
        %937 = vmatpush.msra.mxu0 %v932
        %938 = vmatpush.msra.mxu0 %v931
        %939 = vmatpush.msra.mxu0 %v930
        %940 = vmatpush.msra.mxu0 %v929
        %941 = vmatpush.msra.mxu0 %v928
        %942 = vmatpush.msra.mxu0 %v927
        %943 = vmatpush.msra.mxu0 %v926
        %944 = vmatpush.msra.mxu0 %v925
        %945 = vmatpush.msra.mxu0 %v924
        %946 = vmatpush.msra.mxu0 %v923
        %947 = vmatpush.msra.mxu0 %v922
        %948 = vmatpush.msra.mxu0 %v921
        %949 = vmatpush.msra.mxu0 %v920
        %950 = vmatpush.msra.mxu0 %v919
        %951 = vmatmul.f32.gmra.mxu0 %v886
        %v952 = vpop.f32.mrf.mxu0
        %v953 = vadd.f32 0.0, %v952
        %954 = vmatmul.f32.gmra.mxu0 %v887
        %v955 = vpop.f32.mrf.mxu0
        %v956 = vadd.f32 0.0, %v955
        %957 = vmatmul.f32.gmra.mxu0 %v888
        %v958 = vpop.f32.mrf.mxu0
        %v959 = vadd.f32 0.0, %v958
        %960 = vmatmul.f32.gmra.mxu0 %v889
        %v961 = vpop.f32.mrf.mxu0
        %v962 = vadd.f32 0.0, %v961
        %963 = vmatmul.f32.gmra.mxu0 %v890
        %v964 = vpop.f32.mrf.mxu0
        %v965 = vadd.f32 0.0, %v964
        %966 = vmatmul.f32.gmra.mxu0 %v891
        %v967 = vpop.f32.mrf.mxu0
        %v968 = vadd.f32 0.0, %v967
        %969 = vmatmul.f32.gmra.mxu0 %v892
        %v970 = vpop.f32.mrf.mxu0
        %v971 = vadd.f32 0.0, %v970
        %972 = vmatmul.f32.gmra.mxu0 %v893
        %v973 = vpop.f32.mrf.mxu0
        %v974 = vadd.f32 0.0, %v973
        %975 = vmatmul.f32.gmra.mxu0 %v894
        %v976 = vpop.f32.mrf.mxu0
        %v977 = vadd.f32 0.0, %v976
        %978 = vmatmul.f32.gmra.mxu0 %v895
        %v979 = vpop.f32.mrf.mxu0
        %v980 = vadd.f32 0.0, %v979
        %981 = vmatmul.f32.gmra.mxu0 %v896
        %v982 = vpop.f32.mrf.mxu0
        %v983 = vadd.f32 0.0, %v982
        %984 = vmatmul.f32.gmra.mxu0 %v897
        %v985 = vpop.f32.mrf.mxu0
        %v986 = vadd.f32 0.0, %v985
        %987 = vmatmul.f32.gmra.mxu0 %v898
        %v988 = vpop.f32.mrf.mxu0
        %v989 = vadd.f32 0.0, %v988
        %990 = vmatmul.f32.gmra.mxu0 %v899
        %v991 = vpop.f32.mrf.mxu0
        %v992 = vadd.f32 0.0, %v991
        %993 = vmatmul.f32.gmra.mxu0 %v900
        %v994 = vpop.f32.mrf.mxu0
        %v995 = vadd.f32 0.0, %v994
        %996 = vmatmul.f32.gmra.mxu0 %v901
        %v997 = vpop.f32.mrf.mxu0
        %v998 = vadd.f32 0.0, %v997
        %999 = vmatmul.f32.gmra.mxu0 %v902
        %v1000 = vpop.f32.mrf.mxu0
        %v1001 = vadd.f32 0.0, %v1000
        %1002 = vmatmul.f32.gmra.mxu0 %v903
        %v1003 = vpop.f32.mrf.mxu0
        %v1004 = vadd.f32 0.0, %v1003
        %1005 = vmatmul.f32.gmra.mxu0 %v904
        %v1006 = vpop.f32.mrf.mxu0
        %v1007 = vadd.f32 0.0, %v1006
        %1008 = vmatmul.f32.gmra.mxu0 %v905
        %v1009 = vpop.f32.mrf.mxu0
        %v1010 = vadd.f32 0.0, %v1009
        %1011 = vmatmul.f32.gmra.mxu0 %v906
        %v1012 = vpop.f32.mrf.mxu0
        %v1013 = vadd.f32 0.0, %v1012
        %1014 = vmatmul.f32.gmra.mxu0 %v907
        %v1015 = vpop.f32.mrf.mxu0
        %v1016 = vadd.f32 0.0, %v1015
        %1017 = vmatmul.f32.gmra.mxu0 %v908
        %v1018 = vpop.f32.mrf.mxu0
        %v1019 = vadd.f32 0.0, %v1018
        %1020 = vmatmul.f32.gmra.mxu0 %v909
        %v1021 = vpop.f32.mrf.mxu0
        %v1022 = vadd.f32 0.0, %v1021
        %1023 = vmatmul.f32.gmra.mxu0 %v910
        %v1024 = vpop.f32.mrf.mxu0
        %v1025 = vadd.f32 0.0, %v1024
        %1026 = vmatmul.f32.gmra.mxu0 %v911
        %v1027 = vpop.f32.mrf.mxu0
        %v1028 = vadd.f32 0.0, %v1027
        %1029 = vmatmul.f32.gmra.mxu0 %v912
        %v1030 = vpop.f32.mrf.mxu0
        %v1031 = vadd.f32 0.0, %v1030
        %1032 = vmatmul.f32.gmra.mxu0 %v913
        %v1033 = vpop.f32.mrf.mxu0
        %v1034 = vadd.f32 0.0, %v1033
        %1035 = vmatmul.f32.gmra.mxu0 %v914
        %v1036 = vpop.f32.mrf.mxu0
        %v1037 = vadd.f32 0.0, %v1036
        %1038 = vmatmul.f32.gmra.mxu0 %v915
        %v1039 = vpop.f32.mrf.mxu0
        %v1040 = vadd.f32 0.0, %v1039
        %1041 = vmatmul.f32.gmra.mxu0 %v916
        %v1042 = vpop.f32.mrf.mxu0
        %v1043 = vadd.f32 0.0, %v1042
        %1044 = vmatmul.f32.gmra.mxu0 %v917
        %v1045 = vpop.f32.mrf.mxu0
        %v1046 = vadd.f32 0.0, %v1045
        %1047 = vdwg.mxu0
        %v1048 = vadd.f32 %v854, %v953
        %v1049 = vadd.f32 %v855, %v956
        %v1050 = vadd.f32 %v856, %v959
        %v1051 = vadd.f32 %v857, %v962
        %v1052 = vadd.f32 %v858, %v965
        %v1053 = vadd.f32 %v859, %v968
        %v1054 = vadd.f32 %v860, %v971
        %v1055 = vadd.f32 %v861, %v974
        %v1056 = vadd.f32 %v862, %v977
        %v1057 = vadd.f32 %v863, %v980
        %v1058 = vadd.f32 %v864, %v983
        %v1059 = vadd.f32 %v865, %v986
        %v1060 = vadd.f32 %v866, %v989
        %v1061 = vadd.f32 %v867, %v992
        %v1062 = vadd.f32 %v868, %v995
        %v1063 = vadd.f32 %v869, %v998
        %v1064 = vadd.f32 %v870, %v1001
        %v1065 = vadd.f32 %v871, %v1004
        %v1066 = vadd.f32 %v872, %v1007
        %v1067 = vadd.f32 %v873, %v1010
        %v1068 = vadd.f32 %v874, %v1013
        %v1069 = vadd.f32 %v875, %v1016
        %v1070 = vadd.f32 %v876, %v1019
        %v1071 = vadd.f32 %v877, %v1022
        %v1072 = vadd.f32 %v878, %v1025
        %v1073 = vadd.f32 %v879, %v1028
        %v1074 = vadd.f32 %v880, %v1031
        %v1075 = vadd.f32 %v881, %v1034
        %v1076 = vadd.f32 %v882, %v1037
        %v1077 = vadd.f32 %v883, %v1040
        %v1078 = vadd.f32 %v884, %v1043
        %v1079 = vadd.f32 %v885, %v1046
        %v1080 = vld [vmem:[#allocation2 + $0x2] sm:$0xff]
        %v1081 = vld [vmem:[#allocation2 + $0xa] sm:$0xff]
        %v1082 = vld [vmem:[#allocation2 + $0x1a] sm:$0xff]
        %v1083 = vld [vmem:[#allocation2 + $0x22] sm:$0xff]
        %v1084 = vld [vmem:[#allocation2 + $0x32] sm:$0xff]
        %v1085 = vld [vmem:[#allocation2 + $0x3a] sm:$0xff]
        %v1086 = vld [vmem:[#allocation2 + $0x4a] sm:$0xff]
        %v1087 = vld [vmem:[#allocation2 + $0x52] sm:$0xff]
        %v1088 = vld [vmem:[#allocation2 + $0x62] sm:$0xff]
        %v1089 = vld [vmem:[#allocation2 + $0x6a] sm:$0xff]
        %v1090 = vld [vmem:[#allocation2 + $0x7a] sm:$0xff]
        %v1091 = vld [vmem:[#allocation2 + $0x82] sm:$0xff]
        %v1092 = vld [vmem:[#allocation2 + $0x92] sm:$0xff]
        %v1093 = vld [vmem:[#allocation2 + $0x9a] sm:$0xff]
        %v1094 = vld [vmem:[#allocation2 + $0xaa] sm:$0xff]
        %v1095 = vld [vmem:[#allocation2 + $0xb2] sm:$0xff]
        %v1096 = vld [vmem:[#allocation2 + $0xc2] sm:$0xff]
        %v1097 = vld [vmem:[#allocation2 + $0xca] sm:$0xff]
        %v1098 = vld [vmem:[#allocation2 + $0xda] sm:$0xff]
        %v1099 = vld [vmem:[#allocation2 + $0xe2] sm:$0xff]
        %v1100 = vld [vmem:[#allocation2 + $0xf2] sm:$0xff]
        %v1101 = vld [vmem:[#allocation2 + $0xfa] sm:$0xff]
        %v1102 = vld [vmem:[#allocation2 + $0x10a] sm:$0xff]
        %v1103 = vld [vmem:[#allocation2 + $0x112] sm:$0xff]
        %v1104 = vld [vmem:[#allocation2 + $0x122] sm:$0xff]
        %v1105 = vld [vmem:[#allocation2 + $0x12a] sm:$0xff]
        %v1106 = vld [vmem:[#allocation2 + $0x13a] sm:$0xff]
        %v1107 = vld [vmem:[#allocation2 + $0x142] sm:$0xff]
        %v1108 = vld [vmem:[#allocation2 + $0x152] sm:$0xff]
        %v1109 = vld [vmem:[#allocation2 + $0x15a] sm:$0xff]
        %v1110 = vld [vmem:[#allocation2 + $0x16a] sm:$0xff]
        %v1111 = vld [vmem:[#allocation2 + $0x172] sm:$0xff]
        %s1112 = scalar_lea.vmem [#allocation8], 256
        %v1113 = vld [vmem:[%s1112] sm:$0xff]
        %v1114 = vld [vmem:[%s1112 + $0x8] sm:$0xff]
        %v1115 = vld [vmem:[%s1112 + $0x10] sm:$0xff]
        %v1116 = vld [vmem:[%s1112 + $0x18] sm:$0xff]
        %v1117 = vld [vmem:[%s1112 + $0x20] sm:$0xff]
        %v1118 = vld [vmem:[%s1112 + $0x28] sm:$0xff]
        %v1119 = vld [vmem:[%s1112 + $0x30] sm:$0xff]
        %v1120 = vld [vmem:[%s1112 + $0x38] sm:$0xff]
        %v1121 = vld [vmem:[%s1112 + $0x40] sm:$0xff]
        %v1122 = vld [vmem:[%s1112 + $0x48] sm:$0xff]
        %v1123 = vld [vmem:[%s1112 + $0x50] sm:$0xff]
        %v1124 = vld [vmem:[%s1112 + $0x58] sm:$0xff]
        %v1125 = vld [vmem:[%s1112 + $0x60] sm:$0xff]
        %v1126 = vld [vmem:[%s1112 + $0x68] sm:$0xff]
        %v1127 = vld [vmem:[%s1112 + $0x70] sm:$0xff]
        %v1128 = vld [vmem:[%s1112 + $0x78] sm:$0xff]
        %1129 = vmatpush.msra.mxu0 %v1128
        %1130 = vmatpush.msra.mxu0 %v1127
        %1131 = vmatpush.msra.mxu0 %v1126
        %1132 = vmatpush.msra.mxu0 %v1125
        %1133 = vmatpush.msra.mxu0 %v1124
        %1134 = vmatpush.msra.mxu0 %v1123
        %1135 = vmatpush.msra.mxu0 %v1122
        %1136 = vmatpush.msra.mxu0 %v1121
        %1137 = vmatpush.msra.mxu0 %v1120
        %1138 = vmatpush.msra.mxu0 %v1119
        %1139 = vmatpush.msra.mxu0 %v1118
        %1140 = vmatpush.msra.mxu0 %v1117
        %1141 = vmatpush.msra.mxu0 %v1116
        %1142 = vmatpush.msra.mxu0 %v1115
        %1143 = vmatpush.msra.mxu0 %v1114
        %1144 = vmatpush.msra.mxu0 %v1113
        %1145 = vmatmul.f32.gmra.mxu0 %v1080
        %v1146 = vpop.f32.mrf.mxu0
        %v1147 = vadd.f32 0.0, %v1146
        %1148 = vmatmul.f32.gmra.mxu0 %v1081
        %v1149 = vpop.f32.mrf.mxu0
        %v1150 = vadd.f32 0.0, %v1149
        %1151 = vmatmul.f32.gmra.mxu0 %v1082
        %v1152 = vpop.f32.mrf.mxu0
        %v1153 = vadd.f32 0.0, %v1152
        %1154 = vmatmul.f32.gmra.mxu0 %v1083
        %v1155 = vpop.f32.mrf.mxu0
        %v1156 = vadd.f32 0.0, %v1155
        %1157 = vmatmul.f32.gmra.mxu0 %v1084
        %v1158 = vpop.f32.mrf.mxu0
        %v1159 = vadd.f32 0.0, %v1158
        %1160 = vmatmul.f32.gmra.mxu0 %v1085
        %v1161 = vpop.f32.mrf.mxu0
        %v1162 = vadd.f32 0.0, %v1161
        %1163 = vmatmul.f32.gmra.mxu0 %v1086
        %v1164 = vpop.f32.mrf.mxu0
        %v1165 = vadd.f32 0.0, %v1164
        %1166 = vmatmul.f32.gmra.mxu0 %v1087
        %v1167 = vpop.f32.mrf.mxu0
        %v1168 = vadd.f32 0.0, %v1167
        %1169 = vmatmul.f32.gmra.mxu0 %v1088
        %v1170 = vpop.f32.mrf.mxu0
        %v1171 = vadd.f32 0.0, %v1170
        %1172 = vmatmul.f32.gmra.mxu0 %v1089
        %v1173 = vpop.f32.mrf.mxu0
        %v1174 = vadd.f32 0.0, %v1173
        %1175 = vmatmul.f32.gmra.mxu0 %v1090
        %v1176 = vpop.f32.mrf.mxu0
        %v1177 = vadd.f32 0.0, %v1176
        %1178 = vmatmul.f32.gmra.mxu0 %v1091
        %v1179 = vpop.f32.mrf.mxu0
        %v1180 = vadd.f32 0.0, %v1179
        %1181 = vmatmul.f32.gmra.mxu0 %v1092
        %v1182 = vpop.f32.mrf.mxu0
        %v1183 = vadd.f32 0.0, %v1182
        %1184 = vmatmul.f32.gmra.mxu0 %v1093
        %v1185 = vpop.f32.mrf.mxu0
        %v1186 = vadd.f32 0.0, %v1185
        %1187 = vmatmul.f32.gmra.mxu0 %v1094
        %v1188 = vpop.f32.mrf.mxu0
        %v1189 = vadd.f32 0.0, %v1188
        %1190 = vmatmul.f32.gmra.mxu0 %v1095
        %v1191 = vpop.f32.mrf.mxu0
        %v1192 = vadd.f32 0.0, %v1191
        %1193 = vmatmul.f32.gmra.mxu0 %v1096
        %v1194 = vpop.f32.mrf.mxu0
        %v1195 = vadd.f32 0.0, %v1194
        %1196 = vmatmul.f32.gmra.mxu0 %v1097
        %v1197 = vpop.f32.mrf.mxu0
        %v1198 = vadd.f32 0.0, %v1197
        %1199 = vmatmul.f32.gmra.mxu0 %v1098
        %v1200 = vpop.f32.mrf.mxu0
        %v1201 = vadd.f32 0.0, %v1200
        %1202 = vmatmul.f32.gmra.mxu0 %v1099
        %v1203 = vpop.f32.mrf.mxu0
        %v1204 = vadd.f32 0.0, %v1203
        %1205 = vmatmul.f32.gmra.mxu0 %v1100
        %v1206 = vpop.f32.mrf.mxu0
        %v1207 = vadd.f32 0.0, %v1206
        %1208 = vmatmul.f32.gmra.mxu0 %v1101
        %v1209 = vpop.f32.mrf.mxu0
        %v1210 = vadd.f32 0.0, %v1209
        %1211 = vmatmul.f32.gmra.mxu0 %v1102
        %v1212 = vpop.f32.mrf.mxu0
        %v1213 = vadd.f32 0.0, %v1212
        %1214 = vmatmul.f32.gmra.mxu0 %v1103
        %v1215 = vpop.f32.mrf.mxu0
        %v1216 = vadd.f32 0.0, %v1215
        %1217 = vmatmul.f32.gmra.mxu0 %v1104
        %v1218 = vpop.f32.mrf.mxu0
        %v1219 = vadd.f32 0.0, %v1218
        %1220 = vmatmul.f32.gmra.mxu0 %v1105
        %v1221 = vpop.f32.mrf.mxu0
        %v1222 = vadd.f32 0.0, %v1221
        %1223 = vmatmul.f32.gmra.mxu0 %v1106
        %v1224 = vpop.f32.mrf.mxu0
        %v1225 = vadd.f32 0.0, %v1224
        %1226 = vmatmul.f32.gmra.mxu0 %v1107
        %v1227 = vpop.f32.mrf.mxu0
        %v1228 = vadd.f32 0.0, %v1227
        %1229 = vmatmul.f32.gmra.mxu0 %v1108
        %v1230 = vpop.f32.mrf.mxu0
        %v1231 = vadd.f32 0.0, %v1230
        %1232 = vmatmul.f32.gmra.mxu0 %v1109
        %v1233 = vpop.f32.mrf.mxu0
        %v1234 = vadd.f32 0.0, %v1233
        %1235 = vmatmul.f32.gmra.mxu0 %v1110
        %v1236 = vpop.f32.mrf.mxu0
        %v1237 = vadd.f32 0.0, %v1236
        %1238 = vmatmul.f32.gmra.mxu0 %v1111
        %v1239 = vpop.f32.mrf.mxu0
        %v1240 = vadd.f32 0.0, %v1239
        %1241 = vdwg.mxu0
        %v1242 = vadd.f32 %v1048, %v1147
        %v1243 = vadd.f32 %v1049, %v1150
        %v1244 = vadd.f32 %v1050, %v1153
        %v1245 = vadd.f32 %v1051, %v1156
        %v1246 = vadd.f32 %v1052, %v1159
        %v1247 = vadd.f32 %v1053, %v1162
        %v1248 = vadd.f32 %v1054, %v1165
        %v1249 = vadd.f32 %v1055, %v1168
        %v1250 = vadd.f32 %v1056, %v1171
        %v1251 = vadd.f32 %v1057, %v1174
        %v1252 = vadd.f32 %v1058, %v1177
        %v1253 = vadd.f32 %v1059, %v1180
        %v1254 = vadd.f32 %v1060, %v1183
        %v1255 = vadd.f32 %v1061, %v1186
        %v1256 = vadd.f32 %v1062, %v1189
        %v1257 = vadd.f32 %v1063, %v1192
        %v1258 = vadd.f32 %v1064, %v1195
        %v1259 = vadd.f32 %v1065, %v1198
        %v1260 = vadd.f32 %v1066, %v1201
        %v1261 = vadd.f32 %v1067, %v1204
        %v1262 = vadd.f32 %v1068, %v1207
        %v1263 = vadd.f32 %v1069, %v1210
        %v1264 = vadd.f32 %v1070, %v1213
        %v1265 = vadd.f32 %v1071, %v1216
        %v1266 = vadd.f32 %v1072, %v1219
        %v1267 = vadd.f32 %v1073, %v1222
        %v1268 = vadd.f32 %v1074, %v1225
        %v1269 = vadd.f32 %v1075, %v1228
        %v1270 = vadd.f32 %v1076, %v1231
        %v1271 = vadd.f32 %v1077, %v1234
        %v1272 = vadd.f32 %v1078, %v1237
        %v1273 = vadd.f32 %v1079, %v1240
        %v1274 = vld [vmem:[%s623] sm:$0xff]
        %v1275 = vld [vmem:[%s623 + $0x8] sm:$0xff]
        %v1276 = vld [vmem:[%s623 + $0x18] sm:$0xff]
        %v1277 = vld [vmem:[%s623 + $0x20] sm:$0xff]
        %v1278 = vld [vmem:[%s623 + $0x30] sm:$0xff]
        %v1279 = vld [vmem:[%s623 + $0x38] sm:$0xff]
        %v1280 = vld [vmem:[%s623 + $0x48] sm:$0xff]
        %v1281 = vld [vmem:[%s623 + $0x50] sm:$0xff]
        %v1282 = vld [vmem:[%s623 + $0x60] sm:$0xff]
        %v1283 = vld [vmem:[%s623 + $0x68] sm:$0xff]
        %v1284 = vld [vmem:[%s623 + $0x78] sm:$0xff]
        %v1285 = vld [vmem:[%s623 + $0x80] sm:$0xff]
        %v1286 = vld [vmem:[%s623 + $0x90] sm:$0xff]
        %v1287 = vld [vmem:[%s623 + $0x98] sm:$0xff]
        %v1288 = vld [vmem:[%s623 + $0xa8] sm:$0xff]
        %v1289 = vld [vmem:[%s623 + $0xb0] sm:$0xff]
        %v1290 = vld [vmem:[%s623 + $0xc0] sm:$0xff]
        %v1291 = vld [vmem:[%s623 + $0xc8] sm:$0xff]
        %v1292 = vld [vmem:[%s623 + $0xd8] sm:$0xff]
        %v1293 = vld [vmem:[%s623 + $0xe0] sm:$0xff]
        %v1294 = vld [vmem:[%s623 + $0xf0] sm:$0xff]
        %v1295 = vld [vmem:[%s623 + $0xf8] sm:$0xff]
        %v1296 = vld [vmem:[%s623 + $0x108] sm:$0xff]
        %v1297 = vld [vmem:[%s623 + $0x110] sm:$0xff]
        %v1298 = vld [vmem:[%s623 + $0x120] sm:$0xff]
        %v1299 = vld [vmem:[%s623 + $0x128] sm:$0xff]
        %v1300 = vld [vmem:[%s623 + $0x138] sm:$0xff]
        %v1301 = vld [vmem:[%s623 + $0x140] sm:$0xff]
        %v1302 = vld [vmem:[%s623 + $0x150] sm:$0xff]
        %v1303 = vld [vmem:[%s623 + $0x158] sm:$0xff]
        %v1304 = vld [vmem:[%s623 + $0x168] sm:$0xff]
        %v1305 = vld [vmem:[%s623 + $0x170] sm:$0xff]
        %s1306 = scalar_lea.vmem [#allocation8], 384
        %v1307 = vld [vmem:[%s1306] sm:$0xff]
        %v1308 = vld [vmem:[%s1306 + $0x8] sm:$0xff]
        %v1309 = vld [vmem:[%s1306 + $0x10] sm:$0xff]
        %v1310 = vld [vmem:[%s1306 + $0x18] sm:$0xff]
        %v1311 = vld [vmem:[%s1306 + $0x20] sm:$0xff]
        %v1312 = vld [vmem:[%s1306 + $0x28] sm:$0xff]
        %v1313 = vld [vmem:[%s1306 + $0x30] sm:$0xff]
        %v1314 = vld [vmem:[%s1306 + $0x38] sm:$0xff]
        %v1315 = vld [vmem:[%s1306 + $0x40] sm:$0xff]
        %v1316 = vld [vmem:[%s1306 + $0x48] sm:$0xff]
        %v1317 = vld [vmem:[%s1306 + $0x50] sm:$0xff]
        %v1318 = vld [vmem:[%s1306 + $0x58] sm:$0xff]
        %v1319 = vld [vmem:[%s1306 + $0x60] sm:$0xff]
        %v1320 = vld [vmem:[%s1306 + $0x68] sm:$0xff]
        %v1321 = vld [vmem:[%s1306 + $0x70] sm:$0xff]
        %v1322 = vld [vmem:[%s1306 + $0x78] sm:$0xff]
        %1323 = vmatpush.msra.mxu0 %v1322
        %1324 = vmatpush.msra.mxu0 %v1321
        %1325 = vmatpush.msra.mxu0 %v1320
        %1326 = vmatpush.msra.mxu0 %v1319
        %1327 = vmatpush.msra.mxu0 %v1318
        %1328 = vmatpush.msra.mxu0 %v1317
        %1329 = vmatpush.msra.mxu0 %v1316
        %1330 = vmatpush.msra.mxu0 %v1315
        %1331 = vmatpush.msra.mxu0 %v1314
        %1332 = vmatpush.msra.mxu0 %v1313
        %1333 = vmatpush.msra.mxu0 %v1312
        %1334 = vmatpush.msra.mxu0 %v1311
        %1335 = vmatpush.msra.mxu0 %v1310
        %1336 = vmatpush.msra.mxu0 %v1309
        %1337 = vmatpush.msra.mxu0 %v1308
        %1338 = vmatpush.msra.mxu0 %v1307
        %1339 = vmatmul.f32.gmra.mxu0 %v1274
        %v1340 = vpop.f32.mrf.mxu0
        %v1341 = vadd.f32 0.0, %v1340
        %1342 = vmatmul.f32.gmra.mxu0 %v1275
        %v1343 = vpop.f32.mrf.mxu0
        %v1344 = vadd.f32 0.0, %v1343
        %1345 = vmatmul.f32.gmra.mxu0 %v1276
        %v1346 = vpop.f32.mrf.mxu0
        %v1347 = vadd.f32 0.0, %v1346
        %1348 = vmatmul.f32.gmra.mxu0 %v1277
        %v1349 = vpop.f32.mrf.mxu0
        %v1350 = vadd.f32 0.0, %v1349
        %1351 = vmatmul.f32.gmra.mxu0 %v1278
        %v1352 = vpop.f32.mrf.mxu0
        %v1353 = vadd.f32 0.0, %v1352
        %1354 = vmatmul.f32.gmra.mxu0 %v1279
        %v1355 = vpop.f32.mrf.mxu0
        %v1356 = vadd.f32 0.0, %v1355
        %1357 = vmatmul.f32.gmra.mxu0 %v1280
        %v1358 = vpop.f32.mrf.mxu0
        %v1359 = vadd.f32 0.0, %v1358
        %1360 = vmatmul.f32.gmra.mxu0 %v1281
        %v1361 = vpop.f32.mrf.mxu0
        %v1362 = vadd.f32 0.0, %v1361
        %1363 = vmatmul.f32.gmra.mxu0 %v1282
        %v1364 = vpop.f32.mrf.mxu0
        %v1365 = vadd.f32 0.0, %v1364
        %1366 = vmatmul.f32.gmra.mxu0 %v1283
        %v1367 = vpop.f32.mrf.mxu0
        %v1368 = vadd.f32 0.0, %v1367
        %1369 = vmatmul.f32.gmra.mxu0 %v1284
        %v1370 = vpop.f32.mrf.mxu0
        %v1371 = vadd.f32 0.0, %v1370
        %1372 = vmatmul.f32.gmra.mxu0 %v1285
        %v1373 = vpop.f32.mrf.mxu0
        %v1374 = vadd.f32 0.0, %v1373
        %1375 = vmatmul.f32.gmra.mxu0 %v1286
        %v1376 = vpop.f32.mrf.mxu0
        %v1377 = vadd.f32 0.0, %v1376
        %1378 = vmatmul.f32.gmra.mxu0 %v1287
        %v1379 = vpop.f32.mrf.mxu0
        %v1380 = vadd.f32 0.0, %v1379
        %1381 = vmatmul.f32.gmra.mxu0 %v1288
        %v1382 = vpop.f32.mrf.mxu0
        %v1383 = vadd.f32 0.0, %v1382
        %1384 = vmatmul.f32.gmra.mxu0 %v1289
        %v1385 = vpop.f32.mrf.mxu0
        %v1386 = vadd.f32 0.0, %v1385
        %1387 = vmatmul.f32.gmra.mxu0 %v1290
        %v1388 = vpop.f32.mrf.mxu0
        %v1389 = vadd.f32 0.0, %v1388
        %1390 = vmatmul.f32.gmra.mxu0 %v1291
        %v1391 = vpop.f32.mrf.mxu0
        %v1392 = vadd.f32 0.0, %v1391
        %1393 = vmatmul.f32.gmra.mxu0 %v1292
        %v1394 = vpop.f32.mrf.mxu0
        %v1395 = vadd.f32 0.0, %v1394
        %1396 = vmatmul.f32.gmra.mxu0 %v1293
        %v1397 = vpop.f32.mrf.mxu0
        %v1398 = vadd.f32 0.0, %v1397
        %1399 = vmatmul.f32.gmra.mxu0 %v1294
        %v1400 = vpop.f32.mrf.mxu0
        %v1401 = vadd.f32 0.0, %v1400
        %1402 = vmatmul.f32.gmra.mxu0 %v1295
        %v1403 = vpop.f32.mrf.mxu0
        %v1404 = vadd.f32 0.0, %v1403
        %1405 = vmatmul.f32.gmra.mxu0 %v1296
        %v1406 = vpop.f32.mrf.mxu0
        %v1407 = vadd.f32 0.0, %v1406
        %1408 = vmatmul.f32.gmra.mxu0 %v1297
        %v1409 = vpop.f32.mrf.mxu0
        %v1410 = vadd.f32 0.0, %v1409
        %1411 = vmatmul.f32.gmra.mxu0 %v1298
        %v1412 = vpop.f32.mrf.mxu0
        %v1413 = vadd.f32 0.0, %v1412
        %1414 = vmatmul.f32.gmra.mxu0 %v1299
        %v1415 = vpop.f32.mrf.mxu0
        %v1416 = vadd.f32 0.0, %v1415
        %1417 = vmatmul.f32.gmra.mxu0 %v1300
        %v1418 = vpop.f32.mrf.mxu0
        %v1419 = vadd.f32 0.0, %v1418
        %1420 = vmatmul.f32.gmra.mxu0 %v1301
        %v1421 = vpop.f32.mrf.mxu0
        %v1422 = vadd.f32 0.0, %v1421
        %1423 = vmatmul.f32.gmra.mxu0 %v1302
        %v1424 = vpop.f32.mrf.mxu0
        %v1425 = vadd.f32 0.0, %v1424
        %1426 = vmatmul.f32.gmra.mxu0 %v1303
        %v1427 = vpop.f32.mrf.mxu0
        %v1428 = vadd.f32 0.0, %v1427
        %1429 = vmatmul.f32.gmra.mxu0 %v1304
        %v1430 = vpop.f32.mrf.mxu0
        %v1431 = vadd.f32 0.0, %v1430
        %1432 = vmatmul.f32.gmra.mxu0 %v1305
        %v1433 = vpop.f32.mrf.mxu0
        %v1434 = vadd.f32 0.0, %v1433
        %1435 = vdwg.mxu0
        %v1436 = vadd.f32 %v1242, %v1341
        %v1437 = vadd.f32 %v1243, %v1344
        %v1438 = vadd.f32 %v1244, %v1347
        %v1439 = vadd.f32 %v1245, %v1350
        %v1440 = vadd.f32 %v1246, %v1353
        %v1441 = vadd.f32 %v1247, %v1356
        %v1442 = vadd.f32 %v1248, %v1359
        %v1443 = vadd.f32 %v1249, %v1362
        %v1444 = vadd.f32 %v1250, %v1365
        %v1445 = vadd.f32 %v1251, %v1368
        %v1446 = vadd.f32 %v1252, %v1371
        %v1447 = vadd.f32 %v1253, %v1374
        %v1448 = vadd.f32 %v1254, %v1377
        %v1449 = vadd.f32 %v1255, %v1380
        %v1450 = vadd.f32 %v1256, %v1383
        %v1451 = vadd.f32 %v1257, %v1386
        %v1452 = vadd.f32 %v1258, %v1389
        %v1453 = vadd.f32 %v1259, %v1392
        %v1454 = vadd.f32 %v1260, %v1395
        %v1455 = vadd.f32 %v1261, %v1398
        %v1456 = vadd.f32 %v1262, %v1401
        %v1457 = vadd.f32 %v1263, %v1404
        %v1458 = vadd.f32 %v1264, %v1407
        %v1459 = vadd.f32 %v1265, %v1410
        %v1460 = vadd.f32 %v1266, %v1413
        %v1461 = vadd.f32 %v1267, %v1416
        %v1462 = vadd.f32 %v1268, %v1419
        %v1463 = vadd.f32 %v1269, %v1422
        %v1464 = vadd.f32 %v1270, %v1425
        %v1465 = vadd.f32 %v1271, %v1428
        %v1466 = vadd.f32 %v1272, %v1431
        %v1467 = vadd.f32 %v1273, %v1434
        %v1468 = vld [vmem:[%s623 + $0x1] sm:$0xff]
        %v1469 = vld [vmem:[%s623 + $0x9] sm:$0xff]
        %v1470 = vld [vmem:[%s623 + $0x19] sm:$0xff]
        %v1471 = vld [vmem:[%s623 + $0x21] sm:$0xff]
        %v1472 = vld [vmem:[%s623 + $0x31] sm:$0xff]
        %v1473 = vld [vmem:[%s623 + $0x39] sm:$0xff]
        %v1474 = vld [vmem:[%s623 + $0x49] sm:$0xff]
        %v1475 = vld [vmem:[%s623 + $0x51] sm:$0xff]
        %v1476 = vld [vmem:[%s623 + $0x61] sm:$0xff]
        %v1477 = vld [vmem:[%s623 + $0x69] sm:$0xff]
        %v1478 = vld [vmem:[%s623 + $0x79] sm:$0xff]
        %v1479 = vld [vmem:[%s623 + $0x81] sm:$0xff]
        %v1480 = vld [vmem:[%s623 + $0x91] sm:$0xff]
        %v1481 = vld [vmem:[%s623 + $0x99] sm:$0xff]
        %v1482 = vld [vmem:[%s623 + $0xa9] sm:$0xff]
        %v1483 = vld [vmem:[%s623 + $0xb1] sm:$0xff]
        %v1484 = vld [vmem:[%s623 + $0xc1] sm:$0xff]
        %v1485 = vld [vmem:[%s623 + $0xc9] sm:$0xff]
        %v1486 = vld [vmem:[%s623 + $0xd9] sm:$0xff]
        %v1487 = vld [vmem:[%s623 + $0xe1] sm:$0xff]
        %v1488 = vld [vmem:[%s623 + $0xf1] sm:$0xff]
        %v1489 = vld [vmem:[%s623 + $0xf9] sm:$0xff]
        %v1490 = vld [vmem:[%s623 + $0x109] sm:$0xff]
        %v1491 = vld [vmem:[%s623 + $0x111] sm:$0xff]
        %v1492 = vld [vmem:[%s623 + $0x121] sm:$0xff]
        %v1493 = vld [vmem:[%s623 + $0x129] sm:$0xff]
        %v1494 = vld [vmem:[%s623 + $0x139] sm:$0xff]
        %v1495 = vld [vmem:[%s623 + $0x141] sm:$0xff]
        %v1496 = vld [vmem:[%s623 + $0x151] sm:$0xff]
        %v1497 = vld [vmem:[%s623 + $0x159] sm:$0xff]
        %v1498 = vld [vmem:[%s623 + $0x169] sm:$0xff]
        %v1499 = vld [vmem:[%s623 + $0x171] sm:$0xff]
        %s1500 = scalar_lea.vmem [#allocation8], 512
        %v1501 = vld [vmem:[%s1500] sm:$0xff]
        %v1502 = vld [vmem:[%s1500 + $0x8] sm:$0xff]
        %v1503 = vld [vmem:[%s1500 + $0x10] sm:$0xff]
        %v1504 = vld [vmem:[%s1500 + $0x18] sm:$0xff]
        %v1505 = vld [vmem:[%s1500 + $0x20] sm:$0xff]
        %v1506 = vld [vmem:[%s1500 + $0x28] sm:$0xff]
        %v1507 = vld [vmem:[%s1500 + $0x30] sm:$0xff]
        %v1508 = vld [vmem:[%s1500 + $0x38] sm:$0xff]
        %v1509 = vld [vmem:[%s1500 + $0x40] sm:$0xff]
        %v1510 = vld [vmem:[%s1500 + $0x48] sm:$0xff]
        %v1511 = vld [vmem:[%s1500 + $0x50] sm:$0xff]
        %v1512 = vld [vmem:[%s1500 + $0x58] sm:$0xff]
        %v1513 = vld [vmem:[%s1500 + $0x60] sm:$0xff]
        %v1514 = vld [vmem:[%s1500 + $0x68] sm:$0xff]
        %v1515 = vld [vmem:[%s1500 + $0x70] sm:$0xff]
        %v1516 = vld [vmem:[%s1500 + $0x78] sm:$0xff]
        %1517 = vmatpush.msra.mxu0 %v1516
        %1518 = vmatpush.msra.mxu0 %v1515
        %1519 = vmatpush.msra.mxu0 %v1514
        %1520 = vmatpush.msra.mxu0 %v1513
        %1521 = vmatpush.msra.mxu0 %v1512
        %1522 = vmatpush.msra.mxu0 %v1511
        %1523 = vmatpush.msra.mxu0 %v1510
        %1524 = vmatpush.msra.mxu0 %v1509
        %1525 = vmatpush.msra.mxu0 %v1508
        %1526 = vmatpush.msra.mxu0 %v1507
        %1527 = vmatpush.msra.mxu0 %v1506
        %1528 = vmatpush.msra.mxu0 %v1505
        %1529 = vmatpush.msra.mxu0 %v1504
        %1530 = vmatpush.msra.mxu0 %v1503
        %1531 = vmatpush.msra.mxu0 %v1502
        %1532 = vmatpush.msra.mxu0 %v1501
        %1533 = vmatmul.f32.gmra.mxu0 %v1468
        %v1534 = vpop.f32.mrf.mxu0
        %v1535 = vadd.f32 0.0, %v1534
        %1536 = vmatmul.f32.gmra.mxu0 %v1469
        %v1537 = vpop.f32.mrf.mxu0
        %v1538 = vadd.f32 0.0, %v1537
        %1539 = vmatmul.f32.gmra.mxu0 %v1470
        %v1540 = vpop.f32.mrf.mxu0
        %v1541 = vadd.f32 0.0, %v1540
        %1542 = vmatmul.f32.gmra.mxu0 %v1471
        %v1543 = vpop.f32.mrf.mxu0
        %v1544 = vadd.f32 0.0, %v1543
        %1545 = vmatmul.f32.gmra.mxu0 %v1472
        %v1546 = vpop.f32.mrf.mxu0
        %v1547 = vadd.f32 0.0, %v1546
        %1548 = vmatmul.f32.gmra.mxu0 %v1473
        %v1549 = vpop.f32.mrf.mxu0
        %v1550 = vadd.f32 0.0, %v1549
        %1551 = vmatmul.f32.gmra.mxu0 %v1474
        %v1552 = vpop.f32.mrf.mxu0
        %v1553 = vadd.f32 0.0, %v1552
        %1554 = vmatmul.f32.gmra.mxu0 %v1475
        %v1555 = vpop.f32.mrf.mxu0
        %v1556 = vadd.f32 0.0, %v1555
        %1557 = vmatmul.f32.gmra.mxu0 %v1476
        %v1558 = vpop.f32.mrf.mxu0
        %v1559 = vadd.f32 0.0, %v1558
        %1560 = vmatmul.f32.gmra.mxu0 %v1477
        %v1561 = vpop.f32.mrf.mxu0
        %v1562 = vadd.f32 0.0, %v1561
        %1563 = vmatmul.f32.gmra.mxu0 %v1478
        %v1564 = vpop.f32.mrf.mxu0
        %v1565 = vadd.f32 0.0, %v1564
        %1566 = vmatmul.f32.gmra.mxu0 %v1479
        %v1567 = vpop.f32.mrf.mxu0
        %v1568 = vadd.f32 0.0, %v1567
        %1569 = vmatmul.f32.gmra.mxu0 %v1480
        %v1570 = vpop.f32.mrf.mxu0
        %v1571 = vadd.f32 0.0, %v1570
        %1572 = vmatmul.f32.gmra.mxu0 %v1481
        %v1573 = vpop.f32.mrf.mxu0
        %v1574 = vadd.f32 0.0, %v1573
        %1575 = vmatmul.f32.gmra.mxu0 %v1482
        %v1576 = vpop.f32.mrf.mxu0
        %v1577 = vadd.f32 0.0, %v1576
        %1578 = vmatmul.f32.gmra.mxu0 %v1483
        %v1579 = vpop.f32.mrf.mxu0
        %v1580 = vadd.f32 0.0, %v1579
        %1581 = vmatmul.f32.gmra.mxu0 %v1484
        %v1582 = vpop.f32.mrf.mxu0
        %v1583 = vadd.f32 0.0, %v1582
        %1584 = vmatmul.f32.gmra.mxu0 %v1485
        %v1585 = vpop.f32.mrf.mxu0
        %v1586 = vadd.f32 0.0, %v1585
        %1587 = vmatmul.f32.gmra.mxu0 %v1486
        %v1588 = vpop.f32.mrf.mxu0
        %v1589 = vadd.f32 0.0, %v1588
        %1590 = vmatmul.f32.gmra.mxu0 %v1487
        %v1591 = vpop.f32.mrf.mxu0
        %v1592 = vadd.f32 0.0, %v1591
        %1593 = vmatmul.f32.gmra.mxu0 %v1488
        %v1594 = vpop.f32.mrf.mxu0
        %v1595 = vadd.f32 0.0, %v1594
        %1596 = vmatmul.f32.gmra.mxu0 %v1489
        %v1597 = vpop.f32.mrf.mxu0
        %v1598 = vadd.f32 0.0, %v1597
        %1599 = vmatmul.f32.gmra.mxu0 %v1490
        %v1600 = vpop.f32.mrf.mxu0
        %v1601 = vadd.f32 0.0, %v1600
        %1602 = vmatmul.f32.gmra.mxu0 %v1491
        %v1603 = vpop.f32.mrf.mxu0
        %v1604 = vadd.f32 0.0, %v1603
        %1605 = vmatmul.f32.gmra.mxu0 %v1492
        %v1606 = vpop.f32.mrf.mxu0
        %v1607 = vadd.f32 0.0, %v1606
        %1608 = vmatmul.f32.gmra.mxu0 %v1493
        %v1609 = vpop.f32.mrf.mxu0
        %v1610 = vadd.f32 0.0, %v1609
        %1611 = vmatmul.f32.gmra.mxu0 %v1494
        %v1612 = vpop.f32.mrf.mxu0
        %v1613 = vadd.f32 0.0, %v1612
        %1614 = vmatmul.f32.gmra.mxu0 %v1495
        %v1615 = vpop.f32.mrf.mxu0
        %v1616 = vadd.f32 0.0, %v1615
        %1617 = vmatmul.f32.gmra.mxu0 %v1496
        %v1618 = vpop.f32.mrf.mxu0
        %v1619 = vadd.f32 0.0, %v1618
        %1620 = vmatmul.f32.gmra.mxu0 %v1497
        %v1621 = vpop.f32.mrf.mxu0
        %v1622 = vadd.f32 0.0, %v1621
        %1623 = vmatmul.f32.gmra.mxu0 %v1498
        %v1624 = vpop.f32.mrf.mxu0
        %v1625 = vadd.f32 0.0, %v1624
        %1626 = vmatmul.f32.gmra.mxu0 %v1499
        %v1627 = vpop.f32.mrf.mxu0
        %v1628 = vadd.f32 0.0, %v1627
        %1629 = vdwg.mxu0
        %v1630 = vadd.f32 %v1436, %v1535
        %v1631 = vadd.f32 %v1437, %v1538
        %v1632 = vadd.f32 %v1438, %v1541
        %v1633 = vadd.f32 %v1439, %v1544
        %v1634 = vadd.f32 %v1440, %v1547
        %v1635 = vadd.f32 %v1441, %v1550
        %v1636 = vadd.f32 %v1442, %v1553
        %v1637 = vadd.f32 %v1443, %v1556
        %v1638 = vadd.f32 %v1444, %v1559
        %v1639 = vadd.f32 %v1445, %v1562
        %v1640 = vadd.f32 %v1446, %v1565
        %v1641 = vadd.f32 %v1447, %v1568
        %v1642 = vadd.f32 %v1448, %v1571
        %v1643 = vadd.f32 %v1449, %v1574
        %v1644 = vadd.f32 %v1450, %v1577
        %v1645 = vadd.f32 %v1451, %v1580
        %v1646 = vadd.f32 %v1452, %v1583
        %v1647 = vadd.f32 %v1453, %v1586
        %v1648 = vadd.f32 %v1454, %v1589
        %v1649 = vadd.f32 %v1455, %v1592
        %v1650 = vadd.f32 %v1456, %v1595
        %v1651 = vadd.f32 %v1457, %v1598
        %v1652 = vadd.f32 %v1458, %v1601
        %v1653 = vadd.f32 %v1459, %v1604
        %v1654 = vadd.f32 %v1460, %v1607
        %v1655 = vadd.f32 %v1461, %v1610
        %v1656 = vadd.f32 %v1462, %v1613
        %v1657 = vadd.f32 %v1463, %v1616
        %v1658 = vadd.f32 %v1464, %v1619
        %v1659 = vadd.f32 %v1465, %v1622
        %v1660 = vadd.f32 %v1466, %v1625
        %v1661 = vadd.f32 %v1467, %v1628
        %v1662 = vld [vmem:[%s623 + $0x2] sm:$0xff]
        %v1663 = vld [vmem:[%s623 + $0xa] sm:$0xff]
        %v1664 = vld [vmem:[%s623 + $0x1a] sm:$0xff]
        %v1665 = vld [vmem:[%s623 + $0x22] sm:$0xff]
        %v1666 = vld [vmem:[%s623 + $0x32] sm:$0xff]
        %v1667 = vld [vmem:[%s623 + $0x3a] sm:$0xff]
        %v1668 = vld [vmem:[%s623 + $0x4a] sm:$0xff]
        %v1669 = vld [vmem:[%s623 + $0x52] sm:$0xff]
        %v1670 = vld [vmem:[%s623 + $0x62] sm:$0xff]
        %v1671 = vld [vmem:[%s623 + $0x6a] sm:$0xff]
        %v1672 = vld [vmem:[%s623 + $0x7a] sm:$0xff]
        %v1673 = vld [vmem:[%s623 + $0x82] sm:$0xff]
        %v1674 = vld [vmem:[%s623 + $0x92] sm:$0xff]
        %v1675 = vld [vmem:[%s623 + $0x9a] sm:$0xff]
        %v1676 = vld [vmem:[%s623 + $0xaa] sm:$0xff]
        %v1677 = vld [vmem:[%s623 + $0xb2] sm:$0xff]
        %v1678 = vld [vmem:[%s623 + $0xc2] sm:$0xff]
        %v1679 = vld [vmem:[%s623 + $0xca] sm:$0xff]
        %v1680 = vld [vmem:[%s623 + $0xda] sm:$0xff]
        %v1681 = vld [vmem:[%s623 + $0xe2] sm:$0xff]
        %v1682 = vld [vmem:[%s623 + $0xf2] sm:$0xff]
        %v1683 = vld [vmem:[%s623 + $0xfa] sm:$0xff]
        %v1684 = vld [vmem:[%s623 + $0x10a] sm:$0xff]
        %v1685 = vld [vmem:[%s623 + $0x112] sm:$0xff]
        %v1686 = vld [vmem:[%s623 + $0x122] sm:$0xff]
        %v1687 = vld [vmem:[%s623 + $0x12a] sm:$0xff]
        %v1688 = vld [vmem:[%s623 + $0x13a] sm:$0xff]
        %v1689 = vld [vmem:[%s623 + $0x142] sm:$0xff]
        %v1690 = vld [vmem:[%s623 + $0x152] sm:$0xff]
        %v1691 = vld [vmem:[%s623 + $0x15a] sm:$0xff]
        %v1692 = vld [vmem:[%s623 + $0x16a] sm:$0xff]
        %v1693 = vld [vmem:[%s623 + $0x172] sm:$0xff]
        %s1694 = scalar_lea.vmem [#allocation8], 640
        %v1695 = vld [vmem:[%s1694] sm:$0xff]
        %v1696 = vld [vmem:[%s1694 + $0x8] sm:$0xff]
        %v1697 = vld [vmem:[%s1694 + $0x10] sm:$0xff]
        %v1698 = vld [vmem:[%s1694 + $0x18] sm:$0xff]
        %v1699 = vld [vmem:[%s1694 + $0x20] sm:$0xff]
        %v1700 = vld [vmem:[%s1694 + $0x28] sm:$0xff]
        %v1701 = vld [vmem:[%s1694 + $0x30] sm:$0xff]
        %v1702 = vld [vmem:[%s1694 + $0x38] sm:$0xff]
        %v1703 = vld [vmem:[%s1694 + $0x40] sm:$0xff]
        %v1704 = vld [vmem:[%s1694 + $0x48] sm:$0xff]
        %v1705 = vld [vmem:[%s1694 + $0x50] sm:$0xff]
        %v1706 = vld [vmem:[%s1694 + $0x58] sm:$0xff]
        %v1707 = vld [vmem:[%s1694 + $0x60] sm:$0xff]
        %v1708 = vld [vmem:[%s1694 + $0x68] sm:$0xff]
        %v1709 = vld [vmem:[%s1694 + $0x70] sm:$0xff]
        %v1710 = vld [vmem:[%s1694 + $0x78] sm:$0xff]
        %1711 = vmatpush.msra.mxu0 %v1710
        %1712 = vmatpush.msra.mxu0 %v1709
        %1713 = vmatpush.msra.mxu0 %v1708
        %1714 = vmatpush.msra.mxu0 %v1707
        %1715 = vmatpush.msra.mxu0 %v1706
        %1716 = vmatpush.msra.mxu0 %v1705
        %1717 = vmatpush.msra.mxu0 %v1704
        %1718 = vmatpush.msra.mxu0 %v1703
        %1719 = vmatpush.msra.mxu0 %v1702
        %1720 = vmatpush.msra.mxu0 %v1701
        %1721 = vmatpush.msra.mxu0 %v1700
        %1722 = vmatpush.msra.mxu0 %v1699
        %1723 = vmatpush.msra.mxu0 %v1698
        %1724 = vmatpush.msra.mxu0 %v1697
        %1725 = vmatpush.msra.mxu0 %v1696
        %1726 = vmatpush.msra.mxu0 %v1695
        %1727 = vmatmul.f32.gmra.mxu0 %v1662
        %v1728 = vpop.f32.mrf.mxu0
        %v1729 = vadd.f32 0.0, %v1728
        %1730 = vmatmul.f32.gmra.mxu0 %v1663
        %v1731 = vpop.f32.mrf.mxu0
        %v1732 = vadd.f32 0.0, %v1731
        %1733 = vmatmul.f32.gmra.mxu0 %v1664
        %v1734 = vpop.f32.mrf.mxu0
        %v1735 = vadd.f32 0.0, %v1734
        %1736 = vmatmul.f32.gmra.mxu0 %v1665
        %v1737 = vpop.f32.mrf.mxu0
        %v1738 = vadd.f32 0.0, %v1737
        %1739 = vmatmul.f32.gmra.mxu0 %v1666
        %v1740 = vpop.f32.mrf.mxu0
        %v1741 = vadd.f32 0.0, %v1740
        %1742 = vmatmul.f32.gmra.mxu0 %v1667
        %v1743 = vpop.f32.mrf.mxu0
        %v1744 = vadd.f32 0.0, %v1743
        %1745 = vmatmul.f32.gmra.mxu0 %v1668
        %v1746 = vpop.f32.mrf.mxu0
        %v1747 = vadd.f32 0.0, %v1746
        %1748 = vmatmul.f32.gmra.mxu0 %v1669
        %v1749 = vpop.f32.mrf.mxu0
        %v1750 = vadd.f32 0.0, %v1749
        %1751 = vmatmul.f32.gmra.mxu0 %v1670
        %v1752 = vpop.f32.mrf.mxu0
        %v1753 = vadd.f32 0.0, %v1752
        %1754 = vmatmul.f32.gmra.mxu0 %v1671
        %v1755 = vpop.f32.mrf.mxu0
        %v1756 = vadd.f32 0.0, %v1755
        %1757 = vmatmul.f32.gmra.mxu0 %v1672
        %v1758 = vpop.f32.mrf.mxu0
        %v1759 = vadd.f32 0.0, %v1758
        %1760 = vmatmul.f32.gmra.mxu0 %v1673
        %v1761 = vpop.f32.mrf.mxu0
        %v1762 = vadd.f32 0.0, %v1761
        %1763 = vmatmul.f32.gmra.mxu0 %v1674
        %v1764 = vpop.f32.mrf.mxu0
        %v1765 = vadd.f32 0.0, %v1764
        %1766 = vmatmul.f32.gmra.mxu0 %v1675
        %v1767 = vpop.f32.mrf.mxu0
        %v1768 = vadd.f32 0.0, %v1767
        %1769 = vmatmul.f32.gmra.mxu0 %v1676
        %v1770 = vpop.f32.mrf.mxu0
        %v1771 = vadd.f32 0.0, %v1770
        %1772 = vmatmul.f32.gmra.mxu0 %v1677
        %v1773 = vpop.f32.mrf.mxu0
        %v1774 = vadd.f32 0.0, %v1773
        %1775 = vmatmul.f32.gmra.mxu0 %v1678
        %v1776 = vpop.f32.mrf.mxu0
        %v1777 = vadd.f32 0.0, %v1776
        %1778 = vmatmul.f32.gmra.mxu0 %v1679
        %v1779 = vpop.f32.mrf.mxu0
        %v1780 = vadd.f32 0.0, %v1779
        %1781 = vmatmul.f32.gmra.mxu0 %v1680
        %v1782 = vpop.f32.mrf.mxu0
        %v1783 = vadd.f32 0.0, %v1782
        %1784 = vmatmul.f32.gmra.mxu0 %v1681
        %v1785 = vpop.f32.mrf.mxu0
        %v1786 = vadd.f32 0.0, %v1785
        %1787 = vmatmul.f32.gmra.mxu0 %v1682
        %v1788 = vpop.f32.mrf.mxu0
        %v1789 = vadd.f32 0.0, %v1788
        %1790 = vmatmul.f32.gmra.mxu0 %v1683
        %v1791 = vpop.f32.mrf.mxu0
        %v1792 = vadd.f32 0.0, %v1791
        %1793 = vmatmul.f32.gmra.mxu0 %v1684
        %v1794 = vpop.f32.mrf.mxu0
        %v1795 = vadd.f32 0.0, %v1794
        %1796 = vmatmul.f32.gmra.mxu0 %v1685
        %v1797 = vpop.f32.mrf.mxu0
        %v1798 = vadd.f32 0.0, %v1797
        %1799 = vmatmul.f32.gmra.mxu0 %v1686
        %v1800 = vpop.f32.mrf.mxu0
        %v1801 = vadd.f32 0.0, %v1800
        %1802 = vmatmul.f32.gmra.mxu0 %v1687
        %v1803 = vpop.f32.mrf.mxu0
        %v1804 = vadd.f32 0.0, %v1803
        %1805 = vmatmul.f32.gmra.mxu0 %v1688
        %v1806 = vpop.f32.mrf.mxu0
        %v1807 = vadd.f32 0.0, %v1806
        %1808 = vmatmul.f32.gmra.mxu0 %v1689
        %v1809 = vpop.f32.mrf.mxu0
        %v1810 = vadd.f32 0.0, %v1809
        %1811 = vmatmul.f32.gmra.mxu0 %v1690
        %v1812 = vpop.f32.mrf.mxu0
        %v1813 = vadd.f32 0.0, %v1812
        %1814 = vmatmul.f32.gmra.mxu0 %v1691
        %v1815 = vpop.f32.mrf.mxu0
        %v1816 = vadd.f32 0.0, %v1815
        %1817 = vmatmul.f32.gmra.mxu0 %v1692
        %v1818 = vpop.f32.mrf.mxu0
        %v1819 = vadd.f32 0.0, %v1818
        %1820 = vmatmul.f32.gmra.mxu0 %v1693
        %v1821 = vpop.f32.mrf.mxu0
        %v1822 = vadd.f32 0.0, %v1821
        %1823 = vdwg.mxu0
        %v1824 = vadd.f32 %v1630, %v1729
        %v1825 = vadd.f32 %v1631, %v1732
        %v1826 = vadd.f32 %v1632, %v1735
        %v1827 = vadd.f32 %v1633, %v1738
        %v1828 = vadd.f32 %v1634, %v1741
        %v1829 = vadd.f32 %v1635, %v1744
        %v1830 = vadd.f32 %v1636, %v1747
        %v1831 = vadd.f32 %v1637, %v1750
        %v1832 = vadd.f32 %v1638, %v1753
        %v1833 = vadd.f32 %v1639, %v1756
        %v1834 = vadd.f32 %v1640, %v1759
        %v1835 = vadd.f32 %v1641, %v1762
        %v1836 = vadd.f32 %v1642, %v1765
        %v1837 = vadd.f32 %v1643, %v1768
        %v1838 = vadd.f32 %v1644, %v1771
        %v1839 = vadd.f32 %v1645, %v1774
        %v1840 = vadd.f32 %v1646, %v1777
        %v1841 = vadd.f32 %v1647, %v1780
        %v1842 = vadd.f32 %v1648, %v1783
        %v1843 = vadd.f32 %v1649, %v1786
        %v1844 = vadd.f32 %v1650, %v1789
        %v1845 = vadd.f32 %v1651, %v1792
        %v1846 = vadd.f32 %v1652, %v1795
        %v1847 = vadd.f32 %v1653, %v1798
        %v1848 = vadd.f32 %v1654, %v1801
        %v1849 = vadd.f32 %v1655, %v1804
        %v1850 = vadd.f32 %v1656, %v1807
        %v1851 = vadd.f32 %v1657, %v1810
        %v1852 = vadd.f32 %v1658, %v1813
        %v1853 = vadd.f32 %v1659, %v1816
        %v1854 = vadd.f32 %v1660, %v1819
        %v1855 = vadd.f32 %v1661, %v1822
        %s1856 = scalar_lea.vmem [#allocation2], 48
        %v1857 = vld [vmem:[%s1856] sm:$0xff]
        %v1858 = vld [vmem:[%s1856 + $0x8] sm:$0xff]
        %v1859 = vld [vmem:[%s1856 + $0x18] sm:$0xff]
        %v1860 = vld [vmem:[%s1856 + $0x20] sm:$0xff]
        %v1861 = vld [vmem:[%s1856 + $0x30] sm:$0xff]
        %v1862 = vld [vmem:[%s1856 + $0x38] sm:$0xff]
        %v1863 = vld [vmem:[%s1856 + $0x48] sm:$0xff]
        %v1864 = vld [vmem:[%s1856 + $0x50] sm:$0xff]
        %v1865 = vld [vmem:[%s1856 + $0x60] sm:$0xff]
        %v1866 = vld [vmem:[%s1856 + $0x68] sm:$0xff]
        %v1867 = vld [vmem:[%s1856 + $0x78] sm:$0xff]
        %v1868 = vld [vmem:[%s1856 + $0x80] sm:$0xff]
        %v1869 = vld [vmem:[%s1856 + $0x90] sm:$0xff]
        %v1870 = vld [vmem:[%s1856 + $0x98] sm:$0xff]
        %v1871 = vld [vmem:[%s1856 + $0xa8] sm:$0xff]
        %v1872 = vld [vmem:[%s1856 + $0xb0] sm:$0xff]
        %v1873 = vld [vmem:[%s1856 + $0xc0] sm:$0xff]
        %v1874 = vld [vmem:[%s1856 + $0xc8] sm:$0xff]
        %v1875 = vld [vmem:[%s1856 + $0xd8] sm:$0xff]
        %v1876 = vld [vmem:[%s1856 + $0xe0] sm:$0xff]
        %v1877 = vld [vmem:[%s1856 + $0xf0] sm:$0xff]
        %v1878 = vld [vmem:[%s1856 + $0xf8] sm:$0xff]
        %v1879 = vld [vmem:[%s1856 + $0x108] sm:$0xff]
        %v1880 = vld [vmem:[%s1856 + $0x110] sm:$0xff]
        %v1881 = vld [vmem:[%s1856 + $0x120] sm:$0xff]
        %v1882 = vld [vmem:[%s1856 + $0x128] sm:$0xff]
        %v1883 = vld [vmem:[%s1856 + $0x138] sm:$0xff]
        %v1884 = vld [vmem:[%s1856 + $0x140] sm:$0xff]
        %v1885 = vld [vmem:[%s1856 + $0x150] sm:$0xff]
        %v1886 = vld [vmem:[%s1856 + $0x158] sm:$0xff]
        %v1887 = vld [vmem:[%s1856 + $0x168] sm:$0xff]
        %v1888 = vld [vmem:[%s1856 + $0x170] sm:$0xff]
        %s1889 = scalar_lea.vmem [#allocation8], 768
        %v1890 = vld [vmem:[%s1889] sm:$0xff]
        %v1891 = vld [vmem:[%s1889 + $0x8] sm:$0xff]
        %v1892 = vld [vmem:[%s1889 + $0x10] sm:$0xff]
        %v1893 = vld [vmem:[%s1889 + $0x18] sm:$0xff]
        %v1894 = vld [vmem:[%s1889 + $0x20] sm:$0xff]
        %v1895 = vld [vmem:[%s1889 + $0x28] sm:$0xff]
        %v1896 = vld [vmem:[%s1889 + $0x30] sm:$0xff]
        %v1897 = vld [vmem:[%s1889 + $0x38] sm:$0xff]
        %v1898 = vld [vmem:[%s1889 + $0x40] sm:$0xff]
        %v1899 = vld [vmem:[%s1889 + $0x48] sm:$0xff]
        %v1900 = vld [vmem:[%s1889 + $0x50] sm:$0xff]
        %v1901 = vld [vmem:[%s1889 + $0x58] sm:$0xff]
        %v1902 = vld [vmem:[%s1889 + $0x60] sm:$0xff]
        %v1903 = vld [vmem:[%s1889 + $0x68] sm:$0xff]
        %v1904 = vld [vmem:[%s1889 + $0x70] sm:$0xff]
        %v1905 = vld [vmem:[%s1889 + $0x78] sm:$0xff]
        %1906 = vmatpush.msra.mxu0 %v1905
        %1907 = vmatpush.msra.mxu0 %v1904
        %1908 = vmatpush.msra.mxu0 %v1903
        %1909 = vmatpush.msra.mxu0 %v1902
        %1910 = vmatpush.msra.mxu0 %v1901
        %1911 = vmatpush.msra.mxu0 %v1900
        %1912 = vmatpush.msra.mxu0 %v1899
        %1913 = vmatpush.msra.mxu0 %v1898
        %1914 = vmatpush.msra.mxu0 %v1897
        %1915 = vmatpush.msra.mxu0 %v1896
        %1916 = vmatpush.msra.mxu0 %v1895
        %1917 = vmatpush.msra.mxu0 %v1894
        %1918 = vmatpush.msra.mxu0 %v1893
        %1919 = vmatpush.msra.mxu0 %v1892
        %1920 = vmatpush.msra.mxu0 %v1891
        %1921 = vmatpush.msra.mxu0 %v1890
        %1922 = vmatmul.f32.gmra.mxu0 %v1857
        %v1923 = vpop.f32.mrf.mxu0
        %v1924 = vadd.f32 0.0, %v1923
        %1925 = vmatmul.f32.gmra.mxu0 %v1858
        %v1926 = vpop.f32.mrf.mxu0
        %v1927 = vadd.f32 0.0, %v1926
        %1928 = vmatmul.f32.gmra.mxu0 %v1859
        %v1929 = vpop.f32.mrf.mxu0
        %v1930 = vadd.f32 0.0, %v1929
        %1931 = vmatmul.f32.gmra.mxu0 %v1860
        %v1932 = vpop.f32.mrf.mxu0
        %v1933 = vadd.f32 0.0, %v1932
        %1934 = vmatmul.f32.gmra.mxu0 %v1861
        %v1935 = vpop.f32.mrf.mxu0
        %v1936 = vadd.f32 0.0, %v1935
        %1937 = vmatmul.f32.gmra.mxu0 %v1862
        %v1938 = vpop.f32.mrf.mxu0
        %v1939 = vadd.f32 0.0, %v1938
        %1940 = vmatmul.f32.gmra.mxu0 %v1863
        %v1941 = vpop.f32.mrf.mxu0
        %v1942 = vadd.f32 0.0, %v1941
        %1943 = vmatmul.f32.gmra.mxu0 %v1864
        %v1944 = vpop.f32.mrf.mxu0
        %v1945 = vadd.f32 0.0, %v1944
        %1946 = vmatmul.f32.gmra.mxu0 %v1865
        %v1947 = vpop.f32.mrf.mxu0
        %v1948 = vadd.f32 0.0, %v1947
        %1949 = vmatmul.f32.gmra.mxu0 %v1866
        %v1950 = vpop.f32.mrf.mxu0
        %v1951 = vadd.f32 0.0, %v1950
        %1952 = vmatmul.f32.gmra.mxu0 %v1867
        %v1953 = vpop.f32.mrf.mxu0
        %v1954 = vadd.f32 0.0, %v1953
        %1955 = vmatmul.f32.gmra.mxu0 %v1868
        %v1956 = vpop.f32.mrf.mxu0
        %v1957 = vadd.f32 0.0, %v1956
        %1958 = vmatmul.f32.gmra.mxu0 %v1869
        %v1959 = vpop.f32.mrf.mxu0
        %v1960 = vadd.f32 0.0, %v1959
        %1961 = vmatmul.f32.gmra.mxu0 %v1870
        %v1962 = vpop.f32.mrf.mxu0
        %v1963 = vadd.f32 0.0, %v1962
        %1964 = vmatmul.f32.gmra.mxu0 %v1871
        %v1965 = vpop.f32.mrf.mxu0
        %v1966 = vadd.f32 0.0, %v1965
        %1967 = vmatmul.f32.gmra.mxu0 %v1872
        %v1968 = vpop.f32.mrf.mxu0
        %v1969 = vadd.f32 0.0, %v1968
        %1970 = vmatmul.f32.gmra.mxu0 %v1873
        %v1971 = vpop.f32.mrf.mxu0
        %v1972 = vadd.f32 0.0, %v1971
        %1973 = vmatmul.f32.gmra.mxu0 %v1874
        %v1974 = vpop.f32.mrf.mxu0
        %v1975 = vadd.f32 0.0, %v1974
        %1976 = vmatmul.f32.gmra.mxu0 %v1875
        %v1977 = vpop.f32.mrf.mxu0
        %v1978 = vadd.f32 0.0, %v1977
        %1979 = vmatmul.f32.gmra.mxu0 %v1876
        %v1980 = vpop.f32.mrf.mxu0
        %v1981 = vadd.f32 0.0, %v1980
        %1982 = vmatmul.f32.gmra.mxu0 %v1877
        %v1983 = vpop.f32.mrf.mxu0
        %v1984 = vadd.f32 0.0, %v1983
        %1985 = vmatmul.f32.gmra.mxu0 %v1878
        %v1986 = vpop.f32.mrf.mxu0
        %v1987 = vadd.f32 0.0, %v1986
        %1988 = vmatmul.f32.gmra.mxu0 %v1879
        %v1989 = vpop.f32.mrf.mxu0
        %v1990 = vadd.f32 0.0, %v1989
        %1991 = vmatmul.f32.gmra.mxu0 %v1880
        %v1992 = vpop.f32.mrf.mxu0
        %v1993 = vadd.f32 0.0, %v1992
        %1994 = vmatmul.f32.gmra.mxu0 %v1881
        %v1995 = vpop.f32.mrf.mxu0
        %v1996 = vadd.f32 0.0, %v1995
        %1997 = vmatmul.f32.gmra.mxu0 %v1882
        %v1998 = vpop.f32.mrf.mxu0
        %v1999 = vadd.f32 0.0, %v1998
        %2000 = vmatmul.f32.gmra.mxu0 %v1883
        %v2001 = vpop.f32.mrf.mxu0
        %v2002 = vadd.f32 0.0, %v2001
        %2003 = vmatmul.f32.gmra.mxu0 %v1884
        %v2004 = vpop.f32.mrf.mxu0
        %v2005 = vadd.f32 0.0, %v2004
        %2006 = vmatmul.f32.gmra.mxu0 %v1885
        %v2007 = vpop.f32.mrf.mxu0
        %v2008 = vadd.f32 0.0, %v2007
        %2009 = vmatmul.f32.gmra.mxu0 %v1886
        %v2010 = vpop.f32.mrf.mxu0
        %v2011 = vadd.f32 0.0, %v2010
        %2012 = vmatmul.f32.gmra.mxu0 %v1887
        %v2013 = vpop.f32.mrf.mxu0
        %v2014 = vadd.f32 0.0, %v2013
        %2015 = vmatmul.f32.gmra.mxu0 %v1888
        %v2016 = vpop.f32.mrf.mxu0
        %v2017 = vadd.f32 0.0, %v2016
        %2018 = vdwg.mxu0
        %v2019 = vadd.f32 %v1824, %v1924
        %v2020 = vadd.f32 %v1825, %v1927
        %v2021 = vadd.f32 %v1826, %v1930
        %v2022 = vadd.f32 %v1827, %v1933
        %v2023 = vadd.f32 %v1828, %v1936
        %v2024 = vadd.f32 %v1829, %v1939
        %v2025 = vadd.f32 %v1830, %v1942
        %v2026 = vadd.f32 %v1831, %v1945
        %v2027 = vadd.f32 %v1832, %v1948
        %v2028 = vadd.f32 %v1833, %v1951
        %v2029 = vadd.f32 %v1834, %v1954
        %v2030 = vadd.f32 %v1835, %v1957
        %v2031 = vadd.f32 %v1836, %v1960
        %v2032 = vadd.f32 %v1837, %v1963
        %v2033 = vadd.f32 %v1838, %v1966
        %v2034 = vadd.f32 %v1839, %v1969
        %v2035 = vadd.f32 %v1840, %v1972
        %v2036 = vadd.f32 %v1841, %v1975
        %v2037 = vadd.f32 %v1842, %v1978
        %v2038 = vadd.f32 %v1843, %v1981
        %v2039 = vadd.f32 %v1844, %v1984
        %v2040 = vadd.f32 %v1845, %v1987
        %v2041 = vadd.f32 %v1846, %v1990
        %v2042 = vadd.f32 %v1847, %v1993
        %v2043 = vadd.f32 %v1848, %v1996
        %v2044 = vadd.f32 %v1849, %v1999
        %v2045 = vadd.f32 %v1850, %v2002
        %v2046 = vadd.f32 %v1851, %v2005
        %v2047 = vadd.f32 %v1852, %v2008
        %v2048 = vadd.f32 %v1853, %v2011
        %v2049 = vadd.f32 %v1854, %v2014
        %v2050 = vadd.f32 %v1855, %v2017
        %v2051 = vld [vmem:[%s1856 + $0x1] sm:$0xff]
        %v2052 = vld [vmem:[%s1856 + $0x9] sm:$0xff]
        %v2053 = vld [vmem:[%s1856 + $0x19] sm:$0xff]
        %v2054 = vld [vmem:[%s1856 + $0x21] sm:$0xff]
        %v2055 = vld [vmem:[%s1856 + $0x31] sm:$0xff]
        %v2056 = vld [vmem:[%s1856 + $0x39] sm:$0xff]
        %v2057 = vld [vmem:[%s1856 + $0x49] sm:$0xff]
        %v2058 = vld [vmem:[%s1856 + $0x51] sm:$0xff]
        %v2059 = vld [vmem:[%s1856 + $0x61] sm:$0xff]
        %v2060 = vld [vmem:[%s1856 + $0x69] sm:$0xff]
        %v2061 = vld [vmem:[%s1856 + $0x79] sm:$0xff]
        %v2062 = vld [vmem:[%s1856 + $0x81] sm:$0xff]
        %v2063 = vld [vmem:[%s1856 + $0x91] sm:$0xff]
        %v2064 = vld [vmem:[%s1856 + $0x99] sm:$0xff]
        %v2065 = vld [vmem:[%s1856 + $0xa9] sm:$0xff]
        %v2066 = vld [vmem:[%s1856 + $0xb1] sm:$0xff]
        %v2067 = vld [vmem:[%s1856 + $0xc1] sm:$0xff]
        %v2068 = vld [vmem:[%s1856 + $0xc9] sm:$0xff]
        %v2069 = vld [vmem:[%s1856 + $0xd9] sm:$0xff]
        %v2070 = vld [vmem:[%s1856 + $0xe1] sm:$0xff]
        %v2071 = vld [vmem:[%s1856 + $0xf1] sm:$0xff]
        %v2072 = vld [vmem:[%s1856 + $0xf9] sm:$0xff]
        %v2073 = vld [vmem:[%s1856 + $0x109] sm:$0xff]
        %v2074 = vld [vmem:[%s1856 + $0x111] sm:$0xff]
        %v2075 = vld [vmem:[%s1856 + $0x121] sm:$0xff]
        %v2076 = vld [vmem:[%s1856 + $0x129] sm:$0xff]
        %v2077 = vld [vmem:[%s1856 + $0x139] sm:$0xff]
        %v2078 = vld [vmem:[%s1856 + $0x141] sm:$0xff]
        %v2079 = vld [vmem:[%s1856 + $0x151] sm:$0xff]
        %v2080 = vld [vmem:[%s1856 + $0x159] sm:$0xff]
        %v2081 = vld [vmem:[%s1856 + $0x169] sm:$0xff]
        %v2082 = vld [vmem:[%s1856 + $0x171] sm:$0xff]
        %s2083 = scalar_lea.vmem [#allocation8], 896
        %v2084 = vld [vmem:[%s2083] sm:$0xff]
        %v2085 = vld [vmem:[%s2083 + $0x8] sm:$0xff]
        %v2086 = vld [vmem:[%s2083 + $0x10] sm:$0xff]
        %v2087 = vld [vmem:[%s2083 + $0x18] sm:$0xff]
        %v2088 = vld [vmem:[%s2083 + $0x20] sm:$0xff]
        %v2089 = vld [vmem:[%s2083 + $0x28] sm:$0xff]
        %v2090 = vld [vmem:[%s2083 + $0x30] sm:$0xff]
        %v2091 = vld [vmem:[%s2083 + $0x38] sm:$0xff]
        %v2092 = vld [vmem:[%s2083 + $0x40] sm:$0xff]
        %v2093 = vld [vmem:[%s2083 + $0x48] sm:$0xff]
        %v2094 = vld [vmem:[%s2083 + $0x50] sm:$0xff]
        %v2095 = vld [vmem:[%s2083 + $0x58] sm:$0xff]
        %v2096 = vld [vmem:[%s2083 + $0x60] sm:$0xff]
        %v2097 = vld [vmem:[%s2083 + $0x68] sm:$0xff]
        %v2098 = vld [vmem:[%s2083 + $0x70] sm:$0xff]
        %v2099 = vld [vmem:[%s2083 + $0x78] sm:$0xff]
        %2100 = vmatpush.msra.mxu0 %v2099
        %2101 = vmatpush.msra.mxu0 %v2098
        %2102 = vmatpush.msra.mxu0 %v2097
        %2103 = vmatpush.msra.mxu0 %v2096
        %2104 = vmatpush.msra.mxu0 %v2095
        %2105 = vmatpush.msra.mxu0 %v2094
        %2106 = vmatpush.msra.mxu0 %v2093
        %2107 = vmatpush.msra.mxu0 %v2092
        %2108 = vmatpush.msra.mxu0 %v2091
        %2109 = vmatpush.msra.mxu0 %v2090
        %2110 = vmatpush.msra.mxu0 %v2089
        %2111 = vmatpush.msra.mxu0 %v2088
        %2112 = vmatpush.msra.mxu0 %v2087
        %2113 = vmatpush.msra.mxu0 %v2086
        %2114 = vmatpush.msra.mxu0 %v2085
        %2115 = vmatpush.msra.mxu0 %v2084
        %2116 = vmatmul.f32.gmra.mxu0 %v2051
        %v2117 = vpop.f32.mrf.mxu0
        %v2118 = vadd.f32 0.0, %v2117
        %2119 = vmatmul.f32.gmra.mxu0 %v2052
        %v2120 = vpop.f32.mrf.mxu0
        %v2121 = vadd.f32 0.0, %v2120
        %2122 = vmatmul.f32.gmra.mxu0 %v2053
        %v2123 = vpop.f32.mrf.mxu0
        %v2124 = vadd.f32 0.0, %v2123
        %2125 = vmatmul.f32.gmra.mxu0 %v2054
        %v2126 = vpop.f32.mrf.mxu0
        %v2127 = vadd.f32 0.0, %v2126
        %2128 = vmatmul.f32.gmra.mxu0 %v2055
        %v2129 = vpop.f32.mrf.mxu0
        %v2130 = vadd.f32 0.0, %v2129
        %2131 = vmatmul.f32.gmra.mxu0 %v2056
        %v2132 = vpop.f32.mrf.mxu0
        %v2133 = vadd.f32 0.0, %v2132
        %2134 = vmatmul.f32.gmra.mxu0 %v2057
        %v2135 = vpop.f32.mrf.mxu0
        %v2136 = vadd.f32 0.0, %v2135
        %2137 = vmatmul.f32.gmra.mxu0 %v2058
        %v2138 = vpop.f32.mrf.mxu0
        %v2139 = vadd.f32 0.0, %v2138
        %2140 = vmatmul.f32.gmra.mxu0 %v2059
        %v2141 = vpop.f32.mrf.mxu0
        %v2142 = vadd.f32 0.0, %v2141
        %2143 = vmatmul.f32.gmra.mxu0 %v2060
        %v2144 = vpop.f32.mrf.mxu0
        %v2145 = vadd.f32 0.0, %v2144
        %2146 = vmatmul.f32.gmra.mxu0 %v2061
        %v2147 = vpop.f32.mrf.mxu0
        %v2148 = vadd.f32 0.0, %v2147
        %2149 = vmatmul.f32.gmra.mxu0 %v2062
        %v2150 = vpop.f32.mrf.mxu0
        %v2151 = vadd.f32 0.0, %v2150
        %2152 = vmatmul.f32.gmra.mxu0 %v2063
        %v2153 = vpop.f32.mrf.mxu0
        %v2154 = vadd.f32 0.0, %v2153
        %2155 = vmatmul.f32.gmra.mxu0 %v2064
        %v2156 = vpop.f32.mrf.mxu0
        %v2157 = vadd.f32 0.0, %v2156
        %2158 = vmatmul.f32.gmra.mxu0 %v2065
        %v2159 = vpop.f32.mrf.mxu0
        %v2160 = vadd.f32 0.0, %v2159
        %2161 = vmatmul.f32.gmra.mxu0 %v2066
        %v2162 = vpop.f32.mrf.mxu0
        %v2163 = vadd.f32 0.0, %v2162
        %2164 = vmatmul.f32.gmra.mxu0 %v2067
        %v2165 = vpop.f32.mrf.mxu0
        %v2166 = vadd.f32 0.0, %v2165
        %2167 = vmatmul.f32.gmra.mxu0 %v2068
        %v2168 = vpop.f32.mrf.mxu0
        %v2169 = vadd.f32 0.0, %v2168
        %2170 = vmatmul.f32.gmra.mxu0 %v2069
        %v2171 = vpop.f32.mrf.mxu0
        %v2172 = vadd.f32 0.0, %v2171
        %2173 = vmatmul.f32.gmra.mxu0 %v2070
        %v2174 = vpop.f32.mrf.mxu0
        %v2175 = vadd.f32 0.0, %v2174
        %2176 = vmatmul.f32.gmra.mxu0 %v2071
        %v2177 = vpop.f32.mrf.mxu0
        %v2178 = vadd.f32 0.0, %v2177
        %2179 = vmatmul.f32.gmra.mxu0 %v2072
        %v2180 = vpop.f32.mrf.mxu0
        %v2181 = vadd.f32 0.0, %v2180
        %2182 = vmatmul.f32.gmra.mxu0 %v2073
        %v2183 = vpop.f32.mrf.mxu0
        %v2184 = vadd.f32 0.0, %v2183
        %2185 = vmatmul.f32.gmra.mxu0 %v2074
        %v2186 = vpop.f32.mrf.mxu0
        %v2187 = vadd.f32 0.0, %v2186
        %2188 = vmatmul.f32.gmra.mxu0 %v2075
        %v2189 = vpop.f32.mrf.mxu0
        %v2190 = vadd.f32 0.0, %v2189
        %2191 = vmatmul.f32.gmra.mxu0 %v2076
        %v2192 = vpop.f32.mrf.mxu0
        %v2193 = vadd.f32 0.0, %v2192
        %2194 = vmatmul.f32.gmra.mxu0 %v2077
        %v2195 = vpop.f32.mrf.mxu0
        %v2196 = vadd.f32 0.0, %v2195
        %2197 = vmatmul.f32.gmra.mxu0 %v2078
        %v2198 = vpop.f32.mrf.mxu0
        %v2199 = vadd.f32 0.0, %v2198
        %2200 = vmatmul.f32.gmra.mxu0 %v2079
        %v2201 = vpop.f32.mrf.mxu0
        %v2202 = vadd.f32 0.0, %v2201
        %2203 = vmatmul.f32.gmra.mxu0 %v2080
        %v2204 = vpop.f32.mrf.mxu0
        %v2205 = vadd.f32 0.0, %v2204
        %2206 = vmatmul.f32.gmra.mxu0 %v2081
        %v2207 = vpop.f32.mrf.mxu0
        %v2208 = vadd.f32 0.0, %v2207
        %2209 = vmatmul.f32.gmra.mxu0 %v2082
        %v2210 = vpop.f32.mrf.mxu0
        %v2211 = vadd.f32 0.0, %v2210
        %2212 = vdwg.mxu0
        %v2213 = vadd.f32 %v2019, %v2118
        %v2214 = vadd.f32 %v2020, %v2121
        %v2215 = vadd.f32 %v2021, %v2124
        %v2216 = vadd.f32 %v2022, %v2127
        %v2217 = vadd.f32 %v2023, %v2130
        %v2218 = vadd.f32 %v2024, %v2133
        %v2219 = vadd.f32 %v2025, %v2136
        %v2220 = vadd.f32 %v2026, %v2139
        %v2221 = vadd.f32 %v2027, %v2142
        %v2222 = vadd.f32 %v2028, %v2145
        %v2223 = vadd.f32 %v2029, %v2148
        %v2224 = vadd.f32 %v2030, %v2151
        %v2225 = vadd.f32 %v2031, %v2154
        %v2226 = vadd.f32 %v2032, %v2157
        %v2227 = vadd.f32 %v2033, %v2160
        %v2228 = vadd.f32 %v2034, %v2163
        %v2229 = vadd.f32 %v2035, %v2166
        %v2230 = vadd.f32 %v2036, %v2169
        %v2231 = vadd.f32 %v2037, %v2172
        %v2232 = vadd.f32 %v2038, %v2175
        %v2233 = vadd.f32 %v2039, %v2178
        %v2234 = vadd.f32 %v2040, %v2181
        %v2235 = vadd.f32 %v2041, %v2184
        %v2236 = vadd.f32 %v2042, %v2187
        %v2237 = vadd.f32 %v2043, %v2190
        %v2238 = vadd.f32 %v2044, %v2193
        %v2239 = vadd.f32 %v2045, %v2196
        %v2240 = vadd.f32 %v2046, %v2199
        %v2241 = vadd.f32 %v2047, %v2202
        %v2242 = vadd.f32 %v2048, %v2205
        %v2243 = vadd.f32 %v2049, %v2208
        %v2244 = vadd.f32 %v2050, %v2211
        %v2245 = vld [vmem:[%s1856 + $0x2] sm:$0xff]
        %v2246 = vld [vmem:[%s1856 + $0xa] sm:$0xff]
        %v2247 = vld [vmem:[%s1856 + $0x1a] sm:$0xff]
        %v2248 = vld [vmem:[%s1856 + $0x22] sm:$0xff]
        %v2249 = vld [vmem:[%s1856 + $0x32] sm:$0xff]
        %v2250 = vld [vmem:[%s1856 + $0x3a] sm:$0xff]
        %v2251 = vld [vmem:[%s1856 + $0x4a] sm:$0xff]
        %v2252 = vld [vmem:[%s1856 + $0x52] sm:$0xff]
        %v2253 = vld [vmem:[%s1856 + $0x62] sm:$0xff]
        %v2254 = vld [vmem:[%s1856 + $0x6a] sm:$0xff]
        %v2255 = vld [vmem:[%s1856 + $0x7a] sm:$0xff]
        %v2256 = vld [vmem:[%s1856 + $0x82] sm:$0xff]
        %v2257 = vld [vmem:[%s1856 + $0x92] sm:$0xff]
        %v2258 = vld [vmem:[%s1856 + $0x9a] sm:$0xff]
        %v2259 = vld [vmem:[%s1856 + $0xaa] sm:$0xff]
        %v2260 = vld [vmem:[%s1856 + $0xb2] sm:$0xff]
        %v2261 = vld [vmem:[%s1856 + $0xc2] sm:$0xff]
        %v2262 = vld [vmem:[%s1856 + $0xca] sm:$0xff]
        %v2263 = vld [vmem:[%s1856 + $0xda] sm:$0xff]
        %v2264 = vld [vmem:[%s1856 + $0xe2] sm:$0xff]
        %v2265 = vld [vmem:[%s1856 + $0xf2] sm:$0xff]
        %v2266 = vld [vmem:[%s1856 + $0xfa] sm:$0xff]
        %v2267 = vld [vmem:[%s1856 + $0x10a] sm:$0xff]
        %v2268 = vld [vmem:[%s1856 + $0x112] sm:$0xff]
        %v2269 = vld [vmem:[%s1856 + $0x122] sm:$0xff]
        %v2270 = vld [vmem:[%s1856 + $0x12a] sm:$0xff]
        %v2271 = vld [vmem:[%s1856 + $0x13a] sm:$0xff]
        %v2272 = vld [vmem:[%s1856 + $0x142] sm:$0xff]
        %v2273 = vld [vmem:[%s1856 + $0x152] sm:$0xff]
        %v2274 = vld [vmem:[%s1856 + $0x15a] sm:$0xff]
        %v2275 = vld [vmem:[%s1856 + $0x16a] sm:$0xff]
        %v2276 = vld [vmem:[%s1856 + $0x172] sm:$0xff]
        %s2277 = scalar_lea.vmem [#allocation8], 1024
        %v2278 = vld [vmem:[%s2277] sm:$0xff]
        %v2279 = vld [vmem:[%s2277 + $0x8] sm:$0xff]
        %v2280 = vld [vmem:[%s2277 + $0x10] sm:$0xff]
        %v2281 = vld [vmem:[%s2277 + $0x18] sm:$0xff]
        %v2282 = vld [vmem:[%s2277 + $0x20] sm:$0xff]
        %v2283 = vld [vmem:[%s2277 + $0x28] sm:$0xff]
        %v2284 = vld [vmem:[%s2277 + $0x30] sm:$0xff]
        %v2285 = vld [vmem:[%s2277 + $0x38] sm:$0xff]
        %v2286 = vld [vmem:[%s2277 + $0x40] sm:$0xff]
        %v2287 = vld [vmem:[%s2277 + $0x48] sm:$0xff]
        %v2288 = vld [vmem:[%s2277 + $0x50] sm:$0xff]
        %v2289 = vld [vmem:[%s2277 + $0x58] sm:$0xff]
        %v2290 = vld [vmem:[%s2277 + $0x60] sm:$0xff]
        %v2291 = vld [vmem:[%s2277 + $0x68] sm:$0xff]
        %v2292 = vld [vmem:[%s2277 + $0x70] sm:$0xff]
        %v2293 = vld [vmem:[%s2277 + $0x78] sm:$0xff]
        %2294 = vmatpush.msra.mxu0 %v2293
        %2295 = vmatpush.msra.mxu0 %v2292
        %2296 = vmatpush.msra.mxu0 %v2291
        %2297 = vmatpush.msra.mxu0 %v2290
        %2298 = vmatpush.msra.mxu0 %v2289
        %2299 = vmatpush.msra.mxu0 %v2288
        %2300 = vmatpush.msra.mxu0 %v2287
        %2301 = vmatpush.msra.mxu0 %v2286
        %2302 = vmatpush.msra.mxu0 %v2285
        %2303 = vmatpush.msra.mxu0 %v2284
        %2304 = vmatpush.msra.mxu0 %v2283
        %2305 = vmatpush.msra.mxu0 %v2282
        %2306 = vmatpush.msra.mxu0 %v2281
        %2307 = vmatpush.msra.mxu0 %v2280
        %2308 = vmatpush.msra.mxu0 %v2279
        %2309 = vmatpush.msra.mxu0 %v2278
        %2310 = vmatmul.f32.gmra.mxu0 %v2245
        %v2311 = vpop.f32.mrf.mxu0
        %v2312 = vadd.f32 0.0, %v2311
        %2313 = vmatmul.f32.gmra.mxu0 %v2246
        %v2314 = vpop.f32.mrf.mxu0
        %v2315 = vadd.f32 0.0, %v2314
        %2316 = vmatmul.f32.gmra.mxu0 %v2247
        %v2317 = vpop.f32.mrf.mxu0
        %v2318 = vadd.f32 0.0, %v2317
        %2319 = vmatmul.f32.gmra.mxu0 %v2248
        %v2320 = vpop.f32.mrf.mxu0
        %v2321 = vadd.f32 0.0, %v2320
        %2322 = vmatmul.f32.gmra.mxu0 %v2249
        %v2323 = vpop.f32.mrf.mxu0
        %v2324 = vadd.f32 0.0, %v2323
        %2325 = vmatmul.f32.gmra.mxu0 %v2250
        %v2326 = vpop.f32.mrf.mxu0
        %v2327 = vadd.f32 0.0, %v2326
        %2328 = vmatmul.f32.gmra.mxu0 %v2251
        %v2329 = vpop.f32.mrf.mxu0
        %v2330 = vadd.f32 0.0, %v2329
        %2331 = vmatmul.f32.gmra.mxu0 %v2252
        %v2332 = vpop.f32.mrf.mxu0
        %v2333 = vadd.f32 0.0, %v2332
        %2334 = vmatmul.f32.gmra.mxu0 %v2253
        %v2335 = vpop.f32.mrf.mxu0
        %v2336 = vadd.f32 0.0, %v2335
        %2337 = vmatmul.f32.gmra.mxu0 %v2254
        %v2338 = vpop.f32.mrf.mxu0
        %v2339 = vadd.f32 0.0, %v2338
        %2340 = vmatmul.f32.gmra.mxu0 %v2255
        %v2341 = vpop.f32.mrf.mxu0
        %v2342 = vadd.f32 0.0, %v2341
        %2343 = vmatmul.f32.gmra.mxu0 %v2256
        %v2344 = vpop.f32.mrf.mxu0
        %v2345 = vadd.f32 0.0, %v2344
        %2346 = vmatmul.f32.gmra.mxu0 %v2257
        %v2347 = vpop.f32.mrf.mxu0
        %v2348 = vadd.f32 0.0, %v2347
        %2349 = vmatmul.f32.gmra.mxu0 %v2258
        %v2350 = vpop.f32.mrf.mxu0
        %v2351 = vadd.f32 0.0, %v2350
        %2352 = vmatmul.f32.gmra.mxu0 %v2259
        %v2353 = vpop.f32.mrf.mxu0
        %v2354 = vadd.f32 0.0, %v2353
        %2355 = vmatmul.f32.gmra.mxu0 %v2260
        %v2356 = vpop.f32.mrf.mxu0
        %v2357 = vadd.f32 0.0, %v2356
        %2358 = vmatmul.f32.gmra.mxu0 %v2261
        %v2359 = vpop.f32.mrf.mxu0
        %v2360 = vadd.f32 0.0, %v2359
        %2361 = vmatmul.f32.gmra.mxu0 %v2262
        %v2362 = vpop.f32.mrf.mxu0
        %v2363 = vadd.f32 0.0, %v2362
        %2364 = vmatmul.f32.gmra.mxu0 %v2263
        %v2365 = vpop.f32.mrf.mxu0
        %v2366 = vadd.f32 0.0, %v2365
        %2367 = vmatmul.f32.gmra.mxu0 %v2264
        %v2368 = vpop.f32.mrf.mxu0
        %v2369 = vadd.f32 0.0, %v2368
        %2370 = vmatmul.f32.gmra.mxu0 %v2265
        %v2371 = vpop.f32.mrf.mxu0
        %v2372 = vadd.f32 0.0, %v2371
        %2373 = vmatmul.f32.gmra.mxu0 %v2266
        %v2374 = vpop.f32.mrf.mxu0
        %v2375 = vadd.f32 0.0, %v2374
        %2376 = vmatmul.f32.gmra.mxu0 %v2267
        %v2377 = vpop.f32.mrf.mxu0
        %v2378 = vadd.f32 0.0, %v2377
        %2379 = vmatmul.f32.gmra.mxu0 %v2268
        %v2380 = vpop.f32.mrf.mxu0
        %v2381 = vadd.f32 0.0, %v2380
        %2382 = vmatmul.f32.gmra.mxu0 %v2269
        %v2383 = vpop.f32.mrf.mxu0
        %v2384 = vadd.f32 0.0, %v2383
        %2385 = vmatmul.f32.gmra.mxu0 %v2270
        %v2386 = vpop.f32.mrf.mxu0
        %v2387 = vadd.f32 0.0, %v2386
        %2388 = vmatmul.f32.gmra.mxu0 %v2271
        %v2389 = vpop.f32.mrf.mxu0
        %v2390 = vadd.f32 0.0, %v2389
        %2391 = vmatmul.f32.gmra.mxu0 %v2272
        %v2392 = vpop.f32.mrf.mxu0
        %v2393 = vadd.f32 0.0, %v2392
        %2394 = vmatmul.f32.gmra.mxu0 %v2273
        %v2395 = vpop.f32.mrf.mxu0
        %v2396 = vadd.f32 0.0, %v2395
        %2397 = vmatmul.f32.gmra.mxu0 %v2274
        %v2398 = vpop.f32.mrf.mxu0
        %v2399 = vadd.f32 0.0, %v2398
        %2400 = vmatmul.f32.gmra.mxu0 %v2275
        %v2401 = vpop.f32.mrf.mxu0
        %v2402 = vadd.f32 0.0, %v2401
        %2403 = vmatmul.f32.gmra.mxu0 %v2276
        %v2404 = vpop.f32.mrf.mxu0
        %v2405 = vadd.f32 0.0, %v2404
        %2406 = vdwg.mxu0
        %v2407 = vadd.f32 %v2213, %v2312
        %v2408 = vadd.f32 %v2214, %v2315
        %v2409 = vadd.f32 %v2215, %v2318
        %v2410 = vadd.f32 %v2216, %v2321
        %v2411 = vadd.f32 %v2217, %v2324
        %v2412 = vadd.f32 %v2218, %v2327
        %v2413 = vadd.f32 %v2219, %v2330
        %v2414 = vadd.f32 %v2220, %v2333
        %v2415 = vadd.f32 %v2221, %v2336
        %v2416 = vadd.f32 %v2222, %v2339
        %v2417 = vadd.f32 %v2223, %v2342
        %v2418 = vadd.f32 %v2224, %v2345
        %v2419 = vadd.f32 %v2225, %v2348
        %v2420 = vadd.f32 %v2226, %v2351
        %v2421 = vadd.f32 %v2227, %v2354
        %v2422 = vadd.f32 %v2228, %v2357
        %v2423 = vadd.f32 %v2229, %v2360
        %v2424 = vadd.f32 %v2230, %v2363
        %v2425 = vadd.f32 %v2231, %v2366
        %v2426 = vadd.f32 %v2232, %v2369
        %v2427 = vadd.f32 %v2233, %v2372
        %v2428 = vadd.f32 %v2234, %v2375
        %v2429 = vadd.f32 %v2235, %v2378
        %v2430 = vadd.f32 %v2236, %v2381
        %v2431 = vadd.f32 %v2237, %v2384
        %v2432 = vadd.f32 %v2238, %v2387
        %v2433 = vadd.f32 %v2239, %v2390
        %v2434 = vadd.f32 %v2240, %v2393
        %v2435 = vadd.f32 %v2241, %v2396
        %v2436 = vadd.f32 %v2242, %v2399
        %v2437 = vadd.f32 %v2243, %v2402
        %v2438 = vadd.f32 %v2244, %v2405
        %v2439 = vmax.f32 %v2407, 0.0
        %v2440 = vmax.f32 %v2408, 0.0
        %v2441 = vmax.f32 %v2409, 0.0
        %v2442 = vmax.f32 %v2410, 0.0
        %v2443 = vmax.f32 %v2411, 0.0
        %v2444 = vmax.f32 %v2412, 0.0
        %v2445 = vmax.f32 %v2413, 0.0
        %v2446 = vmax.f32 %v2414, 0.0
        %v2447 = vmax.f32 %v2415, 0.0
        %v2448 = vmax.f32 %v2416, 0.0
        %v2449 = vmax.f32 %v2417, 0.0
        %v2450 = vmax.f32 %v2418, 0.0
        %v2451 = vmax.f32 %v2419, 0.0
        %v2452 = vmax.f32 %v2420, 0.0
        %v2453 = vmax.f32 %v2421, 0.0
        %v2454 = vmax.f32 %v2422, 0.0
        %v2455 = vmax.f32 %v2423, 0.0
        %v2456 = vmax.f32 %v2424, 0.0
        %v2457 = vmax.f32 %v2425, 0.0
        %v2458 = vmax.f32 %v2426, 0.0
        %v2459 = vmax.f32 %v2427, 0.0
        %v2460 = vmax.f32 %v2428, 0.0
        %v2461 = vmax.f32 %v2429, 0.0
        %v2462 = vmax.f32 %v2430, 0.0
        %v2463 = vmax.f32 %v2431, 0.0
        %v2464 = vmax.f32 %v2432, 0.0
        %v2465 = vmax.f32 %v2433, 0.0
        %v2466 = vmax.f32 %v2434, 0.0
        %v2467 = vmax.f32 %v2435, 0.0
        %v2468 = vmax.f32 %v2436, 0.0
        %v2469 = vmax.f32 %v2437, 0.0
        %v2470 = vmax.f32 %v2438, 0.0
        %v2471 = vld [vmem:[#allocation9] sm:$0xff]
        %v2472 = vld [vmem:[#allocation9 + $0x8] sm:$0xff]
        %v2473 = vld [vmem:[#allocation9 + $0x10] sm:$0xff]
        %v2474 = vld [vmem:[#allocation9 + $0x18] sm:$0xff]
        %v2475 = vld [vmem:[#allocation9 + $0x20] sm:$0xff]
        %v2476 = vld [vmem:[#allocation9 + $0x28] sm:$0xff]
        %v2477 = vld [vmem:[#allocation9 + $0x30] sm:$0xff]
        %v2478 = vld [vmem:[#allocation9 + $0x38] sm:$0xff]
        %v2479 = vld [vmem:[#allocation9 + $0x40] sm:$0xff]
        %v2480 = vld [vmem:[#allocation9 + $0x48] sm:$0xff]
        %v2481 = vld [vmem:[#allocation9 + $0x50] sm:$0xff]
        %v2482 = vld [vmem:[#allocation9 + $0x58] sm:$0xff]
        %v2483 = vld [vmem:[#allocation9 + $0x60] sm:$0xff]
        %v2484 = vld [vmem:[#allocation9 + $0x68] sm:$0xff]
        %v2485 = vld [vmem:[#allocation9 + $0x70] sm:$0xff]
        %v2486 = vld [vmem:[#allocation9 + $0x78] sm:$0xff]
        %v2487 = vld [vmem:[%s6] sm:$0x1]
        %v2489 = vperm.slane %v2487, 0
        %2491 = vmatpush.msra.mxu0 %v2486
        %2492 = vmatpush.msra.mxu0 %v2485
        %2493 = vmatpush.msra.mxu0 %v2484
        %2494 = vmatpush.msra.mxu0 %v2483
        %2495 = vmatpush.msra.mxu0 %v2482
        %2496 = vmatpush.msra.mxu0 %v2481
        %2497 = vmatpush.msra.mxu0 %v2480
        %2498 = vmatpush.msra.mxu0 %v2479
        %2499 = vmatpush.msra.mxu0 %v2478
        %2500 = vmatpush.msra.mxu0 %v2477
        %2501 = vmatpush.msra.mxu0 %v2476
        %2502 = vmatpush.msra.mxu0 %v2475
        %2503 = vmatpush.msra.mxu0 %v2474
        %2504 = vmatpush.msra.mxu0 %v2473
        %2505 = vmatpush.msra.mxu0 %v2472
        %2506 = vmatpush.msra.mxu0 %v2471
        %2507 = vmatmul.f32.gmra.mxu0 %v2439
        %v2508 = vpop.f32.mrf.mxu0
        %v2509 = vadd.f32 %v2489, %v2508
        %2510 = vmatmul.f32.gmra.mxu0 %v2440
        %v2511 = vpop.f32.mrf.mxu0
        %v2512 = vadd.f32 %v2489, %v2511
        %2513 = vmatmul.f32.gmra.mxu0 %v2441
        %v2514 = vpop.f32.mrf.mxu0
        %v2515 = vadd.f32 %v2489, %v2514
        %2516 = vmatmul.f32.gmra.mxu0 %v2442
        %v2517 = vpop.f32.mrf.mxu0
        %v2518 = vadd.f32 %v2489, %v2517
        %2519 = vmatmul.f32.gmra.mxu0 %v2443
        %v2520 = vpop.f32.mrf.mxu0
        %v2521 = vadd.f32 %v2489, %v2520
        %2522 = vmatmul.f32.gmra.mxu0 %v2444
        %v2523 = vpop.f32.mrf.mxu0
        %v2524 = vadd.f32 %v2489, %v2523
        %2525 = vmatmul.f32.gmra.mxu0 %v2445
        %v2526 = vpop.f32.mrf.mxu0
        %v2527 = vadd.f32 %v2489, %v2526
        %2528 = vmatmul.f32.gmra.mxu0 %v2446
        %v2529 = vpop.f32.mrf.mxu0
        %v2530 = vadd.f32 %v2489, %v2529
        %2531 = vmatmul.f32.gmra.mxu0 %v2447
        %v2532 = vpop.f32.mrf.mxu0
        %v2533 = vadd.f32 %v2489, %v2532
        %2534 = vmatmul.f32.gmra.mxu0 %v2448
        %v2535 = vpop.f32.mrf.mxu0
        %v2536 = vadd.f32 %v2489, %v2535
        %2537 = vmatmul.f32.gmra.mxu0 %v2449
        %v2538 = vpop.f32.mrf.mxu0
        %v2539 = vadd.f32 %v2489, %v2538
        %2540 = vmatmul.f32.gmra.mxu0 %v2450
        %v2541 = vpop.f32.mrf.mxu0
        %v2542 = vadd.f32 %v2489, %v2541
        %2543 = vmatmul.f32.gmra.mxu0 %v2451
        %v2544 = vpop.f32.mrf.mxu0
        %v2545 = vadd.f32 %v2489, %v2544
        %2546 = vmatmul.f32.gmra.mxu0 %v2452
        %v2547 = vpop.f32.mrf.mxu0
        %v2548 = vadd.f32 %v2489, %v2547
        %2549 = vmatmul.f32.gmra.mxu0 %v2453
        %v2550 = vpop.f32.mrf.mxu0
        %v2551 = vadd.f32 %v2489, %v2550
        %2552 = vmatmul.f32.gmra.mxu0 %v2454
        %v2553 = vpop.f32.mrf.mxu0
        %v2554 = vadd.f32 %v2489, %v2553
        %2555 = vmatmul.f32.gmra.mxu0 %v2455
        %v2556 = vpop.f32.mrf.mxu0
        %v2557 = vadd.f32 %v2489, %v2556
        %2558 = vmatmul.f32.gmra.mxu0 %v2456
        %v2559 = vpop.f32.mrf.mxu0
        %v2560 = vadd.f32 %v2489, %v2559
        %2561 = vmatmul.f32.gmra.mxu0 %v2457
        %v2562 = vpop.f32.mrf.mxu0
        %v2563 = vadd.f32 %v2489, %v2562
        %2564 = vmatmul.f32.gmra.mxu0 %v2458
        %v2565 = vpop.f32.mrf.mxu0
        %v2566 = vadd.f32 %v2489, %v2565
        %2567 = vmatmul.f32.gmra.mxu0 %v2459
        %v2568 = vpop.f32.mrf.mxu0
        %v2569 = vadd.f32 %v2489, %v2568
        %2570 = vmatmul.f32.gmra.mxu0 %v2460
        %v2571 = vpop.f32.mrf.mxu0
        %v2572 = vadd.f32 %v2489, %v2571
        %2573 = vmatmul.f32.gmra.mxu0 %v2461
        %v2574 = vpop.f32.mrf.mxu0
        %v2575 = vadd.f32 %v2489, %v2574
        %2576 = vmatmul.f32.gmra.mxu0 %v2462
        %v2577 = vpop.f32.mrf.mxu0
        %v2578 = vadd.f32 %v2489, %v2577
        %2579 = vmatmul.f32.gmra.mxu0 %v2463
        %v2580 = vpop.f32.mrf.mxu0
        %v2581 = vadd.f32 %v2489, %v2580
        %2582 = vmatmul.f32.gmra.mxu0 %v2464
        %v2583 = vpop.f32.mrf.mxu0
        %v2584 = vadd.f32 %v2489, %v2583
        %2585 = vmatmul.f32.gmra.mxu0 %v2465
        %v2586 = vpop.f32.mrf.mxu0
        %v2587 = vadd.f32 %v2489, %v2586
        %2588 = vmatmul.f32.gmra.mxu0 %v2466
        %v2589 = vpop.f32.mrf.mxu0
        %v2590 = vadd.f32 %v2489, %v2589
        %2591 = vmatmul.f32.gmra.mxu0 %v2467
        %v2592 = vpop.f32.mrf.mxu0
        %v2593 = vadd.f32 %v2489, %v2592
        %2594 = vmatmul.f32.gmra.mxu0 %v2468
        %v2595 = vpop.f32.mrf.mxu0
        %v2596 = vadd.f32 %v2489, %v2595
        %2597 = vmatmul.f32.gmra.mxu0 %v2469
        %v2598 = vpop.f32.mrf.mxu0
        %v2599 = vadd.f32 %v2489, %v2598
        %2600 = vmatmul.f32.gmra.mxu0 %v2470
        %v2601 = vpop.f32.mrf.mxu0
        %v2602 = vadd.f32 %v2489, %v2601
        %2603 = vdwg.mxu0
        %v2604 = vld [vmem:[#allocation11] sm:$0xff]
        %v2605 = vld [vmem:[#allocation11 + $0x8] sm:$0xff]
        %v2606 = vld [vmem:[#allocation11 + $0x10] sm:$0xff]
        %v2607 = vld [vmem:[#allocation11 + $0x18] sm:$0xff]
        %v2608 = vld [vmem:[#allocation11 + $0x20] sm:$0xff]
        %v2609 = vld [vmem:[#allocation11 + $0x28] sm:$0xff]
        %v2610 = vld [vmem:[#allocation11 + $0x30] sm:$0xff]
        %v2611 = vld [vmem:[#allocation11 + $0x38] sm:$0xff]
        %v2612 = vld [vmem:[#allocation11 + $0x40] sm:$0xff]
        %v2613 = vld [vmem:[#allocation11 + $0x48] sm:$0xff]
        %v2614 = vld [vmem:[#allocation11 + $0x50] sm:$0xff]
        %v2615 = vld [vmem:[#allocation11 + $0x58] sm:$0xff]
        %v2616 = vld [vmem:[#allocation11 + $0x60] sm:$0xff]
        %v2617 = vld [vmem:[#allocation11 + $0x68] sm:$0xff]
        %v2618 = vld [vmem:[#allocation11 + $0x70] sm:$0xff]
        %v2619 = vld [vmem:[#allocation11 + $0x78] sm:$0xff]
        %v2620 = vld [vmem:[%s8] sm:$0x1]
        %v2622 = vperm.slane %v2620, 0
        %2624 = vmatpush.msra.mxu0 %v2619
        %2625 = vmatpush.msra.mxu0 %v2618
        %2626 = vmatpush.msra.mxu0 %v2617
        %2627 = vmatpush.msra.mxu0 %v2616
        %2628 = vmatpush.msra.mxu0 %v2615
        %2629 = vmatpush.msra.mxu0 %v2614
        %2630 = vmatpush.msra.mxu0 %v2613
        %2631 = vmatpush.msra.mxu0 %v2612
        %2632 = vmatpush.msra.mxu0 %v2611
        %2633 = vmatpush.msra.mxu0 %v2610
        %2634 = vmatpush.msra.mxu0 %v2609
        %2635 = vmatpush.msra.mxu0 %v2608
        %2636 = vmatpush.msra.mxu0 %v2607
        %2637 = vmatpush.msra.mxu0 %v2606
        %2638 = vmatpush.msra.mxu0 %v2605
        %2639 = vmatpush.msra.mxu0 %v2604
        %2640 = vmatmul.f32.gmra.mxu0 %v419
        %v2641 = vpop.f32.mrf.mxu0
        %v2642 = vadd.f32 %v2622, %v2641
        %2643 = vmatmul.f32.gmra.mxu0 %v420
        %v2644 = vpop.f32.mrf.mxu0
        %v2645 = vadd.f32 %v2622, %v2644
        %2646 = vmatmul.f32.gmra.mxu0 %v421
        %v2647 = vpop.f32.mrf.mxu0
        %v2648 = vadd.f32 %v2622, %v2647
        %2649 = vmatmul.f32.gmra.mxu0 %v422
        %v2650 = vpop.f32.mrf.mxu0
        %v2651 = vadd.f32 %v2622, %v2650
        %2652 = vmatmul.f32.gmra.mxu0 %v423
        %v2653 = vpop.f32.mrf.mxu0
        %v2654 = vadd.f32 %v2622, %v2653
        %2655 = vmatmul.f32.gmra.mxu0 %v424
        %v2656 = vpop.f32.mrf.mxu0
        %v2657 = vadd.f32 %v2622, %v2656
        %2658 = vmatmul.f32.gmra.mxu0 %v425
        %v2659 = vpop.f32.mrf.mxu0
        %v2660 = vadd.f32 %v2622, %v2659
        %2661 = vmatmul.f32.gmra.mxu0 %v426
        %v2662 = vpop.f32.mrf.mxu0
        %v2663 = vadd.f32 %v2622, %v2662
        %2664 = vmatmul.f32.gmra.mxu0 %v427
        %v2665 = vpop.f32.mrf.mxu0
        %v2666 = vadd.f32 %v2622, %v2665
        %2667 = vmatmul.f32.gmra.mxu0 %v428
        %v2668 = vpop.f32.mrf.mxu0
        %v2669 = vadd.f32 %v2622, %v2668
        %2670 = vmatmul.f32.gmra.mxu0 %v429
        %v2671 = vpop.f32.mrf.mxu0
        %v2672 = vadd.f32 %v2622, %v2671
        %2673 = vmatmul.f32.gmra.mxu0 %v430
        %v2674 = vpop.f32.mrf.mxu0
        %v2675 = vadd.f32 %v2622, %v2674
        %2676 = vmatmul.f32.gmra.mxu0 %v431
        %v2677 = vpop.f32.mrf.mxu0
        %v2678 = vadd.f32 %v2622, %v2677
        %2679 = vmatmul.f32.gmra.mxu0 %v432
        %v2680 = vpop.f32.mrf.mxu0
        %v2681 = vadd.f32 %v2622, %v2680
        %2682 = vmatmul.f32.gmra.mxu0 %v433
        %v2683 = vpop.f32.mrf.mxu0
        %v2684 = vadd.f32 %v2622, %v2683
        %2685 = vmatmul.f32.gmra.mxu0 %v434
        %v2686 = vpop.f32.mrf.mxu0
        %v2687 = vadd.f32 %v2622, %v2686
        %2688 = vmatmul.f32.gmra.mxu0 %v435
        %v2689 = vpop.f32.mrf.mxu0
        %v2690 = vadd.f32 %v2622, %v2689
        %2691 = vmatmul.f32.gmra.mxu0 %v436
        %v2692 = vpop.f32.mrf.mxu0
        %v2693 = vadd.f32 %v2622, %v2692
        %2694 = vmatmul.f32.gmra.mxu0 %v437
        %v2695 = vpop.f32.mrf.mxu0
        %v2696 = vadd.f32 %v2622, %v2695
        %2697 = vmatmul.f32.gmra.mxu0 %v438
        %v2698 = vpop.f32.mrf.mxu0
        %v2699 = vadd.f32 %v2622, %v2698
        %2700 = vmatmul.f32.gmra.mxu0 %v439
        %v2701 = vpop.f32.mrf.mxu0
        %v2702 = vadd.f32 %v2622, %v2701
        %2703 = vmatmul.f32.gmra.mxu0 %v440
        %v2704 = vpop.f32.mrf.mxu0
        %v2705 = vadd.f32 %v2622, %v2704
        %2706 = vmatmul.f32.gmra.mxu0 %v441
        %v2707 = vpop.f32.mrf.mxu0
        %v2708 = vadd.f32 %v2622, %v2707
        %2709 = vmatmul.f32.gmra.mxu0 %v442
        %v2710 = vpop.f32.mrf.mxu0
        %v2711 = vadd.f32 %v2622, %v2710
        %2712 = vmatmul.f32.gmra.mxu0 %v443
        %v2713 = vpop.f32.mrf.mxu0
        %v2714 = vadd.f32 %v2622, %v2713
        %2715 = vmatmul.f32.gmra.mxu0 %v444
        %v2716 = vpop.f32.mrf.mxu0
        %v2717 = vadd.f32 %v2622, %v2716
        %2718 = vmatmul.f32.gmra.mxu0 %v445
        %v2719 = vpop.f32.mrf.mxu0
        %v2720 = vadd.f32 %v2622, %v2719
        %2721 = vmatmul.f32.gmra.mxu0 %v446
        %v2722 = vpop.f32.mrf.mxu0
        %v2723 = vadd.f32 %v2622, %v2722
        %2724 = vmatmul.f32.gmra.mxu0 %v447
        %v2725 = vpop.f32.mrf.mxu0
        %v2726 = vadd.f32 %v2622, %v2725
        %2727 = vmatmul.f32.gmra.mxu0 %v448
        %v2728 = vpop.f32.mrf.mxu0
        %v2729 = vadd.f32 %v2622, %v2728
        %2730 = vmatmul.f32.gmra.mxu0 %v449
        %v2731 = vpop.f32.mrf.mxu0
        %v2732 = vadd.f32 %v2622, %v2731
        %2733 = vmatmul.f32.gmra.mxu0 %v450
        %v2734 = vpop.f32.mrf.mxu0
        %v2735 = vadd.f32 %v2622, %v2734
        %2736 = vdwg.mxu0
        %v2737 = vadd.f32 %v2509, %v2642
        %v2738 = vadd.f32 %v2512, %v2645
        %v2739 = vadd.f32 %v2515, %v2648
        %v2740 = vadd.f32 %v2518, %v2651
        %v2741 = vadd.f32 %v2521, %v2654
        %v2742 = vadd.f32 %v2524, %v2657
        %v2743 = vadd.f32 %v2527, %v2660
        %v2744 = vadd.f32 %v2530, %v2663
        %v2745 = vadd.f32 %v2533, %v2666
        %v2746 = vadd.f32 %v2536, %v2669
        %v2747 = vadd.f32 %v2539, %v2672
        %v2748 = vadd.f32 %v2542, %v2675
        %v2749 = vadd.f32 %v2545, %v2678
        %v2750 = vadd.f32 %v2548, %v2681
        %v2751 = vadd.f32 %v2551, %v2684
        %v2752 = vadd.f32 %v2554, %v2687
        %v2753 = vadd.f32 %v2557, %v2690
        %v2754 = vadd.f32 %v2560, %v2693
        %v2755 = vadd.f32 %v2563, %v2696
        %v2756 = vadd.f32 %v2566, %v2699
        %v2757 = vadd.f32 %v2569, %v2702
        %v2758 = vadd.f32 %v2572, %v2705
        %v2759 = vadd.f32 %v2575, %v2708
        %v2760 = vadd.f32 %v2578, %v2711
        %v2761 = vadd.f32 %v2581, %v2714
        %v2762 = vadd.f32 %v2584, %v2717
        %v2763 = vadd.f32 %v2587, %v2720
        %v2764 = vadd.f32 %v2590, %v2723
        %v2765 = vadd.f32 %v2593, %v2726
        %v2766 = vadd.f32 %v2596, %v2729
        %v2767 = vadd.f32 %v2599, %v2732
        %v2768 = vadd.f32 %v2602, %v2735
        %v2769 = vmax.f32 %v2737, 0.0
        %v2770 = vmax.f32 %v2738, 0.0
        %v2771 = vmax.f32 %v2739, 0.0
        %v2772 = vmax.f32 %v2740, 0.0
        %v2773 = vmax.f32 %v2741, 0.0
        %v2774 = vmax.f32 %v2742, 0.0
        %v2775 = vmax.f32 %v2743, 0.0
        %v2776 = vmax.f32 %v2744, 0.0
        %v2777 = vmax.f32 %v2745, 0.0
        %v2778 = vmax.f32 %v2746, 0.0
        %v2779 = vmax.f32 %v2747, 0.0
        %v2780 = vmax.f32 %v2748, 0.0
        %v2781 = vmax.f32 %v2749, 0.0
        %v2782 = vmax.f32 %v2750, 0.0
        %v2783 = vmax.f32 %v2751, 0.0
        %v2784 = vmax.f32 %v2752, 0.0
        %v2785 = vmax.f32 %v2753, 0.0
        %v2786 = vmax.f32 %v2754, 0.0
        %v2787 = vmax.f32 %v2755, 0.0
        %v2788 = vmax.f32 %v2756, 0.0
        %v2789 = vmax.f32 %v2757, 0.0
        %v2790 = vmax.f32 %v2758, 0.0
        %v2791 = vmax.f32 %v2759, 0.0
        %v2792 = vmax.f32 %v2760, 0.0
        %v2793 = vmax.f32 %v2761, 0.0
        %v2794 = vmax.f32 %v2762, 0.0
        %v2795 = vmax.f32 %v2763, 0.0
        %v2796 = vmax.f32 %v2764, 0.0
        %v2797 = vmax.f32 %v2765, 0.0
        %v2798 = vmax.f32 %v2766, 0.0
        %v2799 = vmax.f32 %v2767, 0.0
        %v2800 = vmax.f32 %v2768, 0.0
        %2801 = vst [vmem:[%s418] sm:$0xff] %v2769
        %2802 = vst [vmem:[%s418 + $0x8] sm:$0xff] %v2770
        %2803 = vst [vmem:[%s418 + $0x10] sm:$0xff] %v2771
        %2804 = vst [vmem:[%s418 + $0x18] sm:$0xff] %v2772
        %2805 = vst [vmem:[%s418 + $0x20] sm:$0xff] %v2773
        %2806 = vst [vmem:[%s418 + $0x28] sm:$0xff] %v2774
        %2807 = vst [vmem:[%s418 + $0x30] sm:$0xff] %v2775
        %2808 = vst [vmem:[%s418 + $0x38] sm:$0xff] %v2776
        %2809 = vst [vmem:[%s418 + $0x40] sm:$0xff] %v2777
        %2810 = vst [vmem:[%s418 + $0x48] sm:$0xff] %v2778
        %2811 = vst [vmem:[%s418 + $0x50] sm:$0xff] %v2779
        %2812 = vst [vmem:[%s418 + $0x58] sm:$0xff] %v2780
        %2813 = vst [vmem:[%s418 + $0x60] sm:$0xff] %v2781
        %2814 = vst [vmem:[%s418 + $0x68] sm:$0xff] %v2782
        %2815 = vst [vmem:[%s418 + $0x70] sm:$0xff] %v2783
        %2816 = vst [vmem:[%s418 + $0x78] sm:$0xff] %v2784
        %2817 = vst [vmem:[%s418 + $0x80] sm:$0xff] %v2785
        %2818 = vst [vmem:[%s418 + $0x88] sm:$0xff] %v2786
        %2819 = vst [vmem:[%s418 + $0x90] sm:$0xff] %v2787
        %2820 = vst [vmem:[%s418 + $0x98] sm:$0xff] %v2788
        %2821 = vst [vmem:[%s418 + $0xa0] sm:$0xff] %v2789
        %2822 = vst [vmem:[%s418 + $0xa8] sm:$0xff] %v2790
        %2823 = vst [vmem:[%s418 + $0xb0] sm:$0xff] %v2791
        %2824 = vst [vmem:[%s418 + $0xb8] sm:$0xff] %v2792
        %2825 = vst [vmem:[%s418 + $0xc0] sm:$0xff] %v2793
        %2826 = vst [vmem:[%s418 + $0xc8] sm:$0xff] %v2794
        %2827 = vst [vmem:[%s418 + $0xd0] sm:$0xff] %v2795
        %2828 = vst [vmem:[%s418 + $0xd8] sm:$0xff] %v2796
        %2829 = vst [vmem:[%s418 + $0xe0] sm:$0xff] %v2797
        %2830 = vst [vmem:[%s418 + $0xe8] sm:$0xff] %v2798
        %2831 = vst [vmem:[%s418 + $0xf0] sm:$0xff] %v2799
        %2832 = vst [vmem:[%s418 + $0xf8] sm:$0xff] %v2800
        %s2833 = sand.u32 %s230, 1
        %s2834 = scalar_lea.sflag [#allocation5], %s2833
        %s2835 = sand.u32 %s230, 1
        %s2836 = smul.addr %s2835, 256
        %s2837 = scalar_lea.vmem [#allocation12], %s2836
        // Predicated region
        $region77: #{tpu_custom_call.1} parent=55 // pred_check
          %p2838 = pneg %p240
        $region78: #{tpu_custom_call.1} parent=55 // pred_check_branch
          %2840 = sbr.rel (%p2838) target = $region80
        $region79: #{tpu_custom_call.1} parent=55 // pred_region
          %2842 = vsyncadd %s2834, 0
          %s2843 = smul.addr %s28, 32
          %s2844 = smul.addr %s2843, 8
          %s2845 = scalar_lea.hbm %s9, %s2844
          %s2846 = sshll.u32 %s2837, 4
          %s2847 = int_to_ptr.vmem [resolvable:$true] %s2846
          %s2848 = sshll.u32 %s2845, 4
          %s2849 = int_to_ptr.hbm [resolvable:$true] %s2848
          %2854 = dma.vmem_to_hbm [thread:$0]  %s2847, 4096, %s2849, %s2834, 128, 128, 8
        $region80: #{tpu_custom_call.1} parent=55 // pred_fallthru
          _
      $region56: #{tpu_custom_call.1} parent=5 // pred_fallthru
        _
      %p2855 = scmp.le.s32.totalorder 2, %s23
      // Predicated region
      $region81: #{tpu_custom_call.1} parent=5 // pred_check
        %p2856 = pneg %p2855
      $region82: #{tpu_custom_call.1} parent=5 // pred_check_branch
        %2858 = sbr.rel (%p2856) target = $region84
      $region83: #{tpu_custom_call.1} parent=5 // pred_region
        %s2859 = ssub.s32 %s23, 2
        // Predicated region
        $region85: #{tpu_custom_call.1} parent=83 // pred_check
          %p2860 = pneg %p246
        $region86: #{tpu_custom_call.1} parent=83 // pred_check_branch
          %2862 = sbr.rel (%p2860) target = $region88
        $region87: #{tpu_custom_call.1} parent=83 // pred_region
          %s2863 = sand.u32 %s231, 1
          %s2864 = scalar_lea.sflag [#allocation5], %s2863
          %s2865 = sand.u32 %s231, 1
          %s2866 = smul.addr %s2865, 256
          %s2867 = scalar_lea.vmem [#allocation12], %s2866
          %2869 = dma.done %s2864, 4096
        $region88: #{tpu_custom_call.1} parent=83 // pred_fallthru
          _
      $region84: #{tpu_custom_call.1} parent=5 // pred_fallthru
        _
    $region6: #{tpu_custom_call.1} parent=1 // loop_footer
      %s27 = sadd.s32 1, %s23
    $region7: #{tpu_custom_call.1} parent=1 // loop_footer_branch
      %22 = sbr.rel target = $region3
    $region8: #{tpu_custom_call.1} parent=1 // loop_exit
      _
    %2870 = vsyncpa [#allocation4], 1
    %s2871 = scalar_lea.sflag [#allocation4], 1
    %2872 = vsyncpa %s2871, 1
    %2873 = vsyncpa [#allocation7], 1
    %2874 = vsyncpa [#allocation10], 1
    %2875 = vsyncpa [#allocation5], 1
    %s2876 = scalar_lea.sflag [#allocation5], 1
    %2877 = vsyncpa %s2876, 1

</llo_original>
